<compile_context>
chip_gen: v7x
topology: tpu7x:2x2x1
jax: 0.10.0
libtpu: 0.0.40
codegen_flags: <defaults>
</compile_context>

<pallas_src>
import jax
import jax.numpy as jnp
from jax import lax
from jax.experimental import pallas as pl
from jax.experimental.pallas import tpu as pltpu


# ----------------------------------------------------------------------------
# Fused Pallas kernel: all layers + both directions + fused masked sum
# ----------------------------------------------------------------------------
def _make_bilstm_kernel(num_layers, t_len, bp, hidden):
    H = hidden
    H3 = 3 * H
    H4 = 4 * H
    H8 = 8 * H
    n_w = 3 * num_layers  # per layer: wih_cat, whh_blk, bias_cat

    def kernel(*refs):
        x_ref = refs[0]                      # (T*Bp, E)   time-major, batch-padded
        mask_ref = refs[1]                   # (T*Bp, 2H)  [m[b,t]]*H | [m[b,T-1-t]]*H
        w_refs = refs[2:2 + n_w]             # per-layer fused weights
        out_ref = refs[2 + n_w]              # (Bp, 2H)
        gx_scr = refs[3 + n_w]               # (T*Bp, 8H)  hoisted input projection
        h_slabs = (refs[4 + n_w], refs[5 + n_w])  # (T*Bp, 2H) ping/pong, [h_f | h_b]

        for layer in range(num_layers):
            wih = w_refs[3 * layer + 0][...]   # (D_in, 8H) cols: fwd[i,f,o,g]|bwd[i,f,o,g]
            whh = w_refs[3 * layer + 1][...]   # (2H, 8H)   block-diag(fwd, bwd)
            bias = w_refs[3 * layer + 2][...]  # (1, 8H)
            h_cur = h_slabs[layer % 2]
            is_last = layer == num_layers - 1

            # ---- Hoisted input projection: one big MXU matmul over all steps.
            if layer == 0:
                gx = jnp.dot(x_ref[...], wih, preferred_element_type=jnp.float32)
            else:
                h_prev = h_slabs[(layer - 1) % 2]       # packed [h_f | h_b], K = 2H
                gx = jnp.dot(h_prev[...], wih, preferred_element_type=jnp.float32)
            gx_scr[...] = gx + bias

            # ---- Serial recurrence; fwd & bwd share ONE block-diag matmul/step.
            def step(t, carry):
                h_f, h_b, c_f, c_b, acc = carry
                tb = t_len - 1 - t
                rf = pl.multiple_of(t * bp, 8)
                rb = pl.multiple_of(tb * bp, 8)

                gx_f = gx_scr[pl.ds(rf, bp), 0:H4]       # (Bp, 4H) fwd gates, time t
                gx_b = gx_scr[pl.ds(rb, bp), H4:H8]      # (Bp, 4H) bwd gates, time T-1-t

                h_pk = jnp.concatenate([h_f, h_b], axis=1)                    # (Bp, 2H)
                gr = jnp.dot(h_pk, whh, preferred_element_type=jnp.float32)   # (Bp, 8H)
                g_f = gx_f + gr[:, 0:H4]
                g_b = gx_b + gr[:, H4:H8]

                def cell(g, c_prev):
                    # gate columns per direction: [i | f | o | g]
                    sig = jax.nn.sigmoid(g[:, 0:H3])     # one contiguous sigmoid
                    i_g = sig[:, 0:H]
                    f_g = sig[:, H:2 * H]
                    o_g = sig[:, 2 * H:H3]
                    g_g = jnp.tanh(g[:, H3:H4])          # one contiguous tanh
                    c_new = f_g * c_prev + i_g * g_g
                    return o_g * jnp.tanh(c_new), c_new

                h_f_new, c_f_new = cell(g_f, c_f)
                h_b_new, c_b_new = cell(g_b, c_b)

                # Packed slab row s = [h_fwd(s) | h_bwd(s)] -> next layer input.
                h_cur[pl.ds(rf, bp), 0:H] = h_f_new
                h_cur[pl.ds(rb, bp), H:2 * H] = h_b_new

                if is_last:
                    # Fused masked time-sum (VPU FMA is free filler under the MXU).
                    m_row = mask_ref[pl.ds(rf, bp), :]                        # (Bp, 2H)
                    acc = acc + m_row * jnp.concatenate([h_f_new, h_b_new], axis=1)
                return h_f_new, h_b_new, c_f_new, c_b_new, acc

            zeros_h = jnp.zeros((bp, H), jnp.float32)
            zeros_acc = jnp.zeros((bp, 2 * H), jnp.float32)
            unroll = True if t_len <= 16 else 8
            carry = lax.fori_loop(0, t_len, step,
                                  (zeros_h, zeros_h, zeros_h, zeros_h, zeros_acc),
                                  unroll=unroll)
            if is_last:
                out_ref[...] = carry[4]     # single full (Bp, 2H) store

    return kernel


# ----------------------------------------------------------------------------
# Wrapper
# ----------------------------------------------------------------------------
def _prep_layer_weights(fwd, bwd, hidden):
    """PyTorch layout: W_ih (4H, D_in), W_hh (4H, H), b_* (4H,), gates [i,f,g,o].

    Returns fused, column-permuted tensors:
      wih_cat  (D_in, 8H)  columns [fwd i,f,o,g | bwd i,f,o,g]
      whh_blk  (2H, 8H)    block-diagonal: rows 0:H from h_fwd, H:2H from h_bwd
      bias_cat (1, 8H)     b_ih + b_hh, same column order
    """
    H = hidden
    w_ih_f, w_hh_f, b_ih_f, b_hh_f = fwd
    w_ih_b, w_hh_b, b_ih_b, b_hh_b = bwd

    def ifog_to_ifo_g(w):
        # (..., 4H) columns [i, f, g, o] -> [i, f, o, g]
        i = w[..., 0:H]
        f = w[..., H:2 * H]
        g = w[..., 2 * H:3 * H]
        o = w[..., 3 * H:4 * H]
        return jnp.concatenate([i, f, o, g], axis=-1)

    wih_f = ifog_to_ifo_g(jnp.transpose(w_ih_f))        # (D_in, 4H)
    wih_b = ifog_to_ifo_g(jnp.transpose(w_ih_b))
    wih_cat = jnp.concatenate([wih_f, wih_b], axis=1)   # (D_in, 8H)

    whh_f = ifog_to_ifo_g(jnp.transpose(w_hh_f))        # (H, 4H)
    whh_b = ifog_to_ifo_g(jnp.transpose(w_hh_b))
    z = jnp.zeros((H, 4 * H), jnp.float32)
    whh_blk = jnp.concatenate(
        [jnp.concatenate([whh_f, z], axis=1),
         jnp.concatenate([z, whh_b], axis=1)], axis=0)  # (2H, 8H)

    bias_f = ifog_to_ifo_g((b_ih_f + b_hh_f)[None, :])
    bias_b = ifog_to_ifo_g((b_ih_b + b_hh_b)[None, :])
    bias_cat = jnp.concatenate([bias_f, bias_b], axis=1)  # (1, 8H)
    return wih_cat, whh_blk, bias_cat


def _full_spec(shape):
    ndim = len(shape)
    return pl.BlockSpec(tuple(shape), lambda: (0,) * ndim)


@jax.jit
def bilstm_forward(input_ids, masks, embedding_weight, lstm_params):
    """Equivalent of BiLSTM.forward after the per-doc _encode step.

    input_ids : (B, T) int32
    masks     : (B, T, 1) float32
    returns   : (B, 2*hidden) float32
    """
    batch, t_len = input_ids.shape
    num_layers = len(lstm_params)
    hidden = lstm_params[0]["fwd"][1].shape[1]       # W_hh: (4H, H)
    bp = ((batch + 7) // 8) * 8                      # sublane-aligned batch

    # Embedding lookup (data-dependent gather stays in XLA).
    x = jnp.take(embedding_weight, input_ids, axis=0)            # (B, T, E)
    embed_dim = x.shape[-1]
    x_pad = jnp.zeros((bp, t_len, embed_dim), jnp.float32).at[:batch].set(x)
    # Time-major, flattened, batch-padded: row t*Bp + b = timestep t of seq b.
    x_flat = jnp.transpose(x_pad, (1, 0, 2)).reshape(t_len * bp, embed_dim)

    # Fused mask slab: row t*Bp+b carries mask[b, t] over lanes 0:H and
    # mask[b, T-1-t] over lanes H:2H, so acc += mask_row * [h_fwd(t)|h_bwd(T-1-t)]
    # sums both directions correctly inside the single step loop.
    m = masks[:, :, 0].astype(jnp.float32)                       # (B, T)
    m_pad = jnp.zeros((bp, t_len), jnp.float32).at[:batch].set(m)
    m_t = jnp.transpose(m_pad)                                   # (T, Bp)
    m_fwd = jnp.broadcast_to(m_t[:, :, None], (t_len, bp, hidden))
    m_bwd = jnp.broadcast_to(m_t[::-1, :, None], (t_len, bp, hidden))
    mask_slab = jnp.concatenate([m_fwd, m_bwd], axis=2).reshape(
        t_len * bp, 2 * hidden)

    weight_args = []
    for layer in lstm_params:
        weight_args.extend(_prep_layer_weights(layer["fwd"], layer["bwd"], hidden))
    # TODO(synk): inter-layer dropout (args.bilstm_dropout) is a training-only
    # op in nn.LSTM; the inference forward pass omits it.

    args = (x_flat, mask_slab, *weight_args)
    kernel = _make_bilstm_kernel(num_layers, t_len, bp, hidden)

    # Explicit VMEM budget (scoped defaults: 16 MiB v5e / 32 MiB v6e,v7x).
    in_bytes = sum(int(a.size) * a.dtype.itemsize for a in args)
    scratch_bytes = 4 * (t_len * bp * 8 * hidden
                         + 2 * t_len * bp * max(2 * hidden, 128)
                         + bp * max(2 * hidden, 128))
    vmem_limit = int(min(64 << 20,
                         max(16 << 20, 2 * (in_bytes + scratch_bytes) + (2 << 20))))
    # TODO(synk): for large T*Bp, chunk the gx / hidden slabs over time
    # (pltpu.emit_pipeline) so residency stays within v7x's 64 MiB VMEM; a
    # second TensorCore (v7x) would only pay off with a batch-tiled grid.

    out = pl.pallas_call(
        kernel,
        out_shape=jax.ShapeDtypeStruct((bp, 2 * hidden), jnp.float32),
        in_specs=[_full_spec(a.shape) for a in args],
        out_specs=_full_spec((bp, 2 * hidden)),
        scratch_shapes=[
            pltpu.VMEM((t_len * bp, 8 * hidden), jnp.float32),   # gx slab
            pltpu.VMEM((t_len * bp, 2 * hidden), jnp.float32),   # h slab (ping)
            pltpu.VMEM((t_len * bp, 2 * hidden), jnp.float32),   # h slab (pong)
        ],
        compiler_params=pltpu.CompilerParams(vmem_limit_bytes=vmem_limit),
    )(*args)
    return out[:batch]


# ----------------------------------------------------------------------------
# Deterministic parameter / input construction
# ----------------------------------------------------------------------------
def init_lstm_params(key, embed_dim, hidden, num_layers):
    """PyTorch-style shapes: W_ih (4H, D_in), W_hh (4H, H), b_* (4H)."""
    params = []
    k = 1.0 / jnp.sqrt(hidden)
    in_dim = embed_dim
    for _ in range(num_layers):
        layer = {}
        for direction in ("fwd", "bwd"):
            key, k1, k2, k3, k4 = jax.random.split(key, 5)
            w_ih = jax.random.uniform(k1, (4 * hidden, in_dim), jnp.float32, -k, k)
            w_hh = jax.random.uniform(k2, (4 * hidden, hidden), jnp.float32, -k, k)
            b_ih = jax.random.uniform(k3, (4 * hidden,), jnp.float32, -k, k)
            b_hh = jax.random.uniform(k4, (4 * hidden,), jnp.float32, -k, k)
            layer[direction] = (w_ih, w_hh, b_ih, b_hh)
        params.append(layer)
        in_dim = 2 * hidden  # next layer consumes the bidirectional output
    return params


def encode_docs(docs, max_seq_len):
    """Mirrors BiLSTM._encode: pad token ids, mask[:len] = 1/len."""
    ids, masks = [], []
    for doc in docs:
        doc = doc[:max_seq_len]
        pad = max_seq_len - len(doc)
        ids.append(doc + [0] * pad)
        m = [1.0 / len(doc)] * len(doc) + [0.0] * pad
        masks.append([[v] for v in m])
    return (jnp.asarray(ids, dtype=jnp.int32),
            jnp.asarray(masks, dtype=jnp.float32))


if __name__ == "__main__":
    # Small synthetic configuration implied by the module's __init__/forward.
    BATCH = 2
    MAX_SEQ_LEN = 8        # args.bilstm_input_max_sequence_length
    EMBED_DIM = 16         # embedding_weight.shape[1]
    HIDDEN = 32            # args.bilstm_hidden_dim
    NUM_LAYERS = 2         # args.bilstm_num_layer
    VOCAB = 50

    key = jax.random.PRNGKey(0)
    key, k_emb, k_lstm = jax.random.split(key, 3)

    embedding_weight = jax.random.normal(k_emb, (VOCAB, EMBED_DIM), jnp.float32)
    lstm_params = init_lstm_params(k_lstm, EMBED_DIM, HIDDEN, NUM_LAYERS)

    # Deterministic "dataset.tokens" documents of unequal length (with padding).
    docs = [
        [3, 7, 11, 23, 42],
        [5, 9, 31],
    ]
    input_ids, masks = encode_docs(docs, MAX_SEQ_LEN)

    out = bilstm_forward(input_ids, masks, embedding_weight, lstm_params)
    out = jax.block_until_ready(out)

    assert out.shape == (BATCH, 2 * HIDDEN)
    assert out.dtype == jnp.float32
    assert bool(jnp.all(jnp.isfinite(out)))
    print("KERNEL_OK")
</pallas_src>

<mosaic_0001>
module attributes {stable_mosaic.version = 11 : i64} {
  func.func @kernel(%arg0: memref<64x16xf32, #tpu.memory_space<vmem>>, %arg1: memref<64x64xf32, #tpu.memory_space<vmem>>, %arg2: memref<16x256xf32, #tpu.memory_space<vmem>>, %arg3: memref<64x256xf32, #tpu.memory_space<vmem>>, %arg4: memref<1x256xf32, #tpu.memory_space<vmem>>, %arg5: memref<64x256xf32, #tpu.memory_space<vmem>>, %arg6: memref<64x256xf32, #tpu.memory_space<vmem>>, %arg7: memref<1x256xf32, #tpu.memory_space<vmem>>, %arg8: memref<8x64xf32, #tpu.memory_space<vmem>>, %arg9: memref<64x256xf32, #tpu.memory_space<vmem>>, %arg10: memref<64x64xf32, #tpu.memory_space<vmem>>, %arg11: memref<64x64xf32, #tpu.memory_space<vmem>>) attributes {dimension_semantics = [], scalar_prefetch = 0 : i64, scratch_operands = 3 : i64, tpu.core_type = #tpu.core_type<tc>} {
    %c0 = arith.constant 0 : index
    %c0_0 = arith.constant 0 : index
    %0 = vector.load %arg2[%c0, %c0_0] : memref<16x256xf32, #tpu.memory_space<vmem>>, vector<16x256xf32>
    %c0_1 = arith.constant 0 : index
    %c0_2 = arith.constant 0 : index
    %1 = vector.load %arg3[%c0_1, %c0_2] : memref<64x256xf32, #tpu.memory_space<vmem>>, vector<64x256xf32>
    %c0_3 = arith.constant 0 : index
    %c0_4 = arith.constant 0 : index
    %2 = vector.load %arg4[%c0_3, %c0_4] : memref<1x256xf32, #tpu.memory_space<vmem>>, vector<1x256xf32>
    %c0_5 = arith.constant 0 : index
    %c0_6 = arith.constant 0 : index
    %3 = vector.load %arg0[%c0_5, %c0_6] : memref<64x16xf32, #tpu.memory_space<vmem>>, vector<64x16xf32>
    %cst = arith.constant dense<0.000000e+00> : vector<64x256xf32>
    %4 = tpu.matmul %3, %0, %cst {dimension_numbers = #tpu.dot_dimension_numbers<[1], [0], [0], [1], [0, 0, 1, 1], [], []>} : vector<64x16xf32>, vector<16x256xf32>, vector<64x256xf32> -> vector<64x256xf32>
    %5 = vector.broadcast %2 : vector<1x256xf32> to vector<64x256xf32>
    %6 = arith.addf %4, %5 : vector<64x256xf32>
    %c0_7 = arith.constant 0 : index
    %c0_8 = arith.constant 0 : index
    %7 = vector.load %arg9[%c0_7, %c0_8] : memref<64x256xf32, #tpu.memory_space<vmem>>, vector<64x256xf32>
    tpu.vector_store %arg9[%c0_7, %c0_8], %6 {strides = array<i32>} : memref<64x256xf32, #tpu.memory_space<vmem>>, vector<64x256xf32>,
    %cst_9 = arith.constant 0.000000e+00 : f32
    %8 = vector.broadcast %cst_9 : f32 to vector<8x32xf32>
    %c0_i32 = arith.constant 0 : i32
    %c7_i32 = arith.constant 7 : i32
    %9 = arith.subi %c7_i32, %c0_i32 : i32
    %c8_i32 = arith.constant 8 : i32
    %10 = arith.muli %c0_i32, %c8_i32 : i32
    %11 = tpu.assume_multiple %10, 8 : i32
    %c8_i32_10 = arith.constant 8 : i32
    %12 = arith.muli %9, %c8_i32_10 : i32
    %13 = tpu.assume_multiple %12, 8 : i32
    %14 = arith.index_cast %11 : i32 to index
    %c0_11 = arith.constant 0 : index
    %15 = vector.load %arg9[%14, %c0_11] : memref<64x256xf32, #tpu.memory_space<vmem>>, vector<8x128xf32>
    %16 = arith.index_cast %13 : i32 to index
    %c128 = arith.constant 128 : index
    %17 = vector.load %arg9[%16, %c128] : memref<64x256xf32, #tpu.memory_space<vmem>>, vector<8x128xf32>
    %18 = tpu.concatenate %8, %8 in 1 : vector<8x32xf32>, vector<8x32xf32> -> vector<8x64xf32>
    %cst_12 = arith.constant dense<0.000000e+00> : vector<8x256xf32>
    %19 = tpu.matmul %18, %1, %cst_12 {dimension_numbers = #tpu.dot_dimension_numbers<[1], [0], [0], [1], [0, 0, 1, 1], [], []>} : vector<8x64xf32>, vector<64x256xf32>, vector<8x256xf32> -> vector<8x256xf32>
    %20 = vector.extract_strided_slice %19 {offsets = [0, 0], sizes = [8, 128], strides = [1, 1]} : vector<8x256xf32> to vector<8x128xf32>
    %21 = arith.addf %15, %20 : vector<8x128xf32>
    %22 = vector.extract_strided_slice %19 {offsets = [0, 128], sizes = [8, 128], strides = [1, 1]} : vector<8x256xf32> to vector<8x128xf32>
    %23 = arith.addf %17, %22 : vector<8x128xf32>
    %24 = vector.extract_strided_slice %21 {offsets = [0, 0], sizes = [8, 96], strides = [1, 1]} : vector<8x128xf32> to vector<8x96xf32>
    %25 = arith.negf %24 : vector<8x96xf32>
    %26 = math.exp %25 : vector<8x96xf32>
    %cst_13 = arith.constant 1.000000e+00 : f32
    %27 = vector.broadcast %cst_13 : f32 to vector<8x96xf32>
    %28 = arith.addf %27, %26 : vector<8x96xf32>
    %29 = arith.divf %27, %28 : vector<8x96xf32>
    %30 = vector.extract_strided_slice %29 {offsets = [0, 0], sizes = [8, 32], strides = [1, 1]} : vector<8x96xf32> to vector<8x32xf32>
    %31 = vector.extract_strided_slice %29 {offsets = [0, 32], sizes = [8, 32], strides = [1, 1]} : vector<8x96xf32> to vector<8x32xf32>
    %32 = vector.extract_strided_slice %29 {offsets = [0, 64], sizes = [8, 32], strides = [1, 1]} : vector<8x96xf32> to vector<8x32xf32>
    %33 = vector.extract_strided_slice %21 {offsets = [0, 96], sizes = [8, 32], strides = [1, 1]} : vector<8x128xf32> to vector<8x32xf32>
    %34 = math.tanh %33 : vector<8x32xf32>
    %35 = arith.mulf %31, %8 : vector<8x32xf32>
    %36 = arith.mulf %30, %34 : vector<8x32xf32>
    %37 = arith.addf %35, %36 : vector<8x32xf32>
    %38 = math.tanh %37 : vector<8x32xf32>
    %39 = arith.mulf %32, %38 : vector<8x32xf32>
    %40 = vector.extract_strided_slice %23 {offsets = [0, 0], sizes = [8, 96], strides = [1, 1]} : vector<8x128xf32> to vector<8x96xf32>
    %41 = arith.negf %40 : vector<8x96xf32>
    %42 = math.exp %41 : vector<8x96xf32>
    %cst_14 = arith.constant 1.000000e+00 : f32
    %43 = vector.broadcast %cst_14 : f32 to vector<8x96xf32>
    %44 = arith.addf %43, %42 : vector<8x96xf32>
    %45 = arith.divf %43, %44 : vector<8x96xf32>
    %46 = vector.extract_strided_slice %45 {offsets = [0, 0], sizes = [8, 32], strides = [1, 1]} : vector<8x96xf32> to vector<8x32xf32>
    %47 = vector.extract_strided_slice %45 {offsets = [0, 32], sizes = [8, 32], strides = [1, 1]} : vector<8x96xf32> to vector<8x32xf32>
    %48 = vector.extract_strided_slice %45 {offsets = [0, 64], sizes = [8, 32], strides = [1, 1]} : vector<8x96xf32> to vector<8x32xf32>
    %49 = vector.extract_strided_slice %23 {offsets = [0, 96], sizes = [8, 32], strides = [1, 1]} : vector<8x128xf32> to vector<8x32xf32>
    %50 = math.tanh %49 : vector<8x32xf32>
    %51 = arith.mulf %47, %8 : vector<8x32xf32>
    %52 = arith.mulf %46, %50 : vector<8x32xf32>
    %53 = arith.addf %51, %52 : vector<8x32xf32>
    %54 = math.tanh %53 : vector<8x32xf32>
    %55 = arith.mulf %48, %54 : vector<8x32xf32>
    %56 = arith.index_cast %11 : i32 to index
    %c0_15 = arith.constant 0 : index
    %57 = vector.load %arg10[%56, %c0_15] : memref<64x64xf32, #tpu.memory_space<vmem>>, vector<8x32xf32>
    tpu.vector_store %arg10[%56, %c0_15], %39 {strides = array<i32>} : memref<64x64xf32, #tpu.memory_space<vmem>>, vector<8x32xf32>,
    %58 = arith.index_cast %13 : i32 to index
    %c32 = arith.constant 32 : index
    %59 = vector.load %arg10[%58, %c32] : memref<64x64xf32, #tpu.memory_space<vmem>>, vector<8x32xf32>
    tpu.vector_store %arg10[%58, %c32], %55 {strides = array<i32>} : memref<64x64xf32, #tpu.memory_space<vmem>>, vector<8x32xf32>,
    %c1_i32 = arith.constant 1 : i32
    %c7_i32_16 = arith.constant 7 : i32
    %60 = arith.subi %c7_i32_16, %c1_i32 : i32
    %c8_i32_17 = arith.constant 8 : i32
    %61 = arith.muli %c1_i32, %c8_i32_17 : i32
    %62 = tpu.assume_multiple %61, 8 : i32
    %c8_i32_18 = arith.constant 8 : i32
    %63 = arith.muli %60, %c8_i32_18 : i32
    %64 = tpu.assume_multiple %63, 8 : i32
    %65 = arith.index_cast %62 : i32 to index
    %c0_19 = arith.constant 0 : index
    %66 = vector.load %arg9[%65, %c0_19] : memref<64x256xf32, #tpu.memory_space<vmem>>, vector<8x128xf32>
    %67 = arith.index_cast %64 : i32 to index
    %c128_20 = arith.constant 128 : index
    %68 = vector.load %arg9[%67, %c128_20] : memref<64x256xf32, #tpu.memory_space<vmem>>, vector<8x128xf32>
    %69 = tpu.concatenate %39, %55 in 1 : vector<8x32xf32>, vector<8x32xf32> -> vector<8x64xf32>
    %cst_21 = arith.constant dense<0.000000e+00> : vector<8x256xf32>
    %70 = tpu.matmul %69, %1, %cst_21 {dimension_numbers = #tpu.dot_dimension_numbers<[1], [0], [0], [1], [0, 0, 1, 1], [], []>} : vector<8x64xf32>, vector<64x256xf32>, vector<8x256xf32> -> vector<8x256xf32>
    %71 = vector.extract_strided_slice %70 {offsets = [0, 0], sizes = [8, 128], strides = [1, 1]} : vector<8x256xf32> to vector<8x128xf32>
    %72 = arith.addf %66, %71 : vector<8x128xf32>
    %73 = vector.extract_strided_slice %70 {offsets = [0, 128], sizes = [8, 128], strides = [1, 1]} : vector<8x256xf32> to vector<8x128xf32>
    %74 = arith.addf %68, %73 : vector<8x128xf32>
    %75 = vector.extract_strided_slice %72 {offsets = [0, 0], sizes = [8, 96], strides = [1, 1]} : vector<8x128xf32> to vector<8x96xf32>
    %76 = arith.negf %75 : vector<8x96xf32>
    %77 = math.exp %76 : vector<8x96xf32>
    %cst_22 = arith.constant 1.000000e+00 : f32
    %78 = vector.broadcast %cst_22 : f32 to vector<8x96xf32>
    %79 = arith.addf %78, %77 : vector<8x96xf32>
    %80 = arith.divf %78, %79 : vector<8x96xf32>
    %81 = vector.extract_strided_slice %80 {offsets = [0, 0], sizes = [8, 32], strides = [1, 1]} : vector<8x96xf32> to vector<8x32xf32>
    %82 = vector.extract_strided_slice %80 {offsets = [0, 32], sizes = [8, 32], strides = [1, 1]} : vector<8x96xf32> to vector<8x32xf32>
    %83 = vector.extract_strided_slice %80 {offsets = [0, 64], sizes = [8, 32], strides = [1, 1]} : vector<8x96xf32> to vector<8x32xf32>
    %84 = vector.extract_strided_slice %72 {offsets = [0, 96], sizes = [8, 32], strides = [1, 1]} : vector<8x128xf32> to vector<8x32xf32>
    %85 = math.tanh %84 : vector<8x32xf32>
    %86 = arith.mulf %82, %37 : vector<8x32xf32>
    %87 = arith.mulf %81, %85 : vector<8x32xf32>
    %88 = arith.addf %86, %87 : vector<8x32xf32>
    %89 = math.tanh %88 : vector<8x32xf32>
    %90 = arith.mulf %83, %89 : vector<8x32xf32>
    %91 = vector.extract_strided_slice %74 {offsets = [0, 0], sizes = [8, 96], strides = [1, 1]} : vector<8x128xf32> to vector<8x96xf32>
    %92 = arith.negf %91 : vector<8x96xf32>
    %93 = math.exp %92 : vector<8x96xf32>
    %cst_23 = arith.constant 1.000000e+00 : f32
    %94 = vector.broadcast %cst_23 : f32 to vector<8x96xf32>
    %95 = arith.addf %94, %93 : vector<8x96xf32>
    %96 = arith.divf %94, %95 : vector<8x96xf32>
    %97 = vector.extract_strided_slice %96 {offsets = [0, 0], sizes = [8, 32], strides = [1, 1]} : vector<8x96xf32> to vector<8x32xf32>
    %98 = vector.extract_strided_slice %96 {offsets = [0, 32], sizes = [8, 32], strides = [1, 1]} : vector<8x96xf32> to vector<8x32xf32>
    %99 = vector.extract_strided_slice %96 {offsets = [0, 64], sizes = [8, 32], strides = [1, 1]} : vector<8x96xf32> to vector<8x32xf32>
    %100 = vector.extract_strided_slice %74 {offsets = [0, 96], sizes = [8, 32], strides = [1, 1]} : vector<8x128xf32> to vector<8x32xf32>
    %101 = math.tanh %100 : vector<8x32xf32>
    %102 = arith.mulf %98, %53 : vector<8x32xf32>
    %103 = arith.mulf %97, %101 : vector<8x32xf32>
    %104 = arith.addf %102, %103 : vector<8x32xf32>
    %105 = math.tanh %104 : vector<8x32xf32>
    %106 = arith.mulf %99, %105 : vector<8x32xf32>
    %107 = arith.index_cast %62 : i32 to index
    %c0_24 = arith.constant 0 : index
    %108 = vector.load %arg10[%107, %c0_24] : memref<64x64xf32, #tpu.memory_space<vmem>>, vector<8x32xf32>
    tpu.vector_store %arg10[%107, %c0_24], %90 {strides = array<i32>} : memref<64x64xf32, #tpu.memory_space<vmem>>, vector<8x32xf32>,
    %109 = arith.index_cast %64 : i32 to index
    %c32_25 = arith.constant 32 : index
    %110 = vector.load %arg10[%109, %c32_25] : memref<64x64xf32, #tpu.memory_space<vmem>>, vector<8x32xf32>
    tpu.vector_store %arg10[%109, %c32_25], %106 {strides = array<i32>} : memref<64x64xf32, #tpu.memory_space<vmem>>, vector<8x32xf32>,
    %c2_i32 = arith.constant 2 : i32
    %c7_i32_26 = arith.constant 7 : i32
    %111 = arith.subi %c7_i32_26, %c2_i32 : i32
    %c8_i32_27 = arith.constant 8 : i32
    %112 = arith.muli %c2_i32, %c8_i32_27 : i32
    %113 = tpu.assume_multiple %112, 8 : i32
    %c8_i32_28 = arith.constant 8 : i32
    %114 = arith.muli %111, %c8_i32_28 : i32
    %115 = tpu.assume_multiple %114, 8 : i32
    %116 = arith.index_cast %113 : i32 to index
    %c0_29 = arith.constant 0 : index
    %117 = vector.load %arg9[%116, %c0_29] : memref<64x256xf32, #tpu.memory_space<vmem>>, vector<8x128xf32>
    %118 = arith.index_cast %115 : i32 to index
    %c128_30 = arith.constant 128 : index
    %119 = vector.load %arg9[%118, %c128_30] : memref<64x256xf32, #tpu.memory_space<vmem>>, vector<8x128xf32>
    %120 = tpu.concatenate %90, %106 in 1 : vector<8x32xf32>, vector<8x32xf32> -> vector<8x64xf32>
    %cst_31 = arith.constant dense<0.000000e+00> : vector<8x256xf32>
    %121 = tpu.matmul %120, %1, %cst_31 {dimension_numbers = #tpu.dot_dimension_numbers<[1], [0], [0], [1], [0, 0, 1, 1], [], []>} : vector<8x64xf32>, vector<64x256xf32>, vector<8x256xf32> -> vector<8x256xf32>
    %122 = vector.extract_strided_slice %121 {offsets = [0, 0], sizes = [8, 128], strides = [1, 1]} : vector<8x256xf32> to vector<8x128xf32>
    %123 = arith.addf %117, %122 : vector<8x128xf32>
    %124 = vector.extract_strided_slice %121 {offsets = [0, 128], sizes = [8, 128], strides = [1, 1]} : vector<8x256xf32> to vector<8x128xf32>
    %125 = arith.addf %119, %124 : vector<8x128xf32>
    %126 = vector.extract_strided_slice %123 {offsets = [0, 0], sizes = [8, 96], strides = [1, 1]} : vector<8x128xf32> to vector<8x96xf32>
    %127 = arith.negf %126 : vector<8x96xf32>
    %128 = math.exp %127 : vector<8x96xf32>
    %cst_32 = arith.constant 1.000000e+00 : f32
    %129 = vector.broadcast %cst_32 : f32 to vector<8x96xf32>
    %130 = arith.addf %129, %128 : vector<8x96xf32>
    %131 = arith.divf %129, %130 : vector<8x96xf32>
    %132 = vector.extract_strided_slice %131 {offsets = [0, 0], sizes = [8, 32], strides = [1, 1]} : vector<8x96xf32> to vector<8x32xf32>
    %133 = vector.extract_strided_slice %131 {offsets = [0, 32], sizes = [8, 32], strides = [1, 1]} : vector<8x96xf32> to vector<8x32xf32>
    %134 = vector.extract_strided_slice %131 {offsets = [0, 64], sizes = [8, 32], strides = [1, 1]} : vector<8x96xf32> to vector<8x32xf32>
    %135 = vector.extract_strided_slice %123 {offsets = [0, 96], sizes = [8, 32], strides = [1, 1]} : vector<8x128xf32> to vector<8x32xf32>
    %136 = math.tanh %135 : vector<8x32xf32>
    %137 = arith.mulf %133, %88 : vector<8x32xf32>
    %138 = arith.mulf %132, %136 : vector<8x32xf32>
    %139 = arith.addf %137, %138 : vector<8x32xf32>
    %140 = math.tanh %139 : vector<8x32xf32>
    %141 = arith.mulf %134, %140 : vector<8x32xf32>
    %142 = vector.extract_strided_slice %125 {offsets = [0, 0], sizes = [8, 96], strides = [1, 1]} : vector<8x128xf32> to vector<8x96xf32>
    %143 = arith.negf %142 : vector<8x96xf32>
    %144 = math.exp %143 : vector<8x96xf32>
    %cst_33 = arith.constant 1.000000e+00 : f32
    %145 = vector.broadcast %cst_33 : f32 to vector<8x96xf32>
    %146 = arith.addf %145, %144 : vector<8x96xf32>
    %147 = arith.divf %145, %146 : vector<8x96xf32>
    %148 = vector.extract_strided_slice %147 {offsets = [0, 0], sizes = [8, 32], strides = [1, 1]} : vector<8x96xf32> to vector<8x32xf32>
    %149 = vector.extract_strided_slice %147 {offsets = [0, 32], sizes = [8, 32], strides = [1, 1]} : vector<8x96xf32> to vector<8x32xf32>
    %150 = vector.extract_strided_slice %147 {offsets = [0, 64], sizes = [8, 32], strides = [1, 1]} : vector<8x96xf32> to vector<8x32xf32>
    %151 = vector.extract_strided_slice %125 {offsets = [0, 96], sizes = [8, 32], strides = [1, 1]} : vector<8x128xf32> to vector<8x32xf32>
    %152 = math.tanh %151 : vector<8x32xf32>
    %153 = arith.mulf %149, %104 : vector<8x32xf32>
    %154 = arith.mulf %148, %152 : vector<8x32xf32>
    %155 = arith.addf %153, %154 : vector<8x32xf32>
    %156 = math.tanh %155 : vector<8x32xf32>
    %157 = arith.mulf %150, %156 : vector<8x32xf32>
    %158 = arith.index_cast %113 : i32 to index
    %c0_34 = arith.constant 0 : index
    %159 = vector.load %arg10[%158, %c0_34] : memref<64x64xf32, #tpu.memory_space<vmem>>, vector<8x32xf32>
    tpu.vector_store %arg10[%158, %c0_34], %141 {strides = array<i32>} : memref<64x64xf32, #tpu.memory_space<vmem>>, vector<8x32xf32>,
    %160 = arith.index_cast %115 : i32 to index
    %c32_35 = arith.constant 32 : index
    %161 = vector.load %arg10[%160, %c32_35] : memref<64x64xf32, #tpu.memory_space<vmem>>, vector<8x32xf32>
    tpu.vector_store %arg10[%160, %c32_35], %157 {strides = array<i32>} : memref<64x64xf32, #tpu.memory_space<vmem>>, vector<8x32xf32>,
    %c3_i32 = arith.constant 3 : i32
    %c7_i32_36 = arith.constant 7 : i32
    %162 = arith.subi %c7_i32_36, %c3_i32 : i32
    %c8_i32_37 = arith.constant 8 : i32
    %163 = arith.muli %c3_i32, %c8_i32_37 : i32
    %164 = tpu.assume_multiple %163, 8 : i32
    %c8_i32_38 = arith.constant 8 : i32
    %165 = arith.muli %162, %c8_i32_38 : i32
    %166 = tpu.assume_multiple %165, 8 : i32
    %167 = arith.index_cast %164 : i32 to index
    %c0_39 = arith.constant 0 : index
    %168 = vector.load %arg9[%167, %c0_39] : memref<64x256xf32, #tpu.memory_space<vmem>>, vector<8x128xf32>
    %169 = arith.index_cast %166 : i32 to index
    %c128_40 = arith.constant 128 : index
    %170 = vector.load %arg9[%169, %c128_40] : memref<64x256xf32, #tpu.memory_space<vmem>>, vector<8x128xf32>
    %171 = tpu.concatenate %141, %157 in 1 : vector<8x32xf32>, vector<8x32xf32> -> vector<8x64xf32>
    %cst_41 = arith.constant dense<0.000000e+00> : vector<8x256xf32>
    %172 = tpu.matmul %171, %1, %cst_41 {dimension_numbers = #tpu.dot_dimension_numbers<[1], [0], [0], [1], [0, 0, 1, 1], [], []>} : vector<8x64xf32>, vector<64x256xf32>, vector<8x256xf32> -> vector<8x256xf32>
    %173 = vector.extract_strided_slice %172 {offsets = [0, 0], sizes = [8, 128], strides = [1, 1]} : vector<8x256xf32> to vector<8x128xf32>
    %174 = arith.addf %168, %173 : vector<8x128xf32>
    %175 = vector.extract_strided_slice %172 {offsets = [0, 128], sizes = [8, 128], strides = [1, 1]} : vector<8x256xf32> to vector<8x128xf32>
    %176 = arith.addf %170, %175 : vector<8x128xf32>
    %177 = vector.extract_strided_slice %174 {offsets = [0, 0], sizes = [8, 96], strides = [1, 1]} : vector<8x128xf32> to vector<8x96xf32>
    %178 = arith.negf %177 : vector<8x96xf32>
    %179 = math.exp %178 : vector<8x96xf32>
    %cst_42 = arith.constant 1.000000e+00 : f32
    %180 = vector.broadcast %cst_42 : f32 to vector<8x96xf32>
    %181 = arith.addf %180, %179 : vector<8x96xf32>
    %182 = arith.divf %180, %181 : vector<8x96xf32>
    %183 = vector.extract_strided_slice %182 {offsets = [0, 0], sizes = [8, 32], strides = [1, 1]} : vector<8x96xf32> to vector<8x32xf32>
    %184 = vector.extract_strided_slice %182 {offsets = [0, 32], sizes = [8, 32], strides = [1, 1]} : vector<8x96xf32> to vector<8x32xf32>
    %185 = vector.extract_strided_slice %182 {offsets = [0, 64], sizes = [8, 32], strides = [1, 1]} : vector<8x96xf32> to vector<8x32xf32>
    %186 = vector.extract_strided_slice %174 {offsets = [0, 96], sizes = [8, 32], strides = [1, 1]} : vector<8x128xf32> to vector<8x32xf32>
    %187 = math.tanh %186 : vector<8x32xf32>
    %188 = arith.mulf %184, %139 : vector<8x32xf32>
    %189 = arith.mulf %183, %187 : vector<8x32xf32>
    %190 = arith.addf %188, %189 : vector<8x32xf32>
    %191 = math.tanh %190 : vector<8x32xf32>
    %192 = arith.mulf %185, %191 : vector<8x32xf32>
    %193 = vector.extract_strided_slice %176 {offsets = [0, 0], sizes = [8, 96], strides = [1, 1]} : vector<8x128xf32> to vector<8x96xf32>
    %194 = arith.negf %193 : vector<8x96xf32>
    %195 = math.exp %194 : vector<8x96xf32>
    %cst_43 = arith.constant 1.000000e+00 : f32
    %196 = vector.broadcast %cst_43 : f32 to vector<8x96xf32>
    %197 = arith.addf %196, %195 : vector<8x96xf32>
    %198 = arith.divf %196, %197 : vector<8x96xf32>
    %199 = vector.extract_strided_slice %198 {offsets = [0, 0], sizes = [8, 32], strides = [1, 1]} : vector<8x96xf32> to vector<8x32xf32>
    %200 = vector.extract_strided_slice %198 {offsets = [0, 32], sizes = [8, 32], strides = [1, 1]} : vector<8x96xf32> to vector<8x32xf32>
    %201 = vector.extract_strided_slice %198 {offsets = [0, 64], sizes = [8, 32], strides = [1, 1]} : vector<8x96xf32> to vector<8x32xf32>
    %202 = vector.extract_strided_slice %176 {offsets = [0, 96], sizes = [8, 32], strides = [1, 1]} : vector<8x128xf32> to vector<8x32xf32>
    %203 = math.tanh %202 : vector<8x32xf32>
    %204 = arith.mulf %200, %155 : vector<8x32xf32>
    %205 = arith.mulf %199, %203 : vector<8x32xf32>
    %206 = arith.addf %204, %205 : vector<8x32xf32>
    %207 = math.tanh %206 : vector<8x32xf32>
    %208 = arith.mulf %201, %207 : vector<8x32xf32>
    %209 = arith.index_cast %164 : i32 to index
    %c0_44 = arith.constant 0 : index
    %210 = vector.load %arg10[%209, %c0_44] : memref<64x64xf32, #tpu.memory_space<vmem>>, vector<8x32xf32>
    tpu.vector_store %arg10[%209, %c0_44], %192 {strides = array<i32>} : memref<64x64xf32, #tpu.memory_space<vmem>>, vector<8x32xf32>,
    %211 = arith.index_cast %166 : i32 to index
    %c32_45 = arith.constant 32 : index
    %212 = vector.load %arg10[%211, %c32_45] : memref<64x64xf32, #tpu.memory_space<vmem>>, vector<8x32xf32>
    tpu.vector_store %arg10[%211, %c32_45], %208 {strides = array<i32>} : memref<64x64xf32, #tpu.memory_space<vmem>>, vector<8x32xf32>,
    %c4_i32 = arith.constant 4 : i32
    %c7_i32_46 = arith.constant 7 : i32
    %213 = arith.subi %c7_i32_46, %c4_i32 : i32
    %c8_i32_47 = arith.constant 8 : i32
    %214 = arith.muli %c4_i32, %c8_i32_47 : i32
    %215 = tpu.assume_multiple %214, 8 : i32
    %c8_i32_48 = arith.constant 8 : i32
    %216 = arith.muli %213, %c8_i32_48 : i32
    %217 = tpu.assume_multiple %216, 8 : i32
    %218 = arith.index_cast %215 : i32 to index
    %c0_49 = arith.constant 0 : index
    %219 = vector.load %arg9[%218, %c0_49] : memref<64x256xf32, #tpu.memory_space<vmem>>, vector<8x128xf32>
    %220 = arith.index_cast %217 : i32 to index
    %c128_50 = arith.constant 128 : index
    %221 = vector.load %arg9[%220, %c128_50] : memref<64x256xf32, #tpu.memory_space<vmem>>, vector<8x128xf32>
    %222 = tpu.concatenate %192, %208 in 1 : vector<8x32xf32>, vector<8x32xf32> -> vector<8x64xf32>
    %cst_51 = arith.constant dense<0.000000e+00> : vector<8x256xf32>
    %223 = tpu.matmul %222, %1, %cst_51 {dimension_numbers = #tpu.dot_dimension_numbers<[1], [0], [0], [1], [0, 0, 1, 1], [], []>} : vector<8x64xf32>, vector<64x256xf32>, vector<8x256xf32> -> vector<8x256xf32>
    %224 = vector.extract_strided_slice %223 {offsets = [0, 0], sizes = [8, 128], strides = [1, 1]} : vector<8x256xf32> to vector<8x128xf32>
    %225 = arith.addf %219, %224 : vector<8x128xf32>
    %226 = vector.extract_strided_slice %223 {offsets = [0, 128], sizes = [8, 128], strides = [1, 1]} : vector<8x256xf32> to vector<8x128xf32>
    %227 = arith.addf %221, %226 : vector<8x128xf32>
    %228 = vector.extract_strided_slice %225 {offsets = [0, 0], sizes = [8, 96], strides = [1, 1]} : vector<8x128xf32> to vector<8x96xf32>
    %229 = arith.negf %228 : vector<8x96xf32>
    %230 = math.exp %229 : vector<8x96xf32>
    %cst_52 = arith.constant 1.000000e+00 : f32
    %231 = vector.broadcast %cst_52 : f32 to vector<8x96xf32>
    %232 = arith.addf %231, %230 : vector<8x96xf32>
    %233 = arith.divf %231, %232 : vector<8x96xf32>
    %234 = vector.extract_strided_slice %233 {offsets = [0, 0], sizes = [8, 32], strides = [1, 1]} : vector<8x96xf32> to vector<8x32xf32>
    %235 = vector.extract_strided_slice %233 {offsets = [0, 32], sizes = [8, 32], strides = [1, 1]} : vector<8x96xf32> to vector<8x32xf32>
    %236 = vector.extract_strided_slice %233 {offsets = [0, 64], sizes = [8, 32], strides = [1, 1]} : vector<8x96xf32> to vector<8x32xf32>
    %237 = vector.extract_strided_slice %225 {offsets = [0, 96], sizes = [8, 32], strides = [1, 1]} : vector<8x128xf32> to vector<8x32xf32>
    %238 = math.tanh %237 : vector<8x32xf32>
    %239 = arith.mulf %235, %190 : vector<8x32xf32>
    %240 = arith.mulf %234, %238 : vector<8x32xf32>
    %241 = arith.addf %239, %240 : vector<8x32xf32>
    %242 = math.tanh %241 : vector<8x32xf32>
    %243 = arith.mulf %236, %242 : vector<8x32xf32>
    %244 = vector.extract_strided_slice %227 {offsets = [0, 0], sizes = [8, 96], strides = [1, 1]} : vector<8x128xf32> to vector<8x96xf32>
    %245 = arith.negf %244 : vector<8x96xf32>
    %246 = math.exp %245 : vector<8x96xf32>
    %cst_53 = arith.constant 1.000000e+00 : f32
    %247 = vector.broadcast %cst_53 : f32 to vector<8x96xf32>
    %248 = arith.addf %247, %246 : vector<8x96xf32>
    %249 = arith.divf %247, %248 : vector<8x96xf32>
    %250 = vector.extract_strided_slice %249 {offsets = [0, 0], sizes = [8, 32], strides = [1, 1]} : vector<8x96xf32> to vector<8x32xf32>
    %251 = vector.extract_strided_slice %249 {offsets = [0, 32], sizes = [8, 32], strides = [1, 1]} : vector<8x96xf32> to vector<8x32xf32>
    %252 = vector.extract_strided_slice %249 {offsets = [0, 64], sizes = [8, 32], strides = [1, 1]} : vector<8x96xf32> to vector<8x32xf32>
    %253 = vector.extract_strided_slice %227 {offsets = [0, 96], sizes = [8, 32], strides = [1, 1]} : vector<8x128xf32> to vector<8x32xf32>
    %254 = math.tanh %253 : vector<8x32xf32>
    %255 = arith.mulf %251, %206 : vector<8x32xf32>
    %256 = arith.mulf %250, %254 : vector<8x32xf32>
    %257 = arith.addf %255, %256 : vector<8x32xf32>
    %258 = math.tanh %257 : vector<8x32xf32>
    %259 = arith.mulf %252, %258 : vector<8x32xf32>
    %260 = arith.index_cast %215 : i32 to index
    %c0_54 = arith.constant 0 : index
    %261 = vector.load %arg10[%260, %c0_54] : memref<64x64xf32, #tpu.memory_space<vmem>>, vector<8x32xf32>
    tpu.vector_store %arg10[%260, %c0_54], %243 {strides = array<i32>} : memref<64x64xf32, #tpu.memory_space<vmem>>, vector<8x32xf32>,
    %262 = arith.index_cast %217 : i32 to index
    %c32_55 = arith.constant 32 : index
    %263 = vector.load %arg10[%262, %c32_55] : memref<64x64xf32, #tpu.memory_space<vmem>>, vector<8x32xf32>
    tpu.vector_store %arg10[%262, %c32_55], %259 {strides = array<i32>} : memref<64x64xf32, #tpu.memory_space<vmem>>, vector<8x32xf32>,
    %c5_i32 = arith.constant 5 : i32
    %c7_i32_56 = arith.constant 7 : i32
    %264 = arith.subi %c7_i32_56, %c5_i32 : i32
    %c8_i32_57 = arith.constant 8 : i32
    %265 = arith.muli %c5_i32, %c8_i32_57 : i32
    %266 = tpu.assume_multiple %265, 8 : i32
    %c8_i32_58 = arith.constant 8 : i32
    %267 = arith.muli %264, %c8_i32_58 : i32
    %268 = tpu.assume_multiple %267, 8 : i32
    %269 = arith.index_cast %266 : i32 to index
    %c0_59 = arith.constant 0 : index
    %270 = vector.load %arg9[%269, %c0_59] : memref<64x256xf32, #tpu.memory_space<vmem>>, vector<8x128xf32>
    %271 = arith.index_cast %268 : i32 to index
    %c128_60 = arith.constant 128 : index
    %272 = vector.load %arg9[%271, %c128_60] : memref<64x256xf32, #tpu.memory_space<vmem>>, vector<8x128xf32>
    %273 = tpu.concatenate %243, %259 in 1 : vector<8x32xf32>, vector<8x32xf32> -> vector<8x64xf32>
    %cst_61 = arith.constant dense<0.000000e+00> : vector<8x256xf32>
    %274 = tpu.matmul %273, %1, %cst_61 {dimension_numbers = #tpu.dot_dimension_numbers<[1], [0], [0], [1], [0, 0, 1, 1], [], []>} : vector<8x64xf32>, vector<64x256xf32>, vector<8x256xf32> -> vector<8x256xf32>
    %275 = vector.extract_strided_slice %274 {offsets = [0, 0], sizes = [8, 128], strides = [1, 1]} : vector<8x256xf32> to vector<8x128xf32>
    %276 = arith.addf %270, %275 : vector<8x128xf32>
    %277 = vector.extract_strided_slice %274 {offsets = [0, 128], sizes = [8, 128], strides = [1, 1]} : vector<8x256xf32> to vector<8x128xf32>
    %278 = arith.addf %272, %277 : vector<8x128xf32>
    %279 = vector.extract_strided_slice %276 {offsets = [0, 0], sizes = [8, 96], strides = [1, 1]} : vector<8x128xf32> to vector<8x96xf32>
    %280 = arith.negf %279 : vector<8x96xf32>
    %281 = math.exp %280 : vector<8x96xf32>
    %cst_62 = arith.constant 1.000000e+00 : f32
    %282 = vector.broadcast %cst_62 : f32 to vector<8x96xf32>
    %283 = arith.addf %282, %281 : vector<8x96xf32>
    %284 = arith.divf %282, %283 : vector<8x96xf32>
    %285 = vector.extract_strided_slice %284 {offsets = [0, 0], sizes = [8, 32], strides = [1, 1]} : vector<8x96xf32> to vector<8x32xf32>
    %286 = vector.extract_strided_slice %284 {offsets = [0, 32], sizes = [8, 32], strides = [1, 1]} : vector<8x96xf32> to vector<8x32xf32>
    %287 = vector.extract_strided_slice %284 {offsets = [0, 64], sizes = [8, 32], strides = [1, 1]} : vector<8x96xf32> to vector<8x32xf32>
    %288 = vector.extract_strided_slice %276 {offsets = [0, 96], sizes = [8, 32], strides = [1, 1]} : vector<8x128xf32> to vector<8x32xf32>
    %289 = math.tanh %288 : vector<8x32xf32>
    %290 = arith.mulf %286, %241 : vector<8x32xf32>
    %291 = arith.mulf %285, %289 : vector<8x32xf32>
    %292 = arith.addf %290, %291 : vector<8x32xf32>
    %293 = math.tanh %292 : vector<8x32xf32>
    %294 = arith.mulf %287, %293 : vector<8x32xf32>
    %295 = vector.extract_strided_slice %278 {offsets = [0, 0], sizes = [8, 96], strides = [1, 1]} : vector<8x128xf32> to vector<8x96xf32>
    %296 = arith.negf %295 : vector<8x96xf32>
    %297 = math.exp %296 : vector<8x96xf32>
    %cst_63 = arith.constant 1.000000e+00 : f32
    %298 = vector.broadcast %cst_63 : f32 to vector<8x96xf32>
    %299 = arith.addf %298, %297 : vector<8x96xf32>
    %300 = arith.divf %298, %299 : vector<8x96xf32>
    %301 = vector.extract_strided_slice %300 {offsets = [0, 0], sizes = [8, 32], strides = [1, 1]} : vector<8x96xf32> to vector<8x32xf32>
    %302 = vector.extract_strided_slice %300 {offsets = [0, 32], sizes = [8, 32], strides = [1, 1]} : vector<8x96xf32> to vector<8x32xf32>
    %303 = vector.extract_strided_slice %300 {offsets = [0, 64], sizes = [8, 32], strides = [1, 1]} : vector<8x96xf32> to vector<8x32xf32>
    %304 = vector.extract_strided_slice %278 {offsets = [0, 96], sizes = [8, 32], strides = [1, 1]} : vector<8x128xf32> to vector<8x32xf32>
    %305 = math.tanh %304 : vector<8x32xf32>
    %306 = arith.mulf %302, %257 : vector<8x32xf32>
    %307 = arith.mulf %301, %305 : vector<8x32xf32>
    %308 = arith.addf %306, %307 : vector<8x32xf32>
    %309 = math.tanh %308 : vector<8x32xf32>
    %310 = arith.mulf %303, %309 : vector<8x32xf32>
    %311 = arith.index_cast %266 : i32 to index
    %c0_64 = arith.constant 0 : index
    %312 = vector.load %arg10[%311, %c0_64] : memref<64x64xf32, #tpu.memory_space<vmem>>, vector<8x32xf32>
    tpu.vector_store %arg10[%311, %c0_64], %294 {strides = array<i32>} : memref<64x64xf32, #tpu.memory_space<vmem>>, vector<8x32xf32>,
    %313 = arith.index_cast %268 : i32 to index
    %c32_65 = arith.constant 32 : index
    %314 = vector.load %arg10[%313, %c32_65] : memref<64x64xf32, #tpu.memory_space<vmem>>, vector<8x32xf32>
    tpu.vector_store %arg10[%313, %c32_65], %310 {strides = array<i32>} : memref<64x64xf32, #tpu.memory_space<vmem>>, vector<8x32xf32>,
    %c6_i32 = arith.constant 6 : i32
    %c7_i32_66 = arith.constant 7 : i32
    %315 = arith.subi %c7_i32_66, %c6_i32 : i32
    %c8_i32_67 = arith.constant 8 : i32
    %316 = arith.muli %c6_i32, %c8_i32_67 : i32
    %317 = tpu.assume_multiple %316, 8 : i32
    %c8_i32_68 = arith.constant 8 : i32
    %318 = arith.muli %315, %c8_i32_68 : i32
    %319 = tpu.assume_multiple %318, 8 : i32
    %320 = arith.index_cast %317 : i32 to index
    %c0_69 = arith.constant 0 : index
    %321 = vector.load %arg9[%320, %c0_69] : memref<64x256xf32, #tpu.memory_space<vmem>>, vector<8x128xf32>
    %322 = arith.index_cast %319 : i32 to index
    %c128_70 = arith.constant 128 : index
    %323 = vector.load %arg9[%322, %c128_70] : memref<64x256xf32, #tpu.memory_space<vmem>>, vector<8x128xf32>
    %324 = tpu.concatenate %294, %310 in 1 : vector<8x32xf32>, vector<8x32xf32> -> vector<8x64xf32>
    %cst_71 = arith.constant dense<0.000000e+00> : vector<8x256xf32>
    %325 = tpu.matmul %324, %1, %cst_71 {dimension_numbers = #tpu.dot_dimension_numbers<[1], [0], [0], [1], [0, 0, 1, 1], [], []>} : vector<8x64xf32>, vector<64x256xf32>, vector<8x256xf32> -> vector<8x256xf32>
    %326 = vector.extract_strided_slice %325 {offsets = [0, 0], sizes = [8, 128], strides = [1, 1]} : vector<8x256xf32> to vector<8x128xf32>
    %327 = arith.addf %321, %326 : vector<8x128xf32>
    %328 = vector.extract_strided_slice %325 {offsets = [0, 128], sizes = [8, 128], strides = [1, 1]} : vector<8x256xf32> to vector<8x128xf32>
    %329 = arith.addf %323, %328 : vector<8x128xf32>
    %330 = vector.extract_strided_slice %327 {offsets = [0, 0], sizes = [8, 96], strides = [1, 1]} : vector<8x128xf32> to vector<8x96xf32>
    %331 = arith.negf %330 : vector<8x96xf32>
    %332 = math.exp %331 : vector<8x96xf32>
    %cst_72 = arith.constant 1.000000e+00 : f32
    %333 = vector.broadcast %cst_72 : f32 to vector<8x96xf32>
    %334 = arith.addf %333, %332 : vector<8x96xf32>
    %335 = arith.divf %333, %334 : vector<8x96xf32>
    %336 = vector.extract_strided_slice %335 {offsets = [0, 0], sizes = [8, 32], strides = [1, 1]} : vector<8x96xf32> to vector<8x32xf32>
    %337 = vector.extract_strided_slice %335 {offsets = [0, 32], sizes = [8, 32], strides = [1, 1]} : vector<8x96xf32> to vector<8x32xf32>
    %338 = vector.extract_strided_slice %335 {offsets = [0, 64], sizes = [8, 32], strides = [1, 1]} : vector<8x96xf32> to vector<8x32xf32>
    %339 = vector.extract_strided_slice %327 {offsets = [0, 96], sizes = [8, 32], strides = [1, 1]} : vector<8x128xf32> to vector<8x32xf32>
    %340 = math.tanh %339 : vector<8x32xf32>
    %341 = arith.mulf %337, %292 : vector<8x32xf32>
    %342 = arith.mulf %336, %340 : vector<8x32xf32>
    %343 = arith.addf %341, %342 : vector<8x32xf32>
    %344 = math.tanh %343 : vector<8x32xf32>
    %345 = arith.mulf %338, %344 : vector<8x32xf32>
    %346 = vector.extract_strided_slice %329 {offsets = [0, 0], sizes = [8, 96], strides = [1, 1]} : vector<8x128xf32> to vector<8x96xf32>
    %347 = arith.negf %346 : vector<8x96xf32>
    %348 = math.exp %347 : vector<8x96xf32>
    %cst_73 = arith.constant 1.000000e+00 : f32
    %349 = vector.broadcast %cst_73 : f32 to vector<8x96xf32>
    %350 = arith.addf %349, %348 : vector<8x96xf32>
    %351 = arith.divf %349, %350 : vector<8x96xf32>
    %352 = vector.extract_strided_slice %351 {offsets = [0, 0], sizes = [8, 32], strides = [1, 1]} : vector<8x96xf32> to vector<8x32xf32>
    %353 = vector.extract_strided_slice %351 {offsets = [0, 32], sizes = [8, 32], strides = [1, 1]} : vector<8x96xf32> to vector<8x32xf32>
    %354 = vector.extract_strided_slice %351 {offsets = [0, 64], sizes = [8, 32], strides = [1, 1]} : vector<8x96xf32> to vector<8x32xf32>
    %355 = vector.extract_strided_slice %329 {offsets = [0, 96], sizes = [8, 32], strides = [1, 1]} : vector<8x128xf32> to vector<8x32xf32>
    %356 = math.tanh %355 : vector<8x32xf32>
    %357 = arith.mulf %353, %308 : vector<8x32xf32>
    %358 = arith.mulf %352, %356 : vector<8x32xf32>
    %359 = arith.addf %357, %358 : vector<8x32xf32>
    %360 = math.tanh %359 : vector<8x32xf32>
    %361 = arith.mulf %354, %360 : vector<8x32xf32>
    %362 = arith.index_cast %317 : i32 to index
    %c0_74 = arith.constant 0 : index
    %363 = vector.load %arg10[%362, %c0_74] : memref<64x64xf32, #tpu.memory_space<vmem>>, vector<8x32xf32>
    tpu.vector_store %arg10[%362, %c0_74], %345 {strides = array<i32>} : memref<64x64xf32, #tpu.memory_space<vmem>>, vector<8x32xf32>,
    %364 = arith.index_cast %319 : i32 to index
    %c32_75 = arith.constant 32 : index
    %365 = vector.load %arg10[%364, %c32_75] : memref<64x64xf32, #tpu.memory_space<vmem>>, vector<8x32xf32>
    tpu.vector_store %arg10[%364, %c32_75], %361 {strides = array<i32>} : memref<64x64xf32, #tpu.memory_space<vmem>>, vector<8x32xf32>,
    %c7_i32_76 = arith.constant 7 : i32
    %c7_i32_77 = arith.constant 7 : i32
    %366 = arith.subi %c7_i32_77, %c7_i32_76 : i32
    %c8_i32_78 = arith.constant 8 : i32
    %367 = arith.muli %c7_i32_76, %c8_i32_78 : i32
    %368 = tpu.assume_multiple %367, 8 : i32
    %c8_i32_79 = arith.constant 8 : i32
    %369 = arith.muli %366, %c8_i32_79 : i32
    %370 = tpu.assume_multiple %369, 8 : i32
    %371 = arith.index_cast %368 : i32 to index
    %c0_80 = arith.constant 0 : index
    %372 = vector.load %arg9[%371, %c0_80] : memref<64x256xf32, #tpu.memory_space<vmem>>, vector<8x128xf32>
    %373 = arith.index_cast %370 : i32 to index
    %c128_81 = arith.constant 128 : index
    %374 = vector.load %arg9[%373, %c128_81] : memref<64x256xf32, #tpu.memory_space<vmem>>, vector<8x128xf32>
    %375 = tpu.concatenate %345, %361 in 1 : vector<8x32xf32>, vector<8x32xf32> -> vector<8x64xf32>
    %cst_82 = arith.constant dense<0.000000e+00> : vector<8x256xf32>
    %376 = tpu.matmul %375, %1, %cst_82 {dimension_numbers = #tpu.dot_dimension_numbers<[1], [0], [0], [1], [0, 0, 1, 1], [], []>} : vector<8x64xf32>, vector<64x256xf32>, vector<8x256xf32> -> vector<8x256xf32>
    %377 = vector.extract_strided_slice %376 {offsets = [0, 0], sizes = [8, 128], strides = [1, 1]} : vector<8x256xf32> to vector<8x128xf32>
    %378 = arith.addf %372, %377 : vector<8x128xf32>
    %379 = vector.extract_strided_slice %376 {offsets = [0, 128], sizes = [8, 128], strides = [1, 1]} : vector<8x256xf32> to vector<8x128xf32>
    %380 = arith.addf %374, %379 : vector<8x128xf32>
    %381 = vector.extract_strided_slice %378 {offsets = [0, 0], sizes = [8, 96], strides = [1, 1]} : vector<8x128xf32> to vector<8x96xf32>
    %382 = arith.negf %381 : vector<8x96xf32>
    %383 = math.exp %382 : vector<8x96xf32>
    %cst_83 = arith.constant 1.000000e+00 : f32
    %384 = vector.broadcast %cst_83 : f32 to vector<8x96xf32>
    %385 = arith.addf %384, %383 : vector<8x96xf32>
    %386 = arith.divf %384, %385 : vector<8x96xf32>
    %387 = vector.extract_strided_slice %386 {offsets = [0, 0], sizes = [8, 32], strides = [1, 1]} : vector<8x96xf32> to vector<8x32xf32>
    %388 = vector.extract_strided_slice %386 {offsets = [0, 32], sizes = [8, 32], strides = [1, 1]} : vector<8x96xf32> to vector<8x32xf32>
    %389 = vector.extract_strided_slice %386 {offsets = [0, 64], sizes = [8, 32], strides = [1, 1]} : vector<8x96xf32> to vector<8x32xf32>
    %390 = vector.extract_strided_slice %378 {offsets = [0, 96], sizes = [8, 32], strides = [1, 1]} : vector<8x128xf32> to vector<8x32xf32>
    %391 = math.tanh %390 : vector<8x32xf32>
    %392 = arith.mulf %388, %343 : vector<8x32xf32>
    %393 = arith.mulf %387, %391 : vector<8x32xf32>
    %394 = arith.addf %392, %393 : vector<8x32xf32>
    %395 = math.tanh %394 : vector<8x32xf32>
    %396 = arith.mulf %389, %395 : vector<8x32xf32>
    %397 = vector.extract_strided_slice %380 {offsets = [0, 0], sizes = [8, 96], strides = [1, 1]} : vector<8x128xf32> to vector<8x96xf32>
    %398 = arith.negf %397 : vector<8x96xf32>
    %399 = math.exp %398 : vector<8x96xf32>
    %cst_84 = arith.constant 1.000000e+00 : f32
    %400 = vector.broadcast %cst_84 : f32 to vector<8x96xf32>
    %401 = arith.addf %400, %399 : vector<8x96xf32>
    %402 = arith.divf %400, %401 : vector<8x96xf32>
    %403 = vector.extract_strided_slice %402 {offsets = [0, 0], sizes = [8, 32], strides = [1, 1]} : vector<8x96xf32> to vector<8x32xf32>
    %404 = vector.extract_strided_slice %402 {offsets = [0, 32], sizes = [8, 32], strides = [1, 1]} : vector<8x96xf32> to vector<8x32xf32>
    %405 = vector.extract_strided_slice %402 {offsets = [0, 64], sizes = [8, 32], strides = [1, 1]} : vector<8x96xf32> to vector<8x32xf32>
    %406 = vector.extract_strided_slice %380 {offsets = [0, 96], sizes = [8, 32], strides = [1, 1]} : vector<8x128xf32> to vector<8x32xf32>
    %407 = math.tanh %406 : vector<8x32xf32>
    %408 = arith.mulf %404, %359 : vector<8x32xf32>
    %409 = arith.mulf %403, %407 : vector<8x32xf32>
    %410 = arith.addf %408, %409 : vector<8x32xf32>
    %411 = math.tanh %410 : vector<8x32xf32>
    %412 = arith.mulf %405, %411 : vector<8x32xf32>
    %413 = arith.index_cast %368 : i32 to index
    %c0_85 = arith.constant 0 : index
    %414 = vector.load %arg10[%413, %c0_85] : memref<64x64xf32, #tpu.memory_space<vmem>>, vector<8x32xf32>
    tpu.vector_store %arg10[%413, %c0_85], %396 {strides = array<i32>} : memref<64x64xf32, #tpu.memory_space<vmem>>, vector<8x32xf32>,
    %415 = arith.index_cast %370 : i32 to index
    %c32_86 = arith.constant 32 : index
    %416 = vector.load %arg10[%415, %c32_86] : memref<64x64xf32, #tpu.memory_space<vmem>>, vector<8x32xf32>
    tpu.vector_store %arg10[%415, %c32_86], %412 {strides = array<i32>} : memref<64x64xf32, #tpu.memory_space<vmem>>, vector<8x32xf32>,
    %c8_i32_87 = arith.constant 8 : i32
    %c0_88 = arith.constant 0 : index
    %c0_89 = arith.constant 0 : index
    %417 = vector.load %arg5[%c0_88, %c0_89] : memref<64x256xf32, #tpu.memory_space<vmem>>, vector<64x256xf32>
    %c0_90 = arith.constant 0 : index
    %c0_91 = arith.constant 0 : index
    %418 = vector.load %arg6[%c0_90, %c0_91] : memref<64x256xf32, #tpu.memory_space<vmem>>, vector<64x256xf32>
    %c0_92 = arith.constant 0 : index
    %c0_93 = arith.constant 0 : index
    %419 = vector.load %arg7[%c0_92, %c0_93] : memref<1x256xf32, #tpu.memory_space<vmem>>, vector<1x256xf32>
    %c0_94 = arith.constant 0 : index
    %c0_95 = arith.constant 0 : index
    %420 = vector.load %arg10[%c0_94, %c0_95] : memref<64x64xf32, #tpu.memory_space<vmem>>, vector<64x64xf32>
    %cst_96 = arith.constant dense<0.000000e+00> : vector<64x256xf32>
    %421 = tpu.matmul %420, %417, %cst_96 {dimension_numbers = #tpu.dot_dimension_numbers<[1], [0], [0], [1], [0, 0, 1, 1], [], []>} : vector<64x64xf32>, vector<64x256xf32>, vector<64x256xf32> -> vector<64x256xf32>
    %422 = vector.broadcast %419 : vector<1x256xf32> to vector<64x256xf32>
    %423 = arith.addf %421, %422 : vector<64x256xf32>
    %c0_97 = arith.constant 0 : index
    %c0_98 = arith.constant 0 : index
    %424 = vector.load %arg9[%c0_97, %c0_98] : memref<64x256xf32, #tpu.memory_space<vmem>>, vector<64x256xf32>
    tpu.vector_store %arg9[%c0_97, %c0_98], %423 {strides = array<i32>} : memref<64x256xf32, #tpu.memory_space<vmem>>, vector<64x256xf32>,
    %cst_99 = arith.constant 0.000000e+00 : f32
    %425 = vector.broadcast %cst_99 : f32 to vector<8x32xf32>
    %cst_100 = arith.constant 0.000000e+00 : f32
    %426 = vector.broadcast %cst_100 : f32 to vector<8x64xf32>
    %c0_i32_101 = arith.constant 0 : i32
    %c7_i32_102 = arith.constant 7 : i32
    %427 = arith.subi %c7_i32_102, %c0_i32_101 : i32
    %c8_i32_103 = arith.constant 8 : i32
    %428 = arith.muli %c0_i32_101, %c8_i32_103 : i32
    %429 = tpu.assume_multiple %428, 8 : i32
    %c8_i32_104 = arith.constant 8 : i32
    %430 = arith.muli %427, %c8_i32_104 : i32
    %431 = tpu.assume_multiple %430, 8 : i32
    %432 = arith.index_cast %429 : i32 to index
    %c0_105 = arith.constant 0 : index
    %433 = vector.load %arg9[%432, %c0_105] : memref<64x256xf32, #tpu.memory_space<vmem>>, vector<8x128xf32>
    %434 = arith.index_cast %431 : i32 to index
    %c128_106 = arith.constant 128 : index
    %435 = vector.load %arg9[%434, %c128_106] : memref<64x256xf32, #tpu.memory_space<vmem>>, vector<8x128xf32>
    %436 = tpu.concatenate %425, %425 in 1 : vector<8x32xf32>, vector<8x32xf32> -> vector<8x64xf32>
    %cst_107 = arith.constant dense<0.000000e+00> : vector<8x256xf32>
    %437 = tpu.matmul %436, %418, %cst_107 {dimension_numbers = #tpu.dot_dimension_numbers<[1], [0], [0], [1], [0, 0, 1, 1], [], []>} : vector<8x64xf32>, vector<64x256xf32>, vector<8x256xf32> -> vector<8x256xf32>
    %438 = vector.extract_strided_slice %437 {offsets = [0, 0], sizes = [8, 128], strides = [1, 1]} : vector<8x256xf32> to vector<8x128xf32>
    %439 = arith.addf %433, %438 : vector<8x128xf32>
    %440 = vector.extract_strided_slice %437 {offsets = [0, 128], sizes = [8, 128], strides = [1, 1]} : vector<8x256xf32> to vector<8x128xf32>
    %441 = arith.addf %435, %440 : vector<8x128xf32>
    %442 = vector.extract_strided_slice %439 {offsets = [0, 0], sizes = [8, 96], strides = [1, 1]} : vector<8x128xf32> to vector<8x96xf32>
    %443 = arith.negf %442 : vector<8x96xf32>
    %444 = math.exp %443 : vector<8x96xf32>
    %cst_108 = arith.constant 1.000000e+00 : f32
    %445 = vector.broadcast %cst_108 : f32 to vector<8x96xf32>
    %446 = arith.addf %445, %444 : vector<8x96xf32>
    %447 = arith.divf %445, %446 : vector<8x96xf32>
    %448 = vector.extract_strided_slice %447 {offsets = [0, 0], sizes = [8, 32], strides = [1, 1]} : vector<8x96xf32> to vector<8x32xf32>
    %449 = vector.extract_strided_slice %447 {offsets = [0, 32], sizes = [8, 32], strides = [1, 1]} : vector<8x96xf32> to vector<8x32xf32>
    %450 = vector.extract_strided_slice %447 {offsets = [0, 64], sizes = [8, 32], strides = [1, 1]} : vector<8x96xf32> to vector<8x32xf32>
    %451 = vector.extract_strided_slice %439 {offsets = [0, 96], sizes = [8, 32], strides = [1, 1]} : vector<8x128xf32> to vector<8x32xf32>
    %452 = math.tanh %451 : vector<8x32xf32>
    %453 = arith.mulf %449, %425 : vector<8x32xf32>
    %454 = arith.mulf %448, %452 : vector<8x32xf32>
    %455 = arith.addf %453, %454 : vector<8x32xf32>
    %456 = math.tanh %455 : vector<8x32xf32>
    %457 = arith.mulf %450, %456 : vector<8x32xf32>
    %458 = vector.extract_strided_slice %441 {offsets = [0, 0], sizes = [8, 96], strides = [1, 1]} : vector<8x128xf32> to vector<8x96xf32>
    %459 = arith.negf %458 : vector<8x96xf32>
    %460 = math.exp %459 : vector<8x96xf32>
    %cst_109 = arith.constant 1.000000e+00 : f32
    %461 = vector.broadcast %cst_109 : f32 to vector<8x96xf32>
    %462 = arith.addf %461, %460 : vector<8x96xf32>
    %463 = arith.divf %461, %462 : vector<8x96xf32>
    %464 = vector.extract_strided_slice %463 {offsets = [0, 0], sizes = [8, 32], strides = [1, 1]} : vector<8x96xf32> to vector<8x32xf32>
    %465 = vector.extract_strided_slice %463 {offsets = [0, 32], sizes = [8, 32], strides = [1, 1]} : vector<8x96xf32> to vector<8x32xf32>
    %466 = vector.extract_strided_slice %463 {offsets = [0, 64], sizes = [8, 32], strides = [1, 1]} : vector<8x96xf32> to vector<8x32xf32>
    %467 = vector.extract_strided_slice %441 {offsets = [0, 96], sizes = [8, 32], strides = [1, 1]} : vector<8x128xf32> to vector<8x32xf32>
    %468 = math.tanh %467 : vector<8x32xf32>
    %469 = arith.mulf %465, %425 : vector<8x32xf32>
    %470 = arith.mulf %464, %468 : vector<8x32xf32>
    %471 = arith.addf %469, %470 : vector<8x32xf32>
    %472 = math.tanh %471 : vector<8x32xf32>
    %473 = arith.mulf %466, %472 : vector<8x32xf32>
    %474 = arith.index_cast %429 : i32 to index
    %c0_110 = arith.constant 0 : index
    %475 = vector.load %arg11[%474, %c0_110] : memref<64x64xf32, #tpu.memory_space<vmem>>, vector<8x32xf32>
    tpu.vector_store %arg11[%474, %c0_110], %457 {strides = array<i32>} : memref<64x64xf32, #tpu.memory_space<vmem>>, vector<8x32xf32>,
    %476 = arith.index_cast %431 : i32 to index
    %c32_111 = arith.constant 32 : index
    %477 = vector.load %arg11[%476, %c32_111] : memref<64x64xf32, #tpu.memory_space<vmem>>, vector<8x32xf32>
    tpu.vector_store %arg11[%476, %c32_111], %473 {strides = array<i32>} : memref<64x64xf32, #tpu.memory_space<vmem>>, vector<8x32xf32>,
    %478 = arith.index_cast %429 : i32 to index
    %c0_112 = arith.constant 0 : index
    %479 = vector.load %arg1[%478, %c0_112] : memref<64x64xf32, #tpu.memory_space<vmem>>, vector<8x64xf32>
    %480 = tpu.concatenate %457, %473 in 1 : vector<8x32xf32>, vector<8x32xf32> -> vector<8x64xf32>
    %481 = arith.mulf %479, %480 : vector<8x64xf32>
    %482 = arith.addf %426, %481 : vector<8x64xf32>
    %c1_i32_113 = arith.constant 1 : i32
    %c7_i32_114 = arith.constant 7 : i32
    %483 = arith.subi %c7_i32_114, %c1_i32_113 : i32
    %c8_i32_115 = arith.constant 8 : i32
    %484 = arith.muli %c1_i32_113, %c8_i32_115 : i32
    %485 = tpu.assume_multiple %484, 8 : i32
    %c8_i32_116 = arith.constant 8 : i32
    %486 = arith.muli %483, %c8_i32_116 : i32
    %487 = tpu.assume_multiple %486, 8 : i32
    %488 = arith.index_cast %485 : i32 to index
    %c0_117 = arith.constant 0 : index
    %489 = vector.load %arg9[%488, %c0_117] : memref<64x256xf32, #tpu.memory_space<vmem>>, vector<8x128xf32>
    %490 = arith.index_cast %487 : i32 to index
    %c128_118 = arith.constant 128 : index
    %491 = vector.load %arg9[%490, %c128_118] : memref<64x256xf32, #tpu.memory_space<vmem>>, vector<8x128xf32>
    %492 = tpu.concatenate %457, %473 in 1 : vector<8x32xf32>, vector<8x32xf32> -> vector<8x64xf32>
    %cst_119 = arith.constant dense<0.000000e+00> : vector<8x256xf32>
    %493 = tpu.matmul %492, %418, %cst_119 {dimension_numbers = #tpu.dot_dimension_numbers<[1], [0], [0], [1], [0, 0, 1, 1], [], []>} : vector<8x64xf32>, vector<64x256xf32>, vector<8x256xf32> -> vector<8x256xf32>
    %494 = vector.extract_strided_slice %493 {offsets = [0, 0], sizes = [8, 128], strides = [1, 1]} : vector<8x256xf32> to vector<8x128xf32>
    %495 = arith.addf %489, %494 : vector<8x128xf32>
    %496 = vector.extract_strided_slice %493 {offsets = [0, 128], sizes = [8, 128], strides = [1, 1]} : vector<8x256xf32> to vector<8x128xf32>
    %497 = arith.addf %491, %496 : vector<8x128xf32>
    %498 = vector.extract_strided_slice %495 {offsets = [0, 0], sizes = [8, 96], strides = [1, 1]} : vector<8x128xf32> to vector<8x96xf32>
    %499 = arith.negf %498 : vector<8x96xf32>
    %500 = math.exp %499 : vector<8x96xf32>
    %cst_120 = arith.constant 1.000000e+00 : f32
    %501 = vector.broadcast %cst_120 : f32 to vector<8x96xf32>
    %502 = arith.addf %501, %500 : vector<8x96xf32>
    %503 = arith.divf %501, %502 : vector<8x96xf32>
    %504 = vector.extract_strided_slice %503 {offsets = [0, 0], sizes = [8, 32], strides = [1, 1]} : vector<8x96xf32> to vector<8x32xf32>
    %505 = vector.extract_strided_slice %503 {offsets = [0, 32], sizes = [8, 32], strides = [1, 1]} : vector<8x96xf32> to vector<8x32xf32>
    %506 = vector.extract_strided_slice %503 {offsets = [0, 64], sizes = [8, 32], strides = [1, 1]} : vector<8x96xf32> to vector<8x32xf32>
    %507 = vector.extract_strided_slice %495 {offsets = [0, 96], sizes = [8, 32], strides = [1, 1]} : vector<8x128xf32> to vector<8x32xf32>
    %508 = math.tanh %507 : vector<8x32xf32>
    %509 = arith.mulf %505, %455 : vector<8x32xf32>
    %510 = arith.mulf %504, %508 : vector<8x32xf32>
    %511 = arith.addf %509, %510 : vector<8x32xf32>
    %512 = math.tanh %511 : vector<8x32xf32>
    %513 = arith.mulf %506, %512 : vector<8x32xf32>
    %514 = vector.extract_strided_slice %497 {offsets = [0, 0], sizes = [8, 96], strides = [1, 1]} : vector<8x128xf32> to vector<8x96xf32>
    %515 = arith.negf %514 : vector<8x96xf32>
    %516 = math.exp %515 : vector<8x96xf32>
    %cst_121 = arith.constant 1.000000e+00 : f32
    %517 = vector.broadcast %cst_121 : f32 to vector<8x96xf32>
    %518 = arith.addf %517, %516 : vector<8x96xf32>
    %519 = arith.divf %517, %518 : vector<8x96xf32>
    %520 = vector.extract_strided_slice %519 {offsets = [0, 0], sizes = [8, 32], strides = [1, 1]} : vector<8x96xf32> to vector<8x32xf32>
    %521 = vector.extract_strided_slice %519 {offsets = [0, 32], sizes = [8, 32], strides = [1, 1]} : vector<8x96xf32> to vector<8x32xf32>
    %522 = vector.extract_strided_slice %519 {offsets = [0, 64], sizes = [8, 32], strides = [1, 1]} : vector<8x96xf32> to vector<8x32xf32>
    %523 = vector.extract_strided_slice %497 {offsets = [0, 96], sizes = [8, 32], strides = [1, 1]} : vector<8x128xf32> to vector<8x32xf32>
    %524 = math.tanh %523 : vector<8x32xf32>
    %525 = arith.mulf %521, %471 : vector<8x32xf32>
    %526 = arith.mulf %520, %524 : vector<8x32xf32>
    %527 = arith.addf %525, %526 : vector<8x32xf32>
    %528 = math.tanh %527 : vector<8x32xf32>
    %529 = arith.mulf %522, %528 : vector<8x32xf32>
    %530 = arith.index_cast %485 : i32 to index
    %c0_122 = arith.constant 0 : index
    %531 = vector.load %arg11[%530, %c0_122] : memref<64x64xf32, #tpu.memory_space<vmem>>, vector<8x32xf32>
    tpu.vector_store %arg11[%530, %c0_122], %513 {strides = array<i32>} : memref<64x64xf32, #tpu.memory_space<vmem>>, vector<8x32xf32>,
    %532 = arith.index_cast %487 : i32 to index
    %c32_123 = arith.constant 32 : index
    %533 = vector.load %arg11[%532, %c32_123] : memref<64x64xf32, #tpu.memory_space<vmem>>, vector<8x32xf32>
    tpu.vector_store %arg11[%532, %c32_123], %529 {strides = array<i32>} : memref<64x64xf32, #tpu.memory_space<vmem>>, vector<8x32xf32>,
    %534 = arith.index_cast %485 : i32 to index
    %c0_124 = arith.constant 0 : index
    %535 = vector.load %arg1[%534, %c0_124] : memref<64x64xf32, #tpu.memory_space<vmem>>, vector<8x64xf32>
    %536 = tpu.concatenate %513, %529 in 1 : vector<8x32xf32>, vector<8x32xf32> -> vector<8x64xf32>
    %537 = arith.mulf %535, %536 : vector<8x64xf32>
    %538 = arith.addf %482, %537 : vector<8x64xf32>
    %c2_i32_125 = arith.constant 2 : i32
    %c7_i32_126 = arith.constant 7 : i32
    %539 = arith.subi %c7_i32_126, %c2_i32_125 : i32
    %c8_i32_127 = arith.constant 8 : i32
    %540 = arith.muli %c2_i32_125, %c8_i32_127 : i32
    %541 = tpu.assume_multiple %540, 8 : i32
    %c8_i32_128 = arith.constant 8 : i32
    %542 = arith.muli %539, %c8_i32_128 : i32
    %543 = tpu.assume_multiple %542, 8 : i32
    %544 = arith.index_cast %541 : i32 to index
    %c0_129 = arith.constant 0 : index
    %545 = vector.load %arg9[%544, %c0_129] : memref<64x256xf32, #tpu.memory_space<vmem>>, vector<8x128xf32>
    %546 = arith.index_cast %543 : i32 to index
    %c128_130 = arith.constant 128 : index
    %547 = vector.load %arg9[%546, %c128_130] : memref<64x256xf32, #tpu.memory_space<vmem>>, vector<8x128xf32>
    %548 = tpu.concatenate %513, %529 in 1 : vector<8x32xf32>, vector<8x32xf32> -> vector<8x64xf32>
    %cst_131 = arith.constant dense<0.000000e+00> : vector<8x256xf32>
    %549 = tpu.matmul %548, %418, %cst_131 {dimension_numbers = #tpu.dot_dimension_numbers<[1], [0], [0], [1], [0, 0, 1, 1], [], []>} : vector<8x64xf32>, vector<64x256xf32>, vector<8x256xf32> -> vector<8x256xf32>
    %550 = vector.extract_strided_slice %549 {offsets = [0, 0], sizes = [8, 128], strides = [1, 1]} : vector<8x256xf32> to vector<8x128xf32>
    %551 = arith.addf %545, %550 : vector<8x128xf32>
    %552 = vector.extract_strided_slice %549 {offsets = [0, 128], sizes = [8, 128], strides = [1, 1]} : vector<8x256xf32> to vector<8x128xf32>
    %553 = arith.addf %547, %552 : vector<8x128xf32>
    %554 = vector.extract_strided_slice %551 {offsets = [0, 0], sizes = [8, 96], strides = [1, 1]} : vector<8x128xf32> to vector<8x96xf32>
    %555 = arith.negf %554 : vector<8x96xf32>
    %556 = math.exp %555 : vector<8x96xf32>
    %cst_132 = arith.constant 1.000000e+00 : f32
    %557 = vector.broadcast %cst_132 : f32 to vector<8x96xf32>
    %558 = arith.addf %557, %556 : vector<8x96xf32>
    %559 = arith.divf %557, %558 : vector<8x96xf32>
    %560 = vector.extract_strided_slice %559 {offsets = [0, 0], sizes = [8, 32], strides = [1, 1]} : vector<8x96xf32> to vector<8x32xf32>
    %561 = vector.extract_strided_slice %559 {offsets = [0, 32], sizes = [8, 32], strides = [1, 1]} : vector<8x96xf32> to vector<8x32xf32>
    %562 = vector.extract_strided_slice %559 {offsets = [0, 64], sizes = [8, 32], strides = [1, 1]} : vector<8x96xf32> to vector<8x32xf32>
    %563 = vector.extract_strided_slice %551 {offsets = [0, 96], sizes = [8, 32], strides = [1, 1]} : vector<8x128xf32> to vector<8x32xf32>
    %564 = math.tanh %563 : vector<8x32xf32>
    %565 = arith.mulf %561, %511 : vector<8x32xf32>
    %566 = arith.mulf %560, %564 : vector<8x32xf32>
    %567 = arith.addf %565, %566 : vector<8x32xf32>
    %568 = math.tanh %567 : vector<8x32xf32>
    %569 = arith.mulf %562, %568 : vector<8x32xf32>
    %570 = vector.extract_strided_slice %553 {offsets = [0, 0], sizes = [8, 96], strides = [1, 1]} : vector<8x128xf32> to vector<8x96xf32>
    %571 = arith.negf %570 : vector<8x96xf32>
    %572 = math.exp %571 : vector<8x96xf32>
    %cst_133 = arith.constant 1.000000e+00 : f32
    %573 = vector.broadcast %cst_133 : f32 to vector<8x96xf32>
    %574 = arith.addf %573, %572 : vector<8x96xf32>
    %575 = arith.divf %573, %574 : vector<8x96xf32>
    %576 = vector.extract_strided_slice %575 {offsets = [0, 0], sizes = [8, 32], strides = [1, 1]} : vector<8x96xf32> to vector<8x32xf32>
    %577 = vector.extract_strided_slice %575 {offsets = [0, 32], sizes = [8, 32], strides = [1, 1]} : vector<8x96xf32> to vector<8x32xf32>
    %578 = vector.extract_strided_slice %575 {offsets = [0, 64], sizes = [8, 32], strides = [1, 1]} : vector<8x96xf32> to vector<8x32xf32>
    %579 = vector.extract_strided_slice %553 {offsets = [0, 96], sizes = [8, 32], strides = [1, 1]} : vector<8x128xf32> to vector<8x32xf32>
    %580 = math.tanh %579 : vector<8x32xf32>
    %581 = arith.mulf %577, %527 : vector<8x32xf32>
    %582 = arith.mulf %576, %580 : vector<8x32xf32>
    %583 = arith.addf %581, %582 : vector<8x32xf32>
    %584 = math.tanh %583 : vector<8x32xf32>
    %585 = arith.mulf %578, %584 : vector<8x32xf32>
    %586 = arith.index_cast %541 : i32 to index
    %c0_134 = arith.constant 0 : index
    %587 = vector.load %arg11[%586, %c0_134] : memref<64x64xf32, #tpu.memory_space<vmem>>, vector<8x32xf32>
    tpu.vector_store %arg11[%586, %c0_134], %569 {strides = array<i32>} : memref<64x64xf32, #tpu.memory_space<vmem>>, vector<8x32xf32>,
    %588 = arith.index_cast %543 : i32 to index
    %c32_135 = arith.constant 32 : index
    %589 = vector.load %arg11[%588, %c32_135] : memref<64x64xf32, #tpu.memory_space<vmem>>, vector<8x32xf32>
    tpu.vector_store %arg11[%588, %c32_135], %585 {strides = array<i32>} : memref<64x64xf32, #tpu.memory_space<vmem>>, vector<8x32xf32>,
    %590 = arith.index_cast %541 : i32 to index
    %c0_136 = arith.constant 0 : index
    %591 = vector.load %arg1[%590, %c0_136] : memref<64x64xf32, #tpu.memory_space<vmem>>, vector<8x64xf32>
    %592 = tpu.concatenate %569, %585 in 1 : vector<8x32xf32>, vector<8x32xf32> -> vector<8x64xf32>
    %593 = arith.mulf %591, %592 : vector<8x64xf32>
    %594 = arith.addf %538, %593 : vector<8x64xf32>
    %c3_i32_137 = arith.constant 3 : i32
    %c7_i32_138 = arith.constant 7 : i32
    %595 = arith.subi %c7_i32_138, %c3_i32_137 : i32
    %c8_i32_139 = arith.constant 8 : i32
    %596 = arith.muli %c3_i32_137, %c8_i32_139 : i32
    %597 = tpu.assume_multiple %596, 8 : i32
    %c8_i32_140 = arith.constant 8 : i32
    %598 = arith.muli %595, %c8_i32_140 : i32
    %599 = tpu.assume_multiple %598, 8 : i32
    %600 = arith.index_cast %597 : i32 to index
    %c0_141 = arith.constant 0 : index
    %601 = vector.load %arg9[%600, %c0_141] : memref<64x256xf32, #tpu.memory_space<vmem>>, vector<8x128xf32>
    %602 = arith.index_cast %599 : i32 to index
    %c128_142 = arith.constant 128 : index
    %603 = vector.load %arg9[%602, %c128_142] : memref<64x256xf32, #tpu.memory_space<vmem>>, vector<8x128xf32>
    %604 = tpu.concatenate %569, %585 in 1 : vector<8x32xf32>, vector<8x32xf32> -> vector<8x64xf32>
    %cst_143 = arith.constant dense<0.000000e+00> : vector<8x256xf32>
    %605 = tpu.matmul %604, %418, %cst_143 {dimension_numbers = #tpu.dot_dimension_numbers<[1], [0], [0], [1], [0, 0, 1, 1], [], []>} : vector<8x64xf32>, vector<64x256xf32>, vector<8x256xf32> -> vector<8x256xf32>
    %606 = vector.extract_strided_slice %605 {offsets = [0, 0], sizes = [8, 128], strides = [1, 1]} : vector<8x256xf32> to vector<8x128xf32>
    %607 = arith.addf %601, %606 : vector<8x128xf32>
    %608 = vector.extract_strided_slice %605 {offsets = [0, 128], sizes = [8, 128], strides = [1, 1]} : vector<8x256xf32> to vector<8x128xf32>
    %609 = arith.addf %603, %608 : vector<8x128xf32>
    %610 = vector.extract_strided_slice %607 {offsets = [0, 0], sizes = [8, 96], strides = [1, 1]} : vector<8x128xf32> to vector<8x96xf32>
    %611 = arith.negf %610 : vector<8x96xf32>
    %612 = math.exp %611 : vector<8x96xf32>
    %cst_144 = arith.constant 1.000000e+00 : f32
    %613 = vector.broadcast %cst_144 : f32 to vector<8x96xf32>
    %614 = arith.addf %613, %612 : vector<8x96xf32>
    %615 = arith.divf %613, %614 : vector<8x96xf32>
    %616 = vector.extract_strided_slice %615 {offsets = [0, 0], sizes = [8, 32], strides = [1, 1]} : vector<8x96xf32> to vector<8x32xf32>
    %617 = vector.extract_strided_slice %615 {offsets = [0, 32], sizes = [8, 32], strides = [1, 1]} : vector<8x96xf32> to vector<8x32xf32>
    %618 = vector.extract_strided_slice %615 {offsets = [0, 64], sizes = [8, 32], strides = [1, 1]} : vector<8x96xf32> to vector<8x32xf32>
    %619 = vector.extract_strided_slice %607 {offsets = [0, 96], sizes = [8, 32], strides = [1, 1]} : vector<8x128xf32> to vector<8x32xf32>
    %620 = math.tanh %619 : vector<8x32xf32>
    %621 = arith.mulf %617, %567 : vector<8x32xf32>
    %622 = arith.mulf %616, %620 : vector<8x32xf32>
    %623 = arith.addf %621, %622 : vector<8x32xf32>
    %624 = math.tanh %623 : vector<8x32xf32>
    %625 = arith.mulf %618, %624 : vector<8x32xf32>
    %626 = vector.extract_strided_slice %609 {offsets = [0, 0], sizes = [8, 96], strides = [1, 1]} : vector<8x128xf32> to vector<8x96xf32>
    %627 = arith.negf %626 : vector<8x96xf32>
    %628 = math.exp %627 : vector<8x96xf32>
    %cst_145 = arith.constant 1.000000e+00 : f32
    %629 = vector.broadcast %cst_145 : f32 to vector<8x96xf32>
    %630 = arith.addf %629, %628 : vector<8x96xf32>
    %631 = arith.divf %629, %630 : vector<8x96xf32>
    %632 = vector.extract_strided_slice %631 {offsets = [0, 0], sizes = [8, 32], strides = [1, 1]} : vector<8x96xf32> to vector<8x32xf32>
    %633 = vector.extract_strided_slice %631 {offsets = [0, 32], sizes = [8, 32], strides = [1, 1]} : vector<8x96xf32> to vector<8x32xf32>
    %634 = vector.extract_strided_slice %631 {offsets = [0, 64], sizes = [8, 32], strides = [1, 1]} : vector<8x96xf32> to vector<8x32xf32>
    %635 = vector.extract_strided_slice %609 {offsets = [0, 96], sizes = [8, 32], strides = [1, 1]} : vector<8x128xf32> to vector<8x32xf32>
    %636 = math.tanh %635 : vector<8x32xf32>
    %637 = arith.mulf %633, %583 : vector<8x32xf32>
    %638 = arith.mulf %632, %636 : vector<8x32xf32>
    %639 = arith.addf %637, %638 : vector<8x32xf32>
    %640 = math.tanh %639 : vector<8x32xf32>
    %641 = arith.mulf %634, %640 : vector<8x32xf32>
    %642 = arith.index_cast %597 : i32 to index
    %c0_146 = arith.constant 0 : index
    %643 = vector.load %arg11[%642, %c0_146] : memref<64x64xf32, #tpu.memory_space<vmem>>, vector<8x32xf32>
    tpu.vector_store %arg11[%642, %c0_146], %625 {strides = array<i32>} : memref<64x64xf32, #tpu.memory_space<vmem>>, vector<8x32xf32>,
    %644 = arith.index_cast %599 : i32 to index
    %c32_147 = arith.constant 32 : index
    %645 = vector.load %arg11[%644, %c32_147] : memref<64x64xf32, #tpu.memory_space<vmem>>, vector<8x32xf32>
    tpu.vector_store %arg11[%644, %c32_147], %641 {strides = array<i32>} : memref<64x64xf32, #tpu.memory_space<vmem>>, vector<8x32xf32>,
    %646 = arith.index_cast %597 : i32 to index
    %c0_148 = arith.constant 0 : index
    %647 = vector.load %arg1[%646, %c0_148] : memref<64x64xf32, #tpu.memory_space<vmem>>, vector<8x64xf32>
    %648 = tpu.concatenate %625, %641 in 1 : vector<8x32xf32>, vector<8x32xf32> -> vector<8x64xf32>
    %649 = arith.mulf %647, %648 : vector<8x64xf32>
    %650 = arith.addf %594, %649 : vector<8x64xf32>
    %c4_i32_149 = arith.constant 4 : i32
    %c7_i32_150 = arith.constant 7 : i32
    %651 = arith.subi %c7_i32_150, %c4_i32_149 : i32
    %c8_i32_151 = arith.constant 8 : i32
    %652 = arith.muli %c4_i32_149, %c8_i32_151 : i32
    %653 = tpu.assume_multiple %652, 8 : i32
    %c8_i32_152 = arith.constant 8 : i32
    %654 = arith.muli %651, %c8_i32_152 : i32
    %655 = tpu.assume_multiple %654, 8 : i32
    %656 = arith.index_cast %653 : i32 to index
    %c0_153 = arith.constant 0 : index
    %657 = vector.load %arg9[%656, %c0_153] : memref<64x256xf32, #tpu.memory_space<vmem>>, vector<8x128xf32>
    %658 = arith.index_cast %655 : i32 to index
    %c128_154 = arith.constant 128 : index
    %659 = vector.load %arg9[%658, %c128_154] : memref<64x256xf32, #tpu.memory_space<vmem>>, vector<8x128xf32>
    %660 = tpu.concatenate %625, %641 in 1 : vector<8x32xf32>, vector<8x32xf32> -> vector<8x64xf32>
    %cst_155 = arith.constant dense<0.000000e+00> : vector<8x256xf32>
    %661 = tpu.matmul %660, %418, %cst_155 {dimension_numbers = #tpu.dot_dimension_numbers<[1], [0], [0], [1], [0, 0, 1, 1], [], []>} : vector<8x64xf32>, vector<64x256xf32>, vector<8x256xf32> -> vector<8x256xf32>
    %662 = vector.extract_strided_slice %661 {offsets = [0, 0], sizes = [8, 128], strides = [1, 1]} : vector<8x256xf32> to vector<8x128xf32>
    %663 = arith.addf %657, %662 : vector<8x128xf32>
    %664 = vector.extract_strided_slice %661 {offsets = [0, 128], sizes = [8, 128], strides = [1, 1]} : vector<8x256xf32> to vector<8x128xf32>
    %665 = arith.addf %659, %664 : vector<8x128xf32>
    %666 = vector.extract_strided_slice %663 {offsets = [0, 0], sizes = [8, 96], strides = [1, 1]} : vector<8x128xf32> to vector<8x96xf32>
    %667 = arith.negf %666 : vector<8x96xf32>
    %668 = math.exp %667 : vector<8x96xf32>
    %cst_156 = arith.constant 1.000000e+00 : f32
    %669 = vector.broadcast %cst_156 : f32 to vector<8x96xf32>
    %670 = arith.addf %669, %668 : vector<8x96xf32>
    %671 = arith.divf %669, %670 : vector<8x96xf32>
    %672 = vector.extract_strided_slice %671 {offsets = [0, 0], sizes = [8, 32], strides = [1, 1]} : vector<8x96xf32> to vector<8x32xf32>
    %673 = vector.extract_strided_slice %671 {offsets = [0, 32], sizes = [8, 32], strides = [1, 1]} : vector<8x96xf32> to vector<8x32xf32>
    %674 = vector.extract_strided_slice %671 {offsets = [0, 64], sizes = [8, 32], strides = [1, 1]} : vector<8x96xf32> to vector<8x32xf32>
    %675 = vector.extract_strided_slice %663 {offsets = [0, 96], sizes = [8, 32], strides = [1, 1]} : vector<8x128xf32> to vector<8x32xf32>
    %676 = math.tanh %675 : vector<8x32xf32>
    %677 = arith.mulf %673, %623 : vector<8x32xf32>
    %678 = arith.mulf %672, %676 : vector<8x32xf32>
    %679 = arith.addf %677, %678 : vector<8x32xf32>
    %680 = math.tanh %679 : vector<8x32xf32>
    %681 = arith.mulf %674, %680 : vector<8x32xf32>
    %682 = vector.extract_strided_slice %665 {offsets = [0, 0], sizes = [8, 96], strides = [1, 1]} : vector<8x128xf32> to vector<8x96xf32>
    %683 = arith.negf %682 : vector<8x96xf32>
    %684 = math.exp %683 : vector<8x96xf32>
    %cst_157 = arith.constant 1.000000e+00 : f32
    %685 = vector.broadcast %cst_157 : f32 to vector<8x96xf32>
    %686 = arith.addf %685, %684 : vector<8x96xf32>
    %687 = arith.divf %685, %686 : vector<8x96xf32>
    %688 = vector.extract_strided_slice %687 {offsets = [0, 0], sizes = [8, 32], strides = [1, 1]} : vector<8x96xf32> to vector<8x32xf32>
    %689 = vector.extract_strided_slice %687 {offsets = [0, 32], sizes = [8, 32], strides = [1, 1]} : vector<8x96xf32> to vector<8x32xf32>
    %690 = vector.extract_strided_slice %687 {offsets = [0, 64], sizes = [8, 32], strides = [1, 1]} : vector<8x96xf32> to vector<8x32xf32>
    %691 = vector.extract_strided_slice %665 {offsets = [0, 96], sizes = [8, 32], strides = [1, 1]} : vector<8x128xf32> to vector<8x32xf32>
    %692 = math.tanh %691 : vector<8x32xf32>
    %693 = arith.mulf %689, %639 : vector<8x32xf32>
    %694 = arith.mulf %688, %692 : vector<8x32xf32>
    %695 = arith.addf %693, %694 : vector<8x32xf32>
    %696 = math.tanh %695 : vector<8x32xf32>
    %697 = arith.mulf %690, %696 : vector<8x32xf32>
    %698 = arith.index_cast %653 : i32 to index
    %c0_158 = arith.constant 0 : index
    %699 = vector.load %arg11[%698, %c0_158] : memref<64x64xf32, #tpu.memory_space<vmem>>, vector<8x32xf32>
    tpu.vector_store %arg11[%698, %c0_158], %681 {strides = array<i32>} : memref<64x64xf32, #tpu.memory_space<vmem>>, vector<8x32xf32>,
    %700 = arith.index_cast %655 : i32 to index
    %c32_159 = arith.constant 32 : index
    %701 = vector.load %arg11[%700, %c32_159] : memref<64x64xf32, #tpu.memory_space<vmem>>, vector<8x32xf32>
    tpu.vector_store %arg11[%700, %c32_159], %697 {strides = array<i32>} : memref<64x64xf32, #tpu.memory_space<vmem>>, vector<8x32xf32>,
    %702 = arith.index_cast %653 : i32 to index
    %c0_160 = arith.constant 0 : index
    %703 = vector.load %arg1[%702, %c0_160] : memref<64x64xf32, #tpu.memory_space<vmem>>, vector<8x64xf32>
    %704 = tpu.concatenate %681, %697 in 1 : vector<8x32xf32>, vector<8x32xf32> -> vector<8x64xf32>
    %705 = arith.mulf %703, %704 : vector<8x64xf32>
    %706 = arith.addf %650, %705 : vector<8x64xf32>
    %c5_i32_161 = arith.constant 5 : i32
    %c7_i32_162 = arith.constant 7 : i32
    %707 = arith.subi %c7_i32_162, %c5_i32_161 : i32
    %c8_i32_163 = arith.constant 8 : i32
    %708 = arith.muli %c5_i32_161, %c8_i32_163 : i32
    %709 = tpu.assume_multiple %708, 8 : i32
    %c8_i32_164 = arith.constant 8 : i32
    %710 = arith.muli %707, %c8_i32_164 : i32
    %711 = tpu.assume_multiple %710, 8 : i32
    %712 = arith.index_cast %709 : i32 to index
    %c0_165 = arith.constant 0 : index
    %713 = vector.load %arg9[%712, %c0_165] : memref<64x256xf32, #tpu.memory_space<vmem>>, vector<8x128xf32>
    %714 = arith.index_cast %711 : i32 to index
    %c128_166 = arith.constant 128 : index
    %715 = vector.load %arg9[%714, %c128_166] : memref<64x256xf32, #tpu.memory_space<vmem>>, vector<8x128xf32>
    %716 = tpu.concatenate %681, %697 in 1 : vector<8x32xf32>, vector<8x32xf32> -> vector<8x64xf32>
    %cst_167 = arith.constant dense<0.000000e+00> : vector<8x256xf32>
    %717 = tpu.matmul %716, %418, %cst_167 {dimension_numbers = #tpu.dot_dimension_numbers<[1], [0], [0], [1], [0, 0, 1, 1], [], []>} : vector<8x64xf32>, vector<64x256xf32>, vector<8x256xf32> -> vector<8x256xf32>
    %718 = vector.extract_strided_slice %717 {offsets = [0, 0], sizes = [8, 128], strides = [1, 1]} : vector<8x256xf32> to vector<8x128xf32>
    %719 = arith.addf %713, %718 : vector<8x128xf32>
    %720 = vector.extract_strided_slice %717 {offsets = [0, 128], sizes = [8, 128], strides = [1, 1]} : vector<8x256xf32> to vector<8x128xf32>
    %721 = arith.addf %715, %720 : vector<8x128xf32>
    %722 = vector.extract_strided_slice %719 {offsets = [0, 0], sizes = [8, 96], strides = [1, 1]} : vector<8x128xf32> to vector<8x96xf32>
    %723 = arith.negf %722 : vector<8x96xf32>
    %724 = math.exp %723 : vector<8x96xf32>
    %cst_168 = arith.constant 1.000000e+00 : f32
    %725 = vector.broadcast %cst_168 : f32 to vector<8x96xf32>
    %726 = arith.addf %725, %724 : vector<8x96xf32>
    %727 = arith.divf %725, %726 : vector<8x96xf32>
    %728 = vector.extract_strided_slice %727 {offsets = [0, 0], sizes = [8, 32], strides = [1, 1]} : vector<8x96xf32> to vector<8x32xf32>
    %729 = vector.extract_strided_slice %727 {offsets = [0, 32], sizes = [8, 32], strides = [1, 1]} : vector<8x96xf32> to vector<8x32xf32>
    %730 = vector.extract_strided_slice %727 {offsets = [0, 64], sizes = [8, 32], strides = [1, 1]} : vector<8x96xf32> to vector<8x32xf32>
    %731 = vector.extract_strided_slice %719 {offsets = [0, 96], sizes = [8, 32], strides = [1, 1]} : vector<8x128xf32> to vector<8x32xf32>
    %732 = math.tanh %731 : vector<8x32xf32>
    %733 = arith.mulf %729, %679 : vector<8x32xf32>
    %734 = arith.mulf %728, %732 : vector<8x32xf32>
    %735 = arith.addf %733, %734 : vector<8x32xf32>
    %736 = math.tanh %735 : vector<8x32xf32>
    %737 = arith.mulf %730, %736 : vector<8x32xf32>
    %738 = vector.extract_strided_slice %721 {offsets = [0, 0], sizes = [8, 96], strides = [1, 1]} : vector<8x128xf32> to vector<8x96xf32>
    %739 = arith.negf %738 : vector<8x96xf32>
    %740 = math.exp %739 : vector<8x96xf32>
    %cst_169 = arith.constant 1.000000e+00 : f32
    %741 = vector.broadcast %cst_169 : f32 to vector<8x96xf32>
    %742 = arith.addf %741, %740 : vector<8x96xf32>
    %743 = arith.divf %741, %742 : vector<8x96xf32>
    %744 = vector.extract_strided_slice %743 {offsets = [0, 0], sizes = [8, 32], strides = [1, 1]} : vector<8x96xf32> to vector<8x32xf32>
    %745 = vector.extract_strided_slice %743 {offsets = [0, 32], sizes = [8, 32], strides = [1, 1]} : vector<8x96xf32> to vector<8x32xf32>
    %746 = vector.extract_strided_slice %743 {offsets = [0, 64], sizes = [8, 32], strides = [1, 1]} : vector<8x96xf32> to vector<8x32xf32>
    %747 = vector.extract_strided_slice %721 {offsets = [0, 96], sizes = [8, 32], strides = [1, 1]} : vector<8x128xf32> to vector<8x32xf32>
    %748 = math.tanh %747 : vector<8x32xf32>
    %749 = arith.mulf %745, %695 : vector<8x32xf32>
    %750 = arith.mulf %744, %748 : vector<8x32xf32>
    %751 = arith.addf %749, %750 : vector<8x32xf32>
    %752 = math.tanh %751 : vector<8x32xf32>
    %753 = arith.mulf %746, %752 : vector<8x32xf32>
    %754 = arith.index_cast %709 : i32 to index
    %c0_170 = arith.constant 0 : index
    %755 = vector.load %arg11[%754, %c0_170] : memref<64x64xf32, #tpu.memory_space<vmem>>, vector<8x32xf32>
    tpu.vector_store %arg11[%754, %c0_170], %737 {strides = array<i32>} : memref<64x64xf32, #tpu.memory_space<vmem>>, vector<8x32xf32>,
    %756 = arith.index_cast %711 : i32 to index
    %c32_171 = arith.constant 32 : index
    %757 = vector.load %arg11[%756, %c32_171] : memref<64x64xf32, #tpu.memory_space<vmem>>, vector<8x32xf32>
    tpu.vector_store %arg11[%756, %c32_171], %753 {strides = array<i32>} : memref<64x64xf32, #tpu.memory_space<vmem>>, vector<8x32xf32>,
    %758 = arith.index_cast %709 : i32 to index
    %c0_172 = arith.constant 0 : index
    %759 = vector.load %arg1[%758, %c0_172] : memref<64x64xf32, #tpu.memory_space<vmem>>, vector<8x64xf32>
    %760 = tpu.concatenate %737, %753 in 1 : vector<8x32xf32>, vector<8x32xf32> -> vector<8x64xf32>
    %761 = arith.mulf %759, %760 : vector<8x64xf32>
    %762 = arith.addf %706, %761 : vector<8x64xf32>
    %c6_i32_173 = arith.constant 6 : i32
    %c7_i32_174 = arith.constant 7 : i32
    %763 = arith.subi %c7_i32_174, %c6_i32_173 : i32
    %c8_i32_175 = arith.constant 8 : i32
    %764 = arith.muli %c6_i32_173, %c8_i32_175 : i32
    %765 = tpu.assume_multiple %764, 8 : i32
    %c8_i32_176 = arith.constant 8 : i32
    %766 = arith.muli %763, %c8_i32_176 : i32
    %767 = tpu.assume_multiple %766, 8 : i32
    %768 = arith.index_cast %765 : i32 to index
    %c0_177 = arith.constant 0 : index
    %769 = vector.load %arg9[%768, %c0_177] : memref<64x256xf32, #tpu.memory_space<vmem>>, vector<8x128xf32>
    %770 = arith.index_cast %767 : i32 to index
    %c128_178 = arith.constant 128 : index
    %771 = vector.load %arg9[%770, %c128_178] : memref<64x256xf32, #tpu.memory_space<vmem>>, vector<8x128xf32>
    %772 = tpu.concatenate %737, %753 in 1 : vector<8x32xf32>, vector<8x32xf32> -> vector<8x64xf32>
    %cst_179 = arith.constant dense<0.000000e+00> : vector<8x256xf32>
    %773 = tpu.matmul %772, %418, %cst_179 {dimension_numbers = #tpu.dot_dimension_numbers<[1], [0], [0], [1], [0, 0, 1, 1], [], []>} : vector<8x64xf32>, vector<64x256xf32>, vector<8x256xf32> -> vector<8x256xf32>
    %774 = vector.extract_strided_slice %773 {offsets = [0, 0], sizes = [8, 128], strides = [1, 1]} : vector<8x256xf32> to vector<8x128xf32>
    %775 = arith.addf %769, %774 : vector<8x128xf32>
    %776 = vector.extract_strided_slice %773 {offsets = [0, 128], sizes = [8, 128], strides = [1, 1]} : vector<8x256xf32> to vector<8x128xf32>
    %777 = arith.addf %771, %776 : vector<8x128xf32>
    %778 = vector.extract_strided_slice %775 {offsets = [0, 0], sizes = [8, 96], strides = [1, 1]} : vector<8x128xf32> to vector<8x96xf32>
    %779 = arith.negf %778 : vector<8x96xf32>
    %780 = math.exp %779 : vector<8x96xf32>
    %cst_180 = arith.constant 1.000000e+00 : f32
    %781 = vector.broadcast %cst_180 : f32 to vector<8x96xf32>
    %782 = arith.addf %781, %780 : vector<8x96xf32>
    %783 = arith.divf %781, %782 : vector<8x96xf32>
    %784 = vector.extract_strided_slice %783 {offsets = [0, 0], sizes = [8, 32], strides = [1, 1]} : vector<8x96xf32> to vector<8x32xf32>
    %785 = vector.extract_strided_slice %783 {offsets = [0, 32], sizes = [8, 32], strides = [1, 1]} : vector<8x96xf32> to vector<8x32xf32>
    %786 = vector.extract_strided_slice %783 {offsets = [0, 64], sizes = [8, 32], strides = [1, 1]} : vector<8x96xf32> to vector<8x32xf32>
    %787 = vector.extract_strided_slice %775 {offsets = [0, 96], sizes = [8, 32], strides = [1, 1]} : vector<8x128xf32> to vector<8x32xf32>
    %788 = math.tanh %787 : vector<8x32xf32>
    %789 = arith.mulf %785, %735 : vector<8x32xf32>
    %790 = arith.mulf %784, %788 : vector<8x32xf32>
    %791 = arith.addf %789, %790 : vector<8x32xf32>
    %792 = math.tanh %791 : vector<8x32xf32>
    %793 = arith.mulf %786, %792 : vector<8x32xf32>
    %794 = vector.extract_strided_slice %777 {offsets = [0, 0], sizes = [8, 96], strides = [1, 1]} : vector<8x128xf32> to vector<8x96xf32>
    %795 = arith.negf %794 : vector<8x96xf32>
    %796 = math.exp %795 : vector<8x96xf32>
    %cst_181 = arith.constant 1.000000e+00 : f32
    %797 = vector.broadcast %cst_181 : f32 to vector<8x96xf32>
    %798 = arith.addf %797, %796 : vector<8x96xf32>
    %799 = arith.divf %797, %798 : vector<8x96xf32>
    %800 = vector.extract_strided_slice %799 {offsets = [0, 0], sizes = [8, 32], strides = [1, 1]} : vector<8x96xf32> to vector<8x32xf32>
    %801 = vector.extract_strided_slice %799 {offsets = [0, 32], sizes = [8, 32], strides = [1, 1]} : vector<8x96xf32> to vector<8x32xf32>
    %802 = vector.extract_strided_slice %799 {offsets = [0, 64], sizes = [8, 32], strides = [1, 1]} : vector<8x96xf32> to vector<8x32xf32>
    %803 = vector.extract_strided_slice %777 {offsets = [0, 96], sizes = [8, 32], strides = [1, 1]} : vector<8x128xf32> to vector<8x32xf32>
    %804 = math.tanh %803 : vector<8x32xf32>
    %805 = arith.mulf %801, %751 : vector<8x32xf32>
    %806 = arith.mulf %800, %804 : vector<8x32xf32>
    %807 = arith.addf %805, %806 : vector<8x32xf32>
    %808 = math.tanh %807 : vector<8x32xf32>
    %809 = arith.mulf %802, %808 : vector<8x32xf32>
    %810 = arith.index_cast %765 : i32 to index
    %c0_182 = arith.constant 0 : index
    %811 = vector.load %arg11[%810, %c0_182] : memref<64x64xf32, #tpu.memory_space<vmem>>, vector<8x32xf32>
    tpu.vector_store %arg11[%810, %c0_182], %793 {strides = array<i32>} : memref<64x64xf32, #tpu.memory_space<vmem>>, vector<8x32xf32>,
    %812 = arith.index_cast %767 : i32 to index
    %c32_183 = arith.constant 32 : index
    %813 = vector.load %arg11[%812, %c32_183] : memref<64x64xf32, #tpu.memory_space<vmem>>, vector<8x32xf32>
    tpu.vector_store %arg11[%812, %c32_183], %809 {strides = array<i32>} : memref<64x64xf32, #tpu.memory_space<vmem>>, vector<8x32xf32>,
    %814 = arith.index_cast %765 : i32 to index
    %c0_184 = arith.constant 0 : index
    %815 = vector.load %arg1[%814, %c0_184] : memref<64x64xf32, #tpu.memory_space<vmem>>, vector<8x64xf32>
    %816 = tpu.concatenate %793, %809 in 1 : vector<8x32xf32>, vector<8x32xf32> -> vector<8x64xf32>
    %817 = arith.mulf %815, %816 : vector<8x64xf32>
    %818 = arith.addf %762, %817 : vector<8x64xf32>
    %c7_i32_185 = arith.constant 7 : i32
    %c7_i32_186 = arith.constant 7 : i32
    %819 = arith.subi %c7_i32_186, %c7_i32_185 : i32
    %c8_i32_187 = arith.constant 8 : i32
    %820 = arith.muli %c7_i32_185, %c8_i32_187 : i32
    %821 = tpu.assume_multiple %820, 8 : i32
    %c8_i32_188 = arith.constant 8 : i32
    %822 = arith.muli %819, %c8_i32_188 : i32
    %823 = tpu.assume_multiple %822, 8 : i32
    %824 = arith.index_cast %821 : i32 to index
    %c0_189 = arith.constant 0 : index
    %825 = vector.load %arg9[%824, %c0_189] : memref<64x256xf32, #tpu.memory_space<vmem>>, vector<8x128xf32>
    %826 = arith.index_cast %823 : i32 to index
    %c128_190 = arith.constant 128 : index
    %827 = vector.load %arg9[%826, %c128_190] : memref<64x256xf32, #tpu.memory_space<vmem>>, vector<8x128xf32>
    %828 = tpu.concatenate %793, %809 in 1 : vector<8x32xf32>, vector<8x32xf32> -> vector<8x64xf32>
    %cst_191 = arith.constant dense<0.000000e+00> : vector<8x256xf32>
    %829 = tpu.matmul %828, %418, %cst_191 {dimension_numbers = #tpu.dot_dimension_numbers<[1], [0], [0], [1], [0, 0, 1, 1], [], []>} : vector<8x64xf32>, vector<64x256xf32>, vector<8x256xf32> -> vector<8x256xf32>
    %830 = vector.extract_strided_slice %829 {offsets = [0, 0], sizes = [8, 128], strides = [1, 1]} : vector<8x256xf32> to vector<8x128xf32>
    %831 = arith.addf %825, %830 : vector<8x128xf32>
    %832 = vector.extract_strided_slice %829 {offsets = [0, 128], sizes = [8, 128], strides = [1, 1]} : vector<8x256xf32> to vector<8x128xf32>
    %833 = arith.addf %827, %832 : vector<8x128xf32>
    %834 = vector.extract_strided_slice %831 {offsets = [0, 0], sizes = [8, 96], strides = [1, 1]} : vector<8x128xf32> to vector<8x96xf32>
    %835 = arith.negf %834 : vector<8x96xf32>
    %836 = math.exp %835 : vector<8x96xf32>
    %cst_192 = arith.constant 1.000000e+00 : f32
    %837 = vector.broadcast %cst_192 : f32 to vector<8x96xf32>
    %838 = arith.addf %837, %836 : vector<8x96xf32>
    %839 = arith.divf %837, %838 : vector<8x96xf32>
    %840 = vector.extract_strided_slice %839 {offsets = [0, 0], sizes = [8, 32], strides = [1, 1]} : vector<8x96xf32> to vector<8x32xf32>
    %841 = vector.extract_strided_slice %839 {offsets = [0, 32], sizes = [8, 32], strides = [1, 1]} : vector<8x96xf32> to vector<8x32xf32>
    %842 = vector.extract_strided_slice %839 {offsets = [0, 64], sizes = [8, 32], strides = [1, 1]} : vector<8x96xf32> to vector<8x32xf32>
    %843 = vector.extract_strided_slice %831 {offsets = [0, 96], sizes = [8, 32], strides = [1, 1]} : vector<8x128xf32> to vector<8x32xf32>
    %844 = math.tanh %843 : vector<8x32xf32>
    %845 = arith.mulf %841, %791 : vector<8x32xf32>
    %846 = arith.mulf %840, %844 : vector<8x32xf32>
    %847 = arith.addf %845, %846 : vector<8x32xf32>
    %848 = math.tanh %847 : vector<8x32xf32>
    %849 = arith.mulf %842, %848 : vector<8x32xf32>
    %850 = vector.extract_strided_slice %833 {offsets = [0, 0], sizes = [8, 96], strides = [1, 1]} : vector<8x128xf32> to vector<8x96xf32>
    %851 = arith.negf %850 : vector<8x96xf32>
    %852 = math.exp %851 : vector<8x96xf32>
    %cst_193 = arith.constant 1.000000e+00 : f32
    %853 = vector.broadcast %cst_193 : f32 to vector<8x96xf32>
    %854 = arith.addf %853, %852 : vector<8x96xf32>
    %855 = arith.divf %853, %854 : vector<8x96xf32>
    %856 = vector.extract_strided_slice %855 {offsets = [0, 0], sizes = [8, 32], strides = [1, 1]} : vector<8x96xf32> to vector<8x32xf32>
    %857 = vector.extract_strided_slice %855 {offsets = [0, 32], sizes = [8, 32], strides = [1, 1]} : vector<8x96xf32> to vector<8x32xf32>
    %858 = vector.extract_strided_slice %855 {offsets = [0, 64], sizes = [8, 32], strides = [1, 1]} : vector<8x96xf32> to vector<8x32xf32>
    %859 = vector.extract_strided_slice %833 {offsets = [0, 96], sizes = [8, 32], strides = [1, 1]} : vector<8x128xf32> to vector<8x32xf32>
    %860 = math.tanh %859 : vector<8x32xf32>
    %861 = arith.mulf %857, %807 : vector<8x32xf32>
    %862 = arith.mulf %856, %860 : vector<8x32xf32>
    %863 = arith.addf %861, %862 : vector<8x32xf32>
    %864 = math.tanh %863 : vector<8x32xf32>
    %865 = arith.mulf %858, %864 : vector<8x32xf32>
    %866 = arith.index_cast %821 : i32 to index
    %c0_194 = arith.constant 0 : index
    %867 = vector.load %arg11[%866, %c0_194] : memref<64x64xf32, #tpu.memory_space<vmem>>, vector<8x32xf32>
    tpu.vector_store %arg11[%866, %c0_194], %849 {strides = array<i32>} : memref<64x64xf32, #tpu.memory_space<vmem>>, vector<8x32xf32>,
    %868 = arith.index_cast %823 : i32 to index
    %c32_195 = arith.constant 32 : index
    %869 = vector.load %arg11[%868, %c32_195] : memref<64x64xf32, #tpu.memory_space<vmem>>, vector<8x32xf32>
    tpu.vector_store %arg11[%868, %c32_195], %865 {strides = array<i32>} : memref<64x64xf32, #tpu.memory_space<vmem>>, vector<8x32xf32>,
    %870 = arith.index_cast %821 : i32 to index
    %c0_196 = arith.constant 0 : index
    %871 = vector.load %arg1[%870, %c0_196] : memref<64x64xf32, #tpu.memory_space<vmem>>, vector<8x64xf32>
    %872 = tpu.concatenate %849, %865 in 1 : vector<8x32xf32>, vector<8x32xf32> -> vector<8x64xf32>
    %873 = arith.mulf %871, %872 : vector<8x64xf32>
    %874 = arith.addf %818, %873 : vector<8x64xf32>
    %c8_i32_197 = arith.constant 8 : i32
    %c0_198 = arith.constant 0 : index
    %c0_199 = arith.constant 0 : index
    %875 = vector.load %arg8[%c0_198, %c0_199] : memref<8x64xf32, #tpu.memory_space<vmem>>, vector<8x64xf32>
    tpu.vector_store %arg8[%c0_198, %c0_199], %874 {strides = array<i32>} : memref<8x64xf32, #tpu.memory_space<vmem>>, vector<8x64xf32>,
    return
  }
}

</mosaic_0001>

<llo_original>
// kernel: bilstm_forward.1
$region0: #{bilstm_forward.1}
  #allocation0 [shape = 'u32[]', space=smem, size = 0x4, offset = 0x4, fixed_abs, tag = 'smem constant byte address 0x4 - core index']
  #allocation1 [shape = 'u32[144,128]{1,0:T(1,128)}', space=vmem, size = 0x12000, scoped, tag = 'internal scratch']
  #allocation2 [shape = 'f32[64,256]{1,0:T(8,128)}', space=vmem, size = 0x10000, scoped, tag = 'scratch operand']
  #allocation3 [shape = 'f32[64,64]{1,0:T(8,128)}', space=vmem, size = 0x8000, scoped, tag = 'scratch operand']
  #allocation4 [shape = 'f32[64,64]{1,0:T(8,128)}', space=vmem, size = 0x8000, scoped, tag = 'scratch operand']
  %s0 = inlined_call_operand.vmem [shape: f32[64,16], index: 0, kind: input, shape index: {}]
  %s1 = inlined_call_operand.vmem [shape: f32[64,64], index: 1, kind: input, shape index: {}]
  %s2 = inlined_call_operand.vmem [shape: f32[16,256], index: 2, kind: input, shape index: {}]
  %s3 = inlined_call_operand.vmem [shape: f32[64,256], index: 3, kind: input, shape index: {}]
  %s4 = inlined_call_operand.vmem [shape: f32[1,256], index: 4, kind: input, shape index: {}]
  %s5 = inlined_call_operand.vmem [shape: f32[64,256], index: 5, kind: input, shape index: {}]
  %s6 = inlined_call_operand.vmem [shape: f32[64,256], index: 6, kind: input, shape index: {}]
  %s7 = inlined_call_operand.vmem [shape: f32[1,256], index: 7, kind: input, shape index: {}]
  %s8 = inlined_call_operand.vmem [shape: f32[8,64], index: 8, kind: output, shape index: {}]
  %s9 = sld [smem:[#allocation0]]
  $region42: #{bilstm_forward.1} parent=0
    _
  %s11 = ssub.s32 1, %s9
  %s12 = scalar_select 0, %s11, %s9
  // Predicated region
  $region2: #{bilstm_forward.1} parent=0 // pred_check
    _
  $region3: #{bilstm_forward.1} parent=0 // pred_check_branch
    %14 = sbr.rel (0) target = $region5
  $region4: #{bilstm_forward.1} parent=0 // pred_region
    _
  $region5: #{bilstm_forward.1} parent=0 // pred_fallthru
    _
  // Predicated region
  $region6: #{bilstm_forward.1} parent=0 // pred_check
    _
  $region7: #{bilstm_forward.1} parent=0 // pred_check_branch
    %16 = sbr.rel (0) target = $region9
  $region8: #{bilstm_forward.1} parent=0 // pred_region
    _
  $region9: #{bilstm_forward.1} parent=0 // pred_fallthru
    _
  // Predicated region
  $region10: #{bilstm_forward.1} parent=0 // pred_check
    _
  $region11: #{bilstm_forward.1} parent=0 // pred_check_branch
    %18 = sbr.rel (0) target = $region13
  $region12: #{bilstm_forward.1} parent=0 // pred_region
    _
  $region13: #{bilstm_forward.1} parent=0 // pred_fallthru
    _
  // Predicated region
  $region14: #{bilstm_forward.1} parent=0 // pred_check
    _
  $region15: #{bilstm_forward.1} parent=0 // pred_check_branch
    %20 = sbr.rel (0) target = $region17
  $region16: #{bilstm_forward.1} parent=0 // pred_region
    _
  $region17: #{bilstm_forward.1} parent=0 // pred_fallthru
    _
  // Predicated region
  $region18: #{bilstm_forward.1} parent=0 // pred_check
    _
  $region19: #{bilstm_forward.1} parent=0 // pred_check_branch
    %22 = sbr.rel (0) target = $region21
  $region20: #{bilstm_forward.1} parent=0 // pred_region
    _
  $region21: #{bilstm_forward.1} parent=0 // pred_fallthru
    _
  // Predicated region
  $region22: #{bilstm_forward.1} parent=0 // pred_check
    _
  $region23: #{bilstm_forward.1} parent=0 // pred_check_branch
    %24 = sbr.rel (0) target = $region25
  $region24: #{bilstm_forward.1} parent=0 // pred_region
    _
  $region25: #{bilstm_forward.1} parent=0 // pred_fallthru
    _
  // Predicated region
  $region26: #{bilstm_forward.1} parent=0 // pred_check
    _
  $region27: #{bilstm_forward.1} parent=0 // pred_check_branch
    %26 = sbr.rel (0) target = $region29
  $region28: #{bilstm_forward.1} parent=0 // pred_region
    _
  $region29: #{bilstm_forward.1} parent=0 // pred_fallthru
    _
  // Predicated region
  $region30: #{bilstm_forward.1} parent=0 // pred_check
    _
  $region31: #{bilstm_forward.1} parent=0 // pred_check_branch
    %28 = sbr.rel (0) target = $region33
  $region32: #{bilstm_forward.1} parent=0 // pred_region
    _
  $region33: #{bilstm_forward.1} parent=0 // pred_fallthru
    _
  %v29 = vld [vmem:[%s2] sm:$0xff]
  %v30 = vld [vmem:[%s2 + $0x8] sm:$0xff]
  %v31 = vld [vmem:[%s2 + $0x10] sm:$0xff]
  %v32 = vld [vmem:[%s2 + $0x18] sm:$0xff]
  %v33 = vld [vmem:[%s3] sm:$0xff]
  %v34 = vld [vmem:[%s3 + $0x8] sm:$0xff]
  %v35 = vld [vmem:[%s3 + $0x10] sm:$0xff]
  %v36 = vld [vmem:[%s3 + $0x18] sm:$0xff]
  %v37 = vld [vmem:[%s3 + $0x20] sm:$0xff]
  %v38 = vld [vmem:[%s3 + $0x28] sm:$0xff]
  %v39 = vld [vmem:[%s3 + $0x30] sm:$0xff]
  %v40 = vld [vmem:[%s3 + $0x38] sm:$0xff]
  %v41 = vld [vmem:[%s3 + $0x40] sm:$0xff]
  %v42 = vld [vmem:[%s3 + $0x48] sm:$0xff]
  %v43 = vld [vmem:[%s3 + $0x50] sm:$0xff]
  %v44 = vld [vmem:[%s3 + $0x58] sm:$0xff]
  %v45 = vld [vmem:[%s3 + $0x60] sm:$0xff]
  %v46 = vld [vmem:[%s3 + $0x68] sm:$0xff]
  %v47 = vld [vmem:[%s3 + $0x70] sm:$0xff]
  %v48 = vld [vmem:[%s3 + $0x78] sm:$0xff]
  %v49 = vld [vmem:[%s4] sm:$0x3]
  %v50 = vld [vmem:[%s0] sm:$0xff]
  %v51 = vld [vmem:[%s0 + $0x8] sm:$0xff]
  %v52 = vld [vmem:[%s0 + $0x10] sm:$0xff]
  %v53 = vld [vmem:[%s0 + $0x18] sm:$0xff]
  %v54 = vld [vmem:[%s0 + $0x20] sm:$0xff]
  %v55 = vld [vmem:[%s0 + $0x28] sm:$0xff]
  %v56 = vld [vmem:[%s0 + $0x30] sm:$0xff]
  %v57 = vld [vmem:[%s0 + $0x38] sm:$0xff]
  %v59 = vlaneseq
  %v60 = vshrl.u32 %v59, 7
  %v61 = vsub.s32 0, %v60
  %v62 = vrot.slane %v49, %v61
  %v63 = vlaneseq
  %v64 = vshrl.u32 %v63, 7
  %v65 = vsub.s32 1, %v64
  %v66 = vrot.slane %v49, %v65
  %vm69 = vcmask 130048
  %v71 = vsel %vm69, %v50, 0
  %v74 = vsel %vm69, %v51, 0
  %v77 = vsel %vm69, %v52, 0
  %v80 = vsel %vm69, %v53, 0
  %v83 = vsel %vm69, %v54, 0
  %v86 = vsel %vm69, %v55, 0
  %v89 = vsel %vm69, %v56, 0
  %v92 = vsel %vm69, %v57, 0
  %94 = vmatprep.subr.mxu0 %v30
  %95 = vmatpush1.msra.mxu0 %v29
  %96 = vmatprep.subr.mxu0 %v32
  %97 = vmatpush1.msra.mxu0 %v31
  %98 = vmatprep.subr.mxu0 0.0
  %99 = vmatpush1.msra.mxu0 0.0
  %100 = vmatprep.subr.mxu0 0.0
  %101 = vmatpush1.msra.mxu0 0.0
  %102 = vmatprep.subr.mxu0 0.0
  %103 = vmatpush1.msra.mxu0 0.0
  %104 = vmatprep.subr.mxu0 0.0
  %105 = vmatpush1.msra.mxu0 0.0
  %106 = vmatprep.subr.mxu0 0.0
  %107 = vmatpush1.msra.mxu0 0.0
  %108 = vmatprep.subr.mxu0 0.0
  %109 = vmatpush1.msra.mxu0 0.0
  %110 = vmatprep.subr.mxu0 0.0
  %111 = vmatpush1.msra.mxu0 0.0
  %112 = vmatprep.subr.mxu0 0.0
  %113 = vmatpush1.msra.mxu0 0.0
  %114 = vmatprep.subr.mxu0 0.0
  %115 = vmatpush1.msra.mxu0 0.0
  %116 = vmatprep.subr.mxu0 0.0
  %117 = vmatpush1.msra.mxu0 0.0
  %118 = vmatprep.subr.mxu0 0.0
  %119 = vmatpush1.msra.mxu0 0.0
  %120 = vmatprep.subr.mxu0 0.0
  %121 = vmatpush1.msra.mxu0 0.0
  %122 = vmatprep.subr.mxu0 0.0
  %123 = vmatpush1.msra.mxu0 0.0
  %124 = vmatprep.subr.mxu0 0.0
  %125 = vmatpush1.msra.mxu0 0.0
  %126 = vmatprep.subr.mxu0 0.0
  %127 = vmatpush1.msra.mxu0 0.0
  %128 = vmatprep.subr.mxu0 0.0
  %129 = vmatpush1.msra.mxu0 0.0
  %130 = vmatprep.subr.mxu0 0.0
  %131 = vmatpush1.msra.mxu0 0.0
  %132 = vmatprep.subr.mxu0 0.0
  %133 = vmatpush1.msra.mxu0 0.0
  %134 = vmatprep.subr.mxu0 0.0
  %135 = vmatpush1.msra.mxu0 0.0
  %136 = vmatprep.subr.mxu0 0.0
  %137 = vmatpush1.msra.mxu0 0.0
  %138 = vmatprep.subr.mxu0 0.0
  %139 = vmatpush1.msra.mxu0 0.0
  %140 = vmatprep.subr.mxu0 0.0
  %141 = vmatpush1.msra.mxu0 0.0
  %142 = vmatprep.subr.mxu0 0.0
  %143 = vmatpush1.msra.mxu0 0.0
  %144 = vmatprep.subr.mxu0 0.0
  %145 = vmatpush1.msra.mxu0 0.0
  %146 = vmatprep.subr.mxu0 0.0
  %147 = vmatpush1.msra.mxu0 0.0
  %148 = vmatprep.subr.mxu0 0.0
  %149 = vmatpush1.msra.mxu0 0.0
  %150 = vmatprep.subr.mxu0 0.0
  %151 = vmatpush1.msra.mxu0 0.0
  %152 = vmatprep.subr.mxu0 0.0
  %153 = vmatpush1.msra.mxu0 0.0
  %154 = vmatprep.subr.mxu0 0.0
  %155 = vmatpush1.msra.mxu0 0.0
  %156 = vmatprep.subr.mxu0 0.0
  %157 = vmatpush1.msra.mxu0 0.0
  %158 = vmatprep.mubr.f32.mxu0 0.0
  %159 = vmatmul.mubr.f32.gmra.mrb[0].mxu0 %v71
  %v160 = vpop.f32.mrb[0].mxu0
  %v161 = vadd.f32 %v62, %v160
  %v162 = vpop.f32.mrb[0].mxu0
  %v163 = vadd.f32 %v66, %v162
  %164 = vmatprep.mubr.f32.mxu0 0.0
  %165 = vmatmul.mubr.f32.gmra.mrb[0].mxu0 %v74
  %v166 = vpop.f32.mrb[0].mxu0
  %v167 = vadd.f32 %v62, %v166
  %v168 = vpop.f32.mrb[0].mxu0
  %v169 = vadd.f32 %v66, %v168
  %170 = vmatprep.mubr.f32.mxu0 0.0
  %171 = vmatmul.mubr.f32.gmra.mrb[0].mxu0 %v77
  %v172 = vpop.f32.mrb[0].mxu0
  %v173 = vadd.f32 %v62, %v172
  %v174 = vpop.f32.mrb[0].mxu0
  %v175 = vadd.f32 %v66, %v174
  %176 = vmatprep.mubr.f32.mxu0 0.0
  %177 = vmatmul.mubr.f32.gmra.mrb[0].mxu0 %v80
  %v178 = vpop.f32.mrb[0].mxu0
  %v179 = vadd.f32 %v62, %v178
  %v180 = vpop.f32.mrb[0].mxu0
  %v181 = vadd.f32 %v66, %v180
  %182 = vmatprep.mubr.f32.mxu0 0.0
  %183 = vmatmul.mubr.f32.gmra.mrb[0].mxu0 %v83
  %v184 = vpop.f32.mrb[0].mxu0
  %v185 = vadd.f32 %v62, %v184
  %v186 = vpop.f32.mrb[0].mxu0
  %v187 = vadd.f32 %v66, %v186
  %188 = vmatprep.mubr.f32.mxu0 0.0
  %189 = vmatmul.mubr.f32.gmra.mrb[0].mxu0 %v86
  %v190 = vpop.f32.mrb[0].mxu0
  %v191 = vadd.f32 %v62, %v190
  %v192 = vpop.f32.mrb[0].mxu0
  %v193 = vadd.f32 %v66, %v192
  %194 = vmatprep.mubr.f32.mxu0 0.0
  %195 = vmatmul.mubr.f32.gmra.mrb[0].mxu0 %v89
  %v196 = vpop.f32.mrb[0].mxu0
  %v197 = vadd.f32 %v62, %v196
  %v198 = vpop.f32.mrb[0].mxu0
  %v199 = vadd.f32 %v66, %v198
  %200 = vmatprep.mubr.f32.mxu0 0.0
  %201 = vmatmul.mubr.f32.gmra.mrb[0].mxu0 %v92
  %v202 = vpop.f32.mrb[0].mxu0
  %v203 = vadd.f32 %v62, %v202
  %v204 = vpop.f32.mrb[0].mxu0
  %v205 = vadd.f32 %v66, %v204
  %206 = vdwg.mxu0
  %207 = vst [vmem:[#allocation2] sm:$0xff] %v161
  %208 = vst [vmem:[#allocation2 + $0x8] sm:$0xff] %v163
  %209 = vst [vmem:[#allocation2 + $0x10] sm:$0xff] %v167
  %210 = vst [vmem:[#allocation2 + $0x18] sm:$0xff] %v169
  %211 = vst [vmem:[#allocation2 + $0x20] sm:$0xff] %v173
  %212 = vst [vmem:[#allocation2 + $0x28] sm:$0xff] %v175
  %213 = vst [vmem:[#allocation2 + $0x30] sm:$0xff] %v179
  %214 = vst [vmem:[#allocation2 + $0x38] sm:$0xff] %v181
  %215 = vst [vmem:[#allocation2 + $0x40] sm:$0xff] %v185
  %216 = vst [vmem:[#allocation2 + $0x48] sm:$0xff] %v187
  %217 = vst [vmem:[#allocation2 + $0x50] sm:$0xff] %v191
  %218 = vst [vmem:[#allocation2 + $0x58] sm:$0xff] %v193
  %219 = vst [vmem:[#allocation2 + $0x60] sm:$0xff] %v197
  %220 = vst [vmem:[#allocation2 + $0x68] sm:$0xff] %v199
  %221 = vst [vmem:[#allocation2 + $0x70] sm:$0xff] %v203
  %222 = vst [vmem:[#allocation2 + $0x78] sm:$0xff] %v205
  %s223 = smul.u32 0, 2
  %s224 = smul.addr %s223, 8
  %s225 = scalar_lea.vmem [#allocation2], %s224
  %v226 = vld [vmem:[%s225] sm:$0xff]
  %s227 = smul.u32 7, 2
  %s228 = smul.addr %s227, 8
  %s229 = scalar_lea.vmem [#allocation2], %s228
  %v230 = vld [vmem:[%s229 + $0x8] sm:$0xff]
  %vm231 = vcmask 523264
  %v233 = vsel %vm231, 0.0, 0
  %235 = vmatprep.subr.mxu0 %v34
  %236 = vmatpush1.msra.mxu0 %v33
  %237 = vmatprep.subr.mxu0 %v36
  %238 = vmatpush1.msra.mxu0 %v35
  %239 = vmatprep.subr.mxu0 %v38
  %240 = vmatpush1.msra.mxu0 %v37
  %241 = vmatprep.subr.mxu0 %v40
  %242 = vmatpush1.msra.mxu0 %v39
  %243 = vmatprep.subr.mxu0 %v42
  %244 = vmatpush1.msra.mxu0 %v41
  %245 = vmatprep.subr.mxu0 %v44
  %246 = vmatpush1.msra.mxu0 %v43
  %247 = vmatprep.subr.mxu0 %v46
  %248 = vmatpush1.msra.mxu0 %v45
  %249 = vmatprep.subr.mxu0 %v48
  %250 = vmatpush1.msra.mxu0 %v47
  %251 = vmatprep.subr.mxu0 0.0
  %252 = vmatpush1.msra.mxu0 0.0
  %253 = vmatprep.subr.mxu0 0.0
  %254 = vmatpush1.msra.mxu0 0.0
  %255 = vmatprep.subr.mxu0 0.0
  %256 = vmatpush1.msra.mxu0 0.0
  %257 = vmatprep.subr.mxu0 0.0
  %258 = vmatpush1.msra.mxu0 0.0
  %259 = vmatprep.subr.mxu0 0.0
  %260 = vmatpush1.msra.mxu0 0.0
  %261 = vmatprep.subr.mxu0 0.0
  %262 = vmatpush1.msra.mxu0 0.0
  %263 = vmatprep.subr.mxu0 0.0
  %264 = vmatpush1.msra.mxu0 0.0
  %265 = vmatprep.subr.mxu0 0.0
  %266 = vmatpush1.msra.mxu0 0.0
  %267 = vmatprep.subr.mxu0 0.0
  %268 = vmatpush1.msra.mxu0 0.0
  %269 = vmatprep.subr.mxu0 0.0
  %270 = vmatpush1.msra.mxu0 0.0
  %271 = vmatprep.subr.mxu0 0.0
  %272 = vmatpush1.msra.mxu0 0.0
  %273 = vmatprep.subr.mxu0 0.0
  %274 = vmatpush1.msra.mxu0 0.0
  %275 = vmatprep.subr.mxu0 0.0
  %276 = vmatpush1.msra.mxu0 0.0
  %277 = vmatprep.subr.mxu0 0.0
  %278 = vmatpush1.msra.mxu0 0.0
  %279 = vmatprep.subr.mxu0 0.0
  %280 = vmatpush1.msra.mxu0 0.0
  %281 = vmatprep.subr.mxu0 0.0
  %282 = vmatpush1.msra.mxu0 0.0
  %283 = vmatprep.subr.mxu0 0.0
  %284 = vmatpush1.msra.mxu0 0.0
  %285 = vmatprep.subr.mxu0 0.0
  %286 = vmatpush1.msra.mxu0 0.0
  %287 = vmatprep.subr.mxu0 0.0
  %288 = vmatpush1.msra.mxu0 0.0
  %289 = vmatprep.subr.mxu0 0.0
  %290 = vmatpush1.msra.mxu0 0.0
  %291 = vmatprep.subr.mxu0 0.0
  %292 = vmatpush1.msra.mxu0 0.0
  %293 = vmatprep.subr.mxu0 0.0
  %294 = vmatpush1.msra.mxu0 0.0
  %295 = vmatprep.subr.mxu0 0.0
  %296 = vmatpush1.msra.mxu0 0.0
  %297 = vmatprep.subr.mxu0 0.0
  %298 = vmatpush1.msra.mxu0 0.0
  %299 = vmatprep.mubr.f32.mxu0 0.0
  %300 = vmatmul.mubr.f32.gmra.mrb[0].mxu0 %v233
  %v301 = vpop.f32.mrb[0].mxu0
  %v302 = vadd.f32 0.0, %v301
  %v303 = vpop.f32.mrb[0].mxu0
  %v304 = vadd.f32 0.0, %v303
  %305 = vdwg.mxu0
  %v306 = vadd.f32 %v226, %v302
  %v307 = vadd.f32 %v230, %v304
  %v308 = vxor.u32 %v306, 2147483648
  %v309 = vmul.f32 %v308, 1.442695
  %v310 = vpow.pop %v309
  %v311 = vadd.f32 %v310, 1.0
  %v312 = vrcp.pop %v311
  %v313 = vmul.f32 1.0, %v312
  %v314 = vtanh.pop %v306
  %v315 = vmul.f32 %v313, 0.0
  %317 = vrot.lane.b32.xlu0 %v314, 32
  %v318 = vpop.permute.xlu0 %317
  %v320 = vmul.f32 %v313, %v318
  %322 = vrot.lane.b32.xlu0 %v320, 32
  %v323 = vpop.permute.xlu0 %322
  %v325 = vadd.f32 %v315, %v323
  %v326 = vtanh.pop %v325
  %328 = vrot.lane.b32.xlu0 %v326, 32
  %v329 = vpop.permute.xlu0 %328
  %v331 = vmul.f32 %v313, %v329
  %v332 = vxor.u32 %v307, 2147483648
  %v333 = vmul.f32 %v332, 1.442695
  %v334 = vpow.pop %v333
  %v335 = vadd.f32 %v334, 1.0
  %v336 = vrcp.pop %v335
  %v337 = vmul.f32 1.0, %v336
  %v338 = vtanh.pop %v307
  %v339 = vmul.f32 %v337, 0.0
  %341 = vrot.lane.b32.xlu0 %v338, 32
  %v342 = vpop.permute.xlu0 %341
  %v344 = vmul.f32 %v337, %v342
  %346 = vrot.lane.b32.xlu0 %v344, 32
  %v347 = vpop.permute.xlu0 %346
  %v349 = vadd.f32 %v339, %v347
  %v350 = vtanh.pop %v349
  %352 = vrot.lane.b32.xlu0 %v350, 32
  %v353 = vpop.permute.xlu0 %352
  %v355 = vmul.f32 %v337, %v353
  %357 = vrot.lane.b32.xlu0 %v331, 64
  %v358 = vpop.permute.xlu0 %357
  %vm360 = vcmask 261120
  %361 = vst.msk [vmem:[#allocation3] sm:$0xff] %vm360, %v358
  %363 = vrot.lane.b32.xlu0 %v355, 96
  %v364 = vpop.permute.xlu0 %363
  %s366 = scalar_lea.vmem [#allocation3], 56
  %vm367 = vcmask 523520
  %368 = vst.msk [vmem:[%s366] sm:$0xff] %vm367, %v364
  %s369 = smul.u32 1, 2
  %s370 = smul.addr %s369, 8
  %s371 = scalar_lea.vmem [#allocation2], %s370
  %v372 = vld [vmem:[%s371] sm:$0xff]
  %s373 = smul.u32 6, 2
  %s374 = smul.addr %s373, 8
  %s375 = scalar_lea.vmem [#allocation2], %s374
  %v376 = vld [vmem:[%s375 + $0x8] sm:$0xff]
  %v377 = vsel %vm360, %v358, %v364
  %v379 = vsel %vm231, %v377, 0
  %381 = vmatprep.subr.mxu0 %v34
  %382 = vmatpush1.msra.mxu0 %v33
  %383 = vmatprep.subr.mxu0 %v36
  %384 = vmatpush1.msra.mxu0 %v35
  %385 = vmatprep.subr.mxu0 %v38
  %386 = vmatpush1.msra.mxu0 %v37
  %387 = vmatprep.subr.mxu0 %v40
  %388 = vmatpush1.msra.mxu0 %v39
  %389 = vmatprep.subr.mxu0 %v42
  %390 = vmatpush1.msra.mxu0 %v41
  %391 = vmatprep.subr.mxu0 %v44
  %392 = vmatpush1.msra.mxu0 %v43
  %393 = vmatprep.subr.mxu0 %v46
  %394 = vmatpush1.msra.mxu0 %v45
  %395 = vmatprep.subr.mxu0 %v48
  %396 = vmatpush1.msra.mxu0 %v47
  %397 = vmatprep.subr.mxu0 0.0
  %398 = vmatpush1.msra.mxu0 0.0
  %399 = vmatprep.subr.mxu0 0.0
  %400 = vmatpush1.msra.mxu0 0.0
  %401 = vmatprep.subr.mxu0 0.0
  %402 = vmatpush1.msra.mxu0 0.0
  %403 = vmatprep.subr.mxu0 0.0
  %404 = vmatpush1.msra.mxu0 0.0
  %405 = vmatprep.subr.mxu0 0.0
  %406 = vmatpush1.msra.mxu0 0.0
  %407 = vmatprep.subr.mxu0 0.0
  %408 = vmatpush1.msra.mxu0 0.0
  %409 = vmatprep.subr.mxu0 0.0
  %410 = vmatpush1.msra.mxu0 0.0
  %411 = vmatprep.subr.mxu0 0.0
  %412 = vmatpush1.msra.mxu0 0.0
  %413 = vmatprep.subr.mxu0 0.0
  %414 = vmatpush1.msra.mxu0 0.0
  %415 = vmatprep.subr.mxu0 0.0
  %416 = vmatpush1.msra.mxu0 0.0
  %417 = vmatprep.subr.mxu0 0.0
  %418 = vmatpush1.msra.mxu0 0.0
  %419 = vmatprep.subr.mxu0 0.0
  %420 = vmatpush1.msra.mxu0 0.0
  %421 = vmatprep.subr.mxu0 0.0
  %422 = vmatpush1.msra.mxu0 0.0
  %423 = vmatprep.subr.mxu0 0.0
  %424 = vmatpush1.msra.mxu0 0.0
  %425 = vmatprep.subr.mxu0 0.0
  %426 = vmatpush1.msra.mxu0 0.0
  %427 = vmatprep.subr.mxu0 0.0
  %428 = vmatpush1.msra.mxu0 0.0
  %429 = vmatprep.subr.mxu0 0.0
  %430 = vmatpush1.msra.mxu0 0.0
  %431 = vmatprep.subr.mxu0 0.0
  %432 = vmatpush1.msra.mxu0 0.0
  %433 = vmatprep.subr.mxu0 0.0
  %434 = vmatpush1.msra.mxu0 0.0
  %435 = vmatprep.subr.mxu0 0.0
  %436 = vmatpush1.msra.mxu0 0.0
  %437 = vmatprep.subr.mxu0 0.0
  %438 = vmatpush1.msra.mxu0 0.0
  %439 = vmatprep.subr.mxu0 0.0
  %440 = vmatpush1.msra.mxu0 0.0
  %441 = vmatprep.subr.mxu0 0.0
  %442 = vmatpush1.msra.mxu0 0.0
  %443 = vmatprep.subr.mxu0 0.0
  %444 = vmatpush1.msra.mxu0 0.0
  %445 = vmatprep.mubr.f32.mxu0 0.0
  %446 = vmatmul.mubr.f32.gmra.mrb[0].mxu0 %v379
  %v447 = vpop.f32.mrb[0].mxu0
  %v448 = vadd.f32 0.0, %v447
  %v449 = vpop.f32.mrb[0].mxu0
  %v450 = vadd.f32 0.0, %v449
  %451 = vdwg.mxu0
  %v452 = vadd.f32 %v372, %v448
  %v453 = vadd.f32 %v376, %v450
  %v454 = vxor.u32 %v452, 2147483648
  %v455 = vmul.f32 %v454, 1.442695
  %v456 = vpow.pop %v455
  %v457 = vadd.f32 %v456, 1.0
  %v458 = vrcp.pop %v457
  %v459 = vmul.f32 1.0, %v458
  %v460 = vtanh.pop %v452
  %v461 = vmul.f32 %v459, %v325
  %463 = vrot.lane.b32.xlu0 %v460, 32
  %v464 = vpop.permute.xlu0 %463
  %v466 = vmul.f32 %v459, %v464
  %468 = vrot.lane.b32.xlu0 %v466, 32
  %v469 = vpop.permute.xlu0 %468
  %v471 = vadd.f32 %v461, %v469
  %v472 = vtanh.pop %v471
  %474 = vrot.lane.b32.xlu0 %v472, 32
  %v475 = vpop.permute.xlu0 %474
  %v477 = vmul.f32 %v459, %v475
  %v478 = vxor.u32 %v453, 2147483648
  %v479 = vmul.f32 %v478, 1.442695
  %v480 = vpow.pop %v479
  %v481 = vadd.f32 %v480, 1.0
  %v482 = vrcp.pop %v481
  %v483 = vmul.f32 1.0, %v482
  %v484 = vtanh.pop %v453
  %v485 = vmul.f32 %v483, %v349
  %487 = vrot.lane.b32.xlu0 %v484, 32
  %v488 = vpop.permute.xlu0 %487
  %v490 = vmul.f32 %v483, %v488
  %492 = vrot.lane.b32.xlu0 %v490, 32
  %v493 = vpop.permute.xlu0 %492
  %v495 = vadd.f32 %v485, %v493
  %v496 = vtanh.pop %v495
  %498 = vrot.lane.b32.xlu0 %v496, 32
  %v499 = vpop.permute.xlu0 %498
  %v501 = vmul.f32 %v483, %v499
  %503 = vrot.lane.b32.xlu0 %v477, 64
  %v504 = vpop.permute.xlu0 %503
  %s506 = scalar_lea.vmem [#allocation3], 8
  %507 = vst.msk [vmem:[%s506] sm:$0xff] %vm360, %v504
  %509 = vrot.lane.b32.xlu0 %v501, 96
  %v510 = vpop.permute.xlu0 %509
  %s512 = scalar_lea.vmem [#allocation3], 48
  %513 = vst.msk [vmem:[%s512] sm:$0xff] %vm367, %v510
  %s514 = smul.u32 2, 2
  %s515 = smul.addr %s514, 8
  %s516 = scalar_lea.vmem [#allocation2], %s515
  %v517 = vld [vmem:[%s516] sm:$0xff]
  %s518 = smul.u32 5, 2
  %s519 = smul.addr %s518, 8
  %s520 = scalar_lea.vmem [#allocation2], %s519
  %v521 = vld [vmem:[%s520 + $0x8] sm:$0xff]
  %v522 = vsel %vm360, %v504, %v510
  %v524 = vsel %vm231, %v522, 0
  %526 = vmatprep.subr.mxu0 %v34
  %527 = vmatpush1.msra.mxu0 %v33
  %528 = vmatprep.subr.mxu0 %v36
  %529 = vmatpush1.msra.mxu0 %v35
  %530 = vmatprep.subr.mxu0 %v38
  %531 = vmatpush1.msra.mxu0 %v37
  %532 = vmatprep.subr.mxu0 %v40
  %533 = vmatpush1.msra.mxu0 %v39
  %534 = vmatprep.subr.mxu0 %v42
  %535 = vmatpush1.msra.mxu0 %v41
  %536 = vmatprep.subr.mxu0 %v44
  %537 = vmatpush1.msra.mxu0 %v43
  %538 = vmatprep.subr.mxu0 %v46
  %539 = vmatpush1.msra.mxu0 %v45
  %540 = vmatprep.subr.mxu0 %v48
  %541 = vmatpush1.msra.mxu0 %v47
  %542 = vmatprep.subr.mxu0 0.0
  %543 = vmatpush1.msra.mxu0 0.0
  %544 = vmatprep.subr.mxu0 0.0
  %545 = vmatpush1.msra.mxu0 0.0
  %546 = vmatprep.subr.mxu0 0.0
  %547 = vmatpush1.msra.mxu0 0.0
  %548 = vmatprep.subr.mxu0 0.0
  %549 = vmatpush1.msra.mxu0 0.0
  %550 = vmatprep.subr.mxu0 0.0
  %551 = vmatpush1.msra.mxu0 0.0
  %552 = vmatprep.subr.mxu0 0.0
  %553 = vmatpush1.msra.mxu0 0.0
  %554 = vmatprep.subr.mxu0 0.0
  %555 = vmatpush1.msra.mxu0 0.0
  %556 = vmatprep.subr.mxu0 0.0
  %557 = vmatpush1.msra.mxu0 0.0
  %558 = vmatprep.subr.mxu0 0.0
  %559 = vmatpush1.msra.mxu0 0.0
  %560 = vmatprep.subr.mxu0 0.0
  %561 = vmatpush1.msra.mxu0 0.0
  %562 = vmatprep.subr.mxu0 0.0
  %563 = vmatpush1.msra.mxu0 0.0
  %564 = vmatprep.subr.mxu0 0.0
  %565 = vmatpush1.msra.mxu0 0.0
  %566 = vmatprep.subr.mxu0 0.0
  %567 = vmatpush1.msra.mxu0 0.0
  %568 = vmatprep.subr.mxu0 0.0
  %569 = vmatpush1.msra.mxu0 0.0
  %570 = vmatprep.subr.mxu0 0.0
  %571 = vmatpush1.msra.mxu0 0.0
  %572 = vmatprep.subr.mxu0 0.0
  %573 = vmatpush1.msra.mxu0 0.0
  %574 = vmatprep.subr.mxu0 0.0
  %575 = vmatpush1.msra.mxu0 0.0
  %576 = vmatprep.subr.mxu0 0.0
  %577 = vmatpush1.msra.mxu0 0.0
  %578 = vmatprep.subr.mxu0 0.0
  %579 = vmatpush1.msra.mxu0 0.0
  %580 = vmatprep.subr.mxu0 0.0
  %581 = vmatpush1.msra.mxu0 0.0
  %582 = vmatprep.subr.mxu0 0.0
  %583 = vmatpush1.msra.mxu0 0.0
  %584 = vmatprep.subr.mxu0 0.0
  %585 = vmatpush1.msra.mxu0 0.0
  %586 = vmatprep.subr.mxu0 0.0
  %587 = vmatpush1.msra.mxu0 0.0
  %588 = vmatprep.subr.mxu0 0.0
  %589 = vmatpush1.msra.mxu0 0.0
  %590 = vmatprep.mubr.f32.mxu0 0.0
  %591 = vmatmul.mubr.f32.gmra.mrb[0].mxu0 %v524
  %v592 = vpop.f32.mrb[0].mxu0
  %v593 = vadd.f32 0.0, %v592
  %v594 = vpop.f32.mrb[0].mxu0
  %v595 = vadd.f32 0.0, %v594
  %596 = vdwg.mxu0
  %v597 = vadd.f32 %v517, %v593
  %v598 = vadd.f32 %v521, %v595
  %v599 = vxor.u32 %v597, 2147483648
  %v600 = vmul.f32 %v599, 1.442695
  %v601 = vpow.pop %v600
  %v602 = vadd.f32 %v601, 1.0
  %v603 = vrcp.pop %v602
  %v604 = vmul.f32 1.0, %v603
  %v605 = vtanh.pop %v597
  %v606 = vmul.f32 %v604, %v471
  %608 = vrot.lane.b32.xlu0 %v605, 32
  %v609 = vpop.permute.xlu0 %608
  %v611 = vmul.f32 %v604, %v609
  %613 = vrot.lane.b32.xlu0 %v611, 32
  %v614 = vpop.permute.xlu0 %613
  %v616 = vadd.f32 %v606, %v614
  %v617 = vtanh.pop %v616
  %619 = vrot.lane.b32.xlu0 %v617, 32
  %v620 = vpop.permute.xlu0 %619
  %v622 = vmul.f32 %v604, %v620
  %v623 = vxor.u32 %v598, 2147483648
  %v624 = vmul.f32 %v623, 1.442695
  %v625 = vpow.pop %v624
  %v626 = vadd.f32 %v625, 1.0
  %v627 = vrcp.pop %v626
  %v628 = vmul.f32 1.0, %v627
  %v629 = vtanh.pop %v598
  %v630 = vmul.f32 %v628, %v495
  %632 = vrot.lane.b32.xlu0 %v629, 32
  %v633 = vpop.permute.xlu0 %632
  %v635 = vmul.f32 %v628, %v633
  %637 = vrot.lane.b32.xlu0 %v635, 32
  %v638 = vpop.permute.xlu0 %637
  %v640 = vadd.f32 %v630, %v638
  %v641 = vtanh.pop %v640
  %643 = vrot.lane.b32.xlu0 %v641, 32
  %v644 = vpop.permute.xlu0 %643
  %v646 = vmul.f32 %v628, %v644
  %648 = vrot.lane.b32.xlu0 %v622, 64
  %v649 = vpop.permute.xlu0 %648
  %s651 = scalar_lea.vmem [#allocation3], 16
  %652 = vst.msk [vmem:[%s651] sm:$0xff] %vm360, %v649
  %654 = vrot.lane.b32.xlu0 %v646, 96
  %v655 = vpop.permute.xlu0 %654
  %s657 = scalar_lea.vmem [#allocation3], 40
  %658 = vst.msk [vmem:[%s657] sm:$0xff] %vm367, %v655
  %s659 = smul.u32 3, 2
  %s660 = smul.addr %s659, 8
  %s661 = scalar_lea.vmem [#allocation2], %s660
  %v662 = vld [vmem:[%s661] sm:$0xff]
  %s663 = smul.u32 4, 2
  %s664 = smul.addr %s663, 8
  %s665 = scalar_lea.vmem [#allocation2], %s664
  %v666 = vld [vmem:[%s665 + $0x8] sm:$0xff]
  %v667 = vsel %vm360, %v649, %v655
  %v669 = vsel %vm231, %v667, 0
  %671 = vmatprep.subr.mxu0 %v34
  %672 = vmatpush1.msra.mxu0 %v33
  %673 = vmatprep.subr.mxu0 %v36
  %674 = vmatpush1.msra.mxu0 %v35
  %675 = vmatprep.subr.mxu0 %v38
  %676 = vmatpush1.msra.mxu0 %v37
  %677 = vmatprep.subr.mxu0 %v40
  %678 = vmatpush1.msra.mxu0 %v39
  %679 = vmatprep.subr.mxu0 %v42
  %680 = vmatpush1.msra.mxu0 %v41
  %681 = vmatprep.subr.mxu0 %v44
  %682 = vmatpush1.msra.mxu0 %v43
  %683 = vmatprep.subr.mxu0 %v46
  %684 = vmatpush1.msra.mxu0 %v45
  %685 = vmatprep.subr.mxu0 %v48
  %686 = vmatpush1.msra.mxu0 %v47
  %687 = vmatprep.subr.mxu0 0.0
  %688 = vmatpush1.msra.mxu0 0.0
  %689 = vmatprep.subr.mxu0 0.0
  %690 = vmatpush1.msra.mxu0 0.0
  %691 = vmatprep.subr.mxu0 0.0
  %692 = vmatpush1.msra.mxu0 0.0
  %693 = vmatprep.subr.mxu0 0.0
  %694 = vmatpush1.msra.mxu0 0.0
  %695 = vmatprep.subr.mxu0 0.0
  %696 = vmatpush1.msra.mxu0 0.0
  %697 = vmatprep.subr.mxu0 0.0
  %698 = vmatpush1.msra.mxu0 0.0
  %699 = vmatprep.subr.mxu0 0.0
  %700 = vmatpush1.msra.mxu0 0.0
  %701 = vmatprep.subr.mxu0 0.0
  %702 = vmatpush1.msra.mxu0 0.0
  %703 = vmatprep.subr.mxu0 0.0
  %704 = vmatpush1.msra.mxu0 0.0
  %705 = vmatprep.subr.mxu0 0.0
  %706 = vmatpush1.msra.mxu0 0.0
  %707 = vmatprep.subr.mxu0 0.0
  %708 = vmatpush1.msra.mxu0 0.0
  %709 = vmatprep.subr.mxu0 0.0
  %710 = vmatpush1.msra.mxu0 0.0
  %711 = vmatprep.subr.mxu0 0.0
  %712 = vmatpush1.msra.mxu0 0.0
  %713 = vmatprep.subr.mxu0 0.0
  %714 = vmatpush1.msra.mxu0 0.0
  %715 = vmatprep.subr.mxu0 0.0
  %716 = vmatpush1.msra.mxu0 0.0
  %717 = vmatprep.subr.mxu0 0.0
  %718 = vmatpush1.msra.mxu0 0.0
  %719 = vmatprep.subr.mxu0 0.0
  %720 = vmatpush1.msra.mxu0 0.0
  %721 = vmatprep.subr.mxu0 0.0
  %722 = vmatpush1.msra.mxu0 0.0
  %723 = vmatprep.subr.mxu0 0.0
  %724 = vmatpush1.msra.mxu0 0.0
  %725 = vmatprep.subr.mxu0 0.0
  %726 = vmatpush1.msra.mxu0 0.0
  %727 = vmatprep.subr.mxu0 0.0
  %728 = vmatpush1.msra.mxu0 0.0
  %729 = vmatprep.subr.mxu0 0.0
  %730 = vmatpush1.msra.mxu0 0.0
  %731 = vmatprep.subr.mxu0 0.0
  %732 = vmatpush1.msra.mxu0 0.0
  %733 = vmatprep.subr.mxu0 0.0
  %734 = vmatpush1.msra.mxu0 0.0
  %735 = vmatprep.mubr.f32.mxu0 0.0
  %736 = vmatmul.mubr.f32.gmra.mrb[0].mxu0 %v669
  %v737 = vpop.f32.mrb[0].mxu0
  %v738 = vadd.f32 0.0, %v737
  %v739 = vpop.f32.mrb[0].mxu0
  %v740 = vadd.f32 0.0, %v739
  %741 = vdwg.mxu0
  %v742 = vadd.f32 %v662, %v738
  %v743 = vadd.f32 %v666, %v740
  %v744 = vxor.u32 %v742, 2147483648
  %v745 = vmul.f32 %v744, 1.442695
  %v746 = vpow.pop %v745
  %v747 = vadd.f32 %v746, 1.0
  %v748 = vrcp.pop %v747
  %v749 = vmul.f32 1.0, %v748
  %v750 = vtanh.pop %v742
  %v751 = vmul.f32 %v749, %v616
  %753 = vrot.lane.b32.xlu0 %v750, 32
  %v754 = vpop.permute.xlu0 %753
  %v756 = vmul.f32 %v749, %v754
  %758 = vrot.lane.b32.xlu0 %v756, 32
  %v759 = vpop.permute.xlu0 %758
  %v761 = vadd.f32 %v751, %v759
  %v762 = vtanh.pop %v761
  %764 = vrot.lane.b32.xlu0 %v762, 32
  %v765 = vpop.permute.xlu0 %764
  %v767 = vmul.f32 %v749, %v765
  %v768 = vxor.u32 %v743, 2147483648
  %v769 = vmul.f32 %v768, 1.442695
  %v770 = vpow.pop %v769
  %v771 = vadd.f32 %v770, 1.0
  %v772 = vrcp.pop %v771
  %v773 = vmul.f32 1.0, %v772
  %v774 = vtanh.pop %v743
  %v775 = vmul.f32 %v773, %v640
  %777 = vrot.lane.b32.xlu0 %v774, 32
  %v778 = vpop.permute.xlu0 %777
  %v780 = vmul.f32 %v773, %v778
  %782 = vrot.lane.b32.xlu0 %v780, 32
  %v783 = vpop.permute.xlu0 %782
  %v785 = vadd.f32 %v775, %v783
  %v786 = vtanh.pop %v785
  %788 = vrot.lane.b32.xlu0 %v786, 32
  %v789 = vpop.permute.xlu0 %788
  %v791 = vmul.f32 %v773, %v789
  %793 = vrot.lane.b32.xlu0 %v767, 64
  %v794 = vpop.permute.xlu0 %793
  %s796 = scalar_lea.vmem [#allocation3], 24
  %797 = vst.msk [vmem:[%s796] sm:$0xff] %vm360, %v794
  %799 = vrot.lane.b32.xlu0 %v791, 96
  %v800 = vpop.permute.xlu0 %799
  %s802 = scalar_lea.vmem [#allocation3], 32
  %803 = vst.msk [vmem:[%s802] sm:$0xff] %vm367, %v800
  %v804 = vld [vmem:[%s665] sm:$0xff]
  %v805 = vld [vmem:[%s661 + $0x8] sm:$0xff]
  %v806 = vsel %vm360, %v794, %v800
  %v808 = vsel %vm231, %v806, 0
  %810 = vmatprep.subr.mxu0 %v34
  %811 = vmatpush1.msra.mxu0 %v33
  %812 = vmatprep.subr.mxu0 %v36
  %813 = vmatpush1.msra.mxu0 %v35
  %814 = vmatprep.subr.mxu0 %v38
  %815 = vmatpush1.msra.mxu0 %v37
  %816 = vmatprep.subr.mxu0 %v40
  %817 = vmatpush1.msra.mxu0 %v39
  %818 = vmatprep.subr.mxu0 %v42
  %819 = vmatpush1.msra.mxu0 %v41
  %820 = vmatprep.subr.mxu0 %v44
  %821 = vmatpush1.msra.mxu0 %v43
  %822 = vmatprep.subr.mxu0 %v46
  %823 = vmatpush1.msra.mxu0 %v45
  %824 = vmatprep.subr.mxu0 %v48
  %825 = vmatpush1.msra.mxu0 %v47
  %826 = vmatprep.subr.mxu0 0.0
  %827 = vmatpush1.msra.mxu0 0.0
  %828 = vmatprep.subr.mxu0 0.0
  %829 = vmatpush1.msra.mxu0 0.0
  %830 = vmatprep.subr.mxu0 0.0
  %831 = vmatpush1.msra.mxu0 0.0
  %832 = vmatprep.subr.mxu0 0.0
  %833 = vmatpush1.msra.mxu0 0.0
  %834 = vmatprep.subr.mxu0 0.0
  %835 = vmatpush1.msra.mxu0 0.0
  %836 = vmatprep.subr.mxu0 0.0
  %837 = vmatpush1.msra.mxu0 0.0
  %838 = vmatprep.subr.mxu0 0.0
  %839 = vmatpush1.msra.mxu0 0.0
  %840 = vmatprep.subr.mxu0 0.0
  %841 = vmatpush1.msra.mxu0 0.0
  %842 = vmatprep.subr.mxu0 0.0
  %843 = vmatpush1.msra.mxu0 0.0
  %844 = vmatprep.subr.mxu0 0.0
  %845 = vmatpush1.msra.mxu0 0.0
  %846 = vmatprep.subr.mxu0 0.0
  %847 = vmatpush1.msra.mxu0 0.0
  %848 = vmatprep.subr.mxu0 0.0
  %849 = vmatpush1.msra.mxu0 0.0
  %850 = vmatprep.subr.mxu0 0.0
  %851 = vmatpush1.msra.mxu0 0.0
  %852 = vmatprep.subr.mxu0 0.0
  %853 = vmatpush1.msra.mxu0 0.0
  %854 = vmatprep.subr.mxu0 0.0
  %855 = vmatpush1.msra.mxu0 0.0
  %856 = vmatprep.subr.mxu0 0.0
  %857 = vmatpush1.msra.mxu0 0.0
  %858 = vmatprep.subr.mxu0 0.0
  %859 = vmatpush1.msra.mxu0 0.0
  %860 = vmatprep.subr.mxu0 0.0
  %861 = vmatpush1.msra.mxu0 0.0
  %862 = vmatprep.subr.mxu0 0.0
  %863 = vmatpush1.msra.mxu0 0.0
  %864 = vmatprep.subr.mxu0 0.0
  %865 = vmatpush1.msra.mxu0 0.0
  %866 = vmatprep.subr.mxu0 0.0
  %867 = vmatpush1.msra.mxu0 0.0
  %868 = vmatprep.subr.mxu0 0.0
  %869 = vmatpush1.msra.mxu0 0.0
  %870 = vmatprep.subr.mxu0 0.0
  %871 = vmatpush1.msra.mxu0 0.0
  %872 = vmatprep.subr.mxu0 0.0
  %873 = vmatpush1.msra.mxu0 0.0
  %874 = vmatprep.mubr.f32.mxu0 0.0
  %875 = vmatmul.mubr.f32.gmra.mrb[0].mxu0 %v808
  %v876 = vpop.f32.mrb[0].mxu0
  %v877 = vadd.f32 0.0, %v876
  %v878 = vpop.f32.mrb[0].mxu0
  %v879 = vadd.f32 0.0, %v878
  %880 = vdwg.mxu0
  %v881 = vadd.f32 %v804, %v877
  %v882 = vadd.f32 %v805, %v879
  %v883 = vxor.u32 %v881, 2147483648
  %v884 = vmul.f32 %v883, 1.442695
  %v885 = vpow.pop %v884
  %v886 = vadd.f32 %v885, 1.0
  %v887 = vrcp.pop %v886
  %v888 = vmul.f32 1.0, %v887
  %v889 = vtanh.pop %v881
  %v890 = vmul.f32 %v888, %v761
  %892 = vrot.lane.b32.xlu0 %v889, 32
  %v893 = vpop.permute.xlu0 %892
  %v895 = vmul.f32 %v888, %v893
  %897 = vrot.lane.b32.xlu0 %v895, 32
  %v898 = vpop.permute.xlu0 %897
  %v900 = vadd.f32 %v890, %v898
  %v901 = vtanh.pop %v900
  %903 = vrot.lane.b32.xlu0 %v901, 32
  %v904 = vpop.permute.xlu0 %903
  %v906 = vmul.f32 %v888, %v904
  %v907 = vxor.u32 %v882, 2147483648
  %v908 = vmul.f32 %v907, 1.442695
  %v909 = vpow.pop %v908
  %v910 = vadd.f32 %v909, 1.0
  %v911 = vrcp.pop %v910
  %v912 = vmul.f32 1.0, %v911
  %v913 = vtanh.pop %v882
  %v914 = vmul.f32 %v912, %v785
  %916 = vrot.lane.b32.xlu0 %v913, 32
  %v917 = vpop.permute.xlu0 %916
  %v919 = vmul.f32 %v912, %v917
  %921 = vrot.lane.b32.xlu0 %v919, 32
  %v922 = vpop.permute.xlu0 %921
  %v924 = vadd.f32 %v914, %v922
  %v925 = vtanh.pop %v924
  %927 = vrot.lane.b32.xlu0 %v925, 32
  %v928 = vpop.permute.xlu0 %927
  %v930 = vmul.f32 %v912, %v928
  %932 = vrot.lane.b32.xlu0 %v906, 64
  %v933 = vpop.permute.xlu0 %932
  %935 = vst.msk [vmem:[%s802] sm:$0xff] %vm360, %v933
  %937 = vrot.lane.b32.xlu0 %v930, 96
  %v938 = vpop.permute.xlu0 %937
  %940 = vst.msk [vmem:[%s796] sm:$0xff] %vm367, %v938
  %v941 = vld [vmem:[%s520] sm:$0xff]
  %v942 = vld [vmem:[%s516 + $0x8] sm:$0xff]
  %v943 = vsel %vm360, %v933, %v938
  %v945 = vsel %vm231, %v943, 0
  %947 = vmatprep.subr.mxu0 %v34
  %948 = vmatpush1.msra.mxu0 %v33
  %949 = vmatprep.subr.mxu0 %v36
  %950 = vmatpush1.msra.mxu0 %v35
  %951 = vmatprep.subr.mxu0 %v38
  %952 = vmatpush1.msra.mxu0 %v37
  %953 = vmatprep.subr.mxu0 %v40
  %954 = vmatpush1.msra.mxu0 %v39
  %955 = vmatprep.subr.mxu0 %v42
  %956 = vmatpush1.msra.mxu0 %v41
  %957 = vmatprep.subr.mxu0 %v44
  %958 = vmatpush1.msra.mxu0 %v43
  %959 = vmatprep.subr.mxu0 %v46
  %960 = vmatpush1.msra.mxu0 %v45
  %961 = vmatprep.subr.mxu0 %v48
  %962 = vmatpush1.msra.mxu0 %v47
  %963 = vmatprep.subr.mxu0 0.0
  %964 = vmatpush1.msra.mxu0 0.0
  %965 = vmatprep.subr.mxu0 0.0
  %966 = vmatpush1.msra.mxu0 0.0
  %967 = vmatprep.subr.mxu0 0.0
  %968 = vmatpush1.msra.mxu0 0.0
  %969 = vmatprep.subr.mxu0 0.0
  %970 = vmatpush1.msra.mxu0 0.0
  %971 = vmatprep.subr.mxu0 0.0
  %972 = vmatpush1.msra.mxu0 0.0
  %973 = vmatprep.subr.mxu0 0.0
  %974 = vmatpush1.msra.mxu0 0.0
  %975 = vmatprep.subr.mxu0 0.0
  %976 = vmatpush1.msra.mxu0 0.0
  %977 = vmatprep.subr.mxu0 0.0
  %978 = vmatpush1.msra.mxu0 0.0
  %979 = vmatprep.subr.mxu0 0.0
  %980 = vmatpush1.msra.mxu0 0.0
  %981 = vmatprep.subr.mxu0 0.0
  %982 = vmatpush1.msra.mxu0 0.0
  %983 = vmatprep.subr.mxu0 0.0
  %984 = vmatpush1.msra.mxu0 0.0
  %985 = vmatprep.subr.mxu0 0.0
  %986 = vmatpush1.msra.mxu0 0.0
  %987 = vmatprep.subr.mxu0 0.0
  %988 = vmatpush1.msra.mxu0 0.0
  %989 = vmatprep.subr.mxu0 0.0
  %990 = vmatpush1.msra.mxu0 0.0
  %991 = vmatprep.subr.mxu0 0.0
  %992 = vmatpush1.msra.mxu0 0.0
  %993 = vmatprep.subr.mxu0 0.0
  %994 = vmatpush1.msra.mxu0 0.0
  %995 = vmatprep.subr.mxu0 0.0
  %996 = vmatpush1.msra.mxu0 0.0
  %997 = vmatprep.subr.mxu0 0.0
  %998 = vmatpush1.msra.mxu0 0.0
  %999 = vmatprep.subr.mxu0 0.0
  %1000 = vmatpush1.msra.mxu0 0.0
  %1001 = vmatprep.subr.mxu0 0.0
  %1002 = vmatpush1.msra.mxu0 0.0
  %1003 = vmatprep.subr.mxu0 0.0
  %1004 = vmatpush1.msra.mxu0 0.0
  %1005 = vmatprep.subr.mxu0 0.0
  %1006 = vmatpush1.msra.mxu0 0.0
  %1007 = vmatprep.subr.mxu0 0.0
  %1008 = vmatpush1.msra.mxu0 0.0
  %1009 = vmatprep.subr.mxu0 0.0
  %1010 = vmatpush1.msra.mxu0 0.0
  %1011 = vmatprep.mubr.f32.mxu0 0.0
  %1012 = vmatmul.mubr.f32.gmra.mrb[0].mxu0 %v945
  %v1013 = vpop.f32.mrb[0].mxu0
  %v1014 = vadd.f32 0.0, %v1013
  %v1015 = vpop.f32.mrb[0].mxu0
  %v1016 = vadd.f32 0.0, %v1015
  %1017 = vdwg.mxu0
  %v1018 = vadd.f32 %v941, %v1014
  %v1019 = vadd.f32 %v942, %v1016
  %v1020 = vxor.u32 %v1018, 2147483648
  %v1021 = vmul.f32 %v1020, 1.442695
  %v1022 = vpow.pop %v1021
  %v1023 = vadd.f32 %v1022, 1.0
  %v1024 = vrcp.pop %v1023
  %v1025 = vmul.f32 1.0, %v1024
  %v1026 = vtanh.pop %v1018
  %v1027 = vmul.f32 %v1025, %v900
  %1029 = vrot.lane.b32.xlu0 %v1026, 32
  %v1030 = vpop.permute.xlu0 %1029
  %v1032 = vmul.f32 %v1025, %v1030
  %1034 = vrot.lane.b32.xlu0 %v1032, 32
  %v1035 = vpop.permute.xlu0 %1034
  %v1037 = vadd.f32 %v1027, %v1035
  %v1038 = vtanh.pop %v1037
  %1040 = vrot.lane.b32.xlu0 %v1038, 32
  %v1041 = vpop.permute.xlu0 %1040
  %v1043 = vmul.f32 %v1025, %v1041
  %v1044 = vxor.u32 %v1019, 2147483648
  %v1045 = vmul.f32 %v1044, 1.442695
  %v1046 = vpow.pop %v1045
  %v1047 = vadd.f32 %v1046, 1.0
  %v1048 = vrcp.pop %v1047
  %v1049 = vmul.f32 1.0, %v1048
  %v1050 = vtanh.pop %v1019
  %v1051 = vmul.f32 %v1049, %v924
  %1053 = vrot.lane.b32.xlu0 %v1050, 32
  %v1054 = vpop.permute.xlu0 %1053
  %v1056 = vmul.f32 %v1049, %v1054
  %1058 = vrot.lane.b32.xlu0 %v1056, 32
  %v1059 = vpop.permute.xlu0 %1058
  %v1061 = vadd.f32 %v1051, %v1059
  %v1062 = vtanh.pop %v1061
  %1064 = vrot.lane.b32.xlu0 %v1062, 32
  %v1065 = vpop.permute.xlu0 %1064
  %v1067 = vmul.f32 %v1049, %v1065
  %1069 = vrot.lane.b32.xlu0 %v1043, 64
  %v1070 = vpop.permute.xlu0 %1069
  %1072 = vst.msk [vmem:[%s657] sm:$0xff] %vm360, %v1070
  %1074 = vrot.lane.b32.xlu0 %v1067, 96
  %v1075 = vpop.permute.xlu0 %1074
  %1077 = vst.msk [vmem:[%s651] sm:$0xff] %vm367, %v1075
  %v1078 = vld [vmem:[%s375] sm:$0xff]
  %v1079 = vld [vmem:[%s371 + $0x8] sm:$0xff]
  %v1080 = vsel %vm360, %v1070, %v1075
  %v1082 = vsel %vm231, %v1080, 0
  %1084 = vmatprep.subr.mxu0 %v34
  %1085 = vmatpush1.msra.mxu0 %v33
  %1086 = vmatprep.subr.mxu0 %v36
  %1087 = vmatpush1.msra.mxu0 %v35
  %1088 = vmatprep.subr.mxu0 %v38
  %1089 = vmatpush1.msra.mxu0 %v37
  %1090 = vmatprep.subr.mxu0 %v40
  %1091 = vmatpush1.msra.mxu0 %v39
  %1092 = vmatprep.subr.mxu0 %v42
  %1093 = vmatpush1.msra.mxu0 %v41
  %1094 = vmatprep.subr.mxu0 %v44
  %1095 = vmatpush1.msra.mxu0 %v43
  %1096 = vmatprep.subr.mxu0 %v46
  %1097 = vmatpush1.msra.mxu0 %v45
  %1098 = vmatprep.subr.mxu0 %v48
  %1099 = vmatpush1.msra.mxu0 %v47
  %1100 = vmatprep.subr.mxu0 0.0
  %1101 = vmatpush1.msra.mxu0 0.0
  %1102 = vmatprep.subr.mxu0 0.0
  %1103 = vmatpush1.msra.mxu0 0.0
  %1104 = vmatprep.subr.mxu0 0.0
  %1105 = vmatpush1.msra.mxu0 0.0
  %1106 = vmatprep.subr.mxu0 0.0
  %1107 = vmatpush1.msra.mxu0 0.0
  %1108 = vmatprep.subr.mxu0 0.0
  %1109 = vmatpush1.msra.mxu0 0.0
  %1110 = vmatprep.subr.mxu0 0.0
  %1111 = vmatpush1.msra.mxu0 0.0
  %1112 = vmatprep.subr.mxu0 0.0
  %1113 = vmatpush1.msra.mxu0 0.0
  %1114 = vmatprep.subr.mxu0 0.0
  %1115 = vmatpush1.msra.mxu0 0.0
  %1116 = vmatprep.subr.mxu0 0.0
  %1117 = vmatpush1.msra.mxu0 0.0
  %1118 = vmatprep.subr.mxu0 0.0
  %1119 = vmatpush1.msra.mxu0 0.0
  %1120 = vmatprep.subr.mxu0 0.0
  %1121 = vmatpush1.msra.mxu0 0.0
  %1122 = vmatprep.subr.mxu0 0.0
  %1123 = vmatpush1.msra.mxu0 0.0
  %1124 = vmatprep.subr.mxu0 0.0
  %1125 = vmatpush1.msra.mxu0 0.0
  %1126 = vmatprep.subr.mxu0 0.0
  %1127 = vmatpush1.msra.mxu0 0.0
  %1128 = vmatprep.subr.mxu0 0.0
  %1129 = vmatpush1.msra.mxu0 0.0
  %1130 = vmatprep.subr.mxu0 0.0
  %1131 = vmatpush1.msra.mxu0 0.0
  %1132 = vmatprep.subr.mxu0 0.0
  %1133 = vmatpush1.msra.mxu0 0.0
  %1134 = vmatprep.subr.mxu0 0.0
  %1135 = vmatpush1.msra.mxu0 0.0
  %1136 = vmatprep.subr.mxu0 0.0
  %1137 = vmatpush1.msra.mxu0 0.0
  %1138 = vmatprep.subr.mxu0 0.0
  %1139 = vmatpush1.msra.mxu0 0.0
  %1140 = vmatprep.subr.mxu0 0.0
  %1141 = vmatpush1.msra.mxu0 0.0
  %1142 = vmatprep.subr.mxu0 0.0
  %1143 = vmatpush1.msra.mxu0 0.0
  %1144 = vmatprep.subr.mxu0 0.0
  %1145 = vmatpush1.msra.mxu0 0.0
  %1146 = vmatprep.subr.mxu0 0.0
  %1147 = vmatpush1.msra.mxu0 0.0
  %1148 = vmatprep.mubr.f32.mxu0 0.0
  %1149 = vmatmul.mubr.f32.gmra.mrb[0].mxu0 %v1082
  %v1150 = vpop.f32.mrb[0].mxu0
  %v1151 = vadd.f32 0.0, %v1150
  %v1152 = vpop.f32.mrb[0].mxu0
  %v1153 = vadd.f32 0.0, %v1152
  %1154 = vdwg.mxu0
  %v1155 = vadd.f32 %v1078, %v1151
  %v1156 = vadd.f32 %v1079, %v1153
  %v1157 = vxor.u32 %v1155, 2147483648
  %v1158 = vmul.f32 %v1157, 1.442695
  %v1159 = vpow.pop %v1158
  %v1160 = vadd.f32 %v1159, 1.0
  %v1161 = vrcp.pop %v1160
  %v1162 = vmul.f32 1.0, %v1161
  %v1163 = vtanh.pop %v1155
  %v1164 = vmul.f32 %v1162, %v1037
  %1166 = vrot.lane.b32.xlu0 %v1163, 32
  %v1167 = vpop.permute.xlu0 %1166
  %v1169 = vmul.f32 %v1162, %v1167
  %1171 = vrot.lane.b32.xlu0 %v1169, 32
  %v1172 = vpop.permute.xlu0 %1171
  %v1174 = vadd.f32 %v1164, %v1172
  %v1175 = vtanh.pop %v1174
  %1177 = vrot.lane.b32.xlu0 %v1175, 32
  %v1178 = vpop.permute.xlu0 %1177
  %v1180 = vmul.f32 %v1162, %v1178
  %v1181 = vxor.u32 %v1156, 2147483648
  %v1182 = vmul.f32 %v1181, 1.442695
  %v1183 = vpow.pop %v1182
  %v1184 = vadd.f32 %v1183, 1.0
  %v1185 = vrcp.pop %v1184
  %v1186 = vmul.f32 1.0, %v1185
  %v1187 = vtanh.pop %v1156
  %v1188 = vmul.f32 %v1186, %v1061
  %1190 = vrot.lane.b32.xlu0 %v1187, 32
  %v1191 = vpop.permute.xlu0 %1190
  %v1193 = vmul.f32 %v1186, %v1191
  %1195 = vrot.lane.b32.xlu0 %v1193, 32
  %v1196 = vpop.permute.xlu0 %1195
  %v1198 = vadd.f32 %v1188, %v1196
  %v1199 = vtanh.pop %v1198
  %1201 = vrot.lane.b32.xlu0 %v1199, 32
  %v1202 = vpop.permute.xlu0 %1201
  %v1204 = vmul.f32 %v1186, %v1202
  %1206 = vrot.lane.b32.xlu0 %v1180, 64
  %v1207 = vpop.permute.xlu0 %1206
  %1209 = vst.msk [vmem:[%s512] sm:$0xff] %vm360, %v1207
  %1211 = vrot.lane.b32.xlu0 %v1204, 96
  %v1212 = vpop.permute.xlu0 %1211
  %1214 = vst.msk [vmem:[%s506] sm:$0xff] %vm367, %v1212
  %v1215 = vld [vmem:[%s229] sm:$0xff]
  %v1216 = vld [vmem:[%s225 + $0x8] sm:$0xff]
  %v1217 = vsel %vm360, %v1207, %v1212
  %v1219 = vsel %vm231, %v1217, 0
  %1221 = vmatprep.subr.mxu0 %v34
  %1222 = vmatpush1.msra.mxu0 %v33
  %1223 = vmatprep.subr.mxu0 %v36
  %1224 = vmatpush1.msra.mxu0 %v35
  %1225 = vmatprep.subr.mxu0 %v38
  %1226 = vmatpush1.msra.mxu0 %v37
  %1227 = vmatprep.subr.mxu0 %v40
  %1228 = vmatpush1.msra.mxu0 %v39
  %1229 = vmatprep.subr.mxu0 %v42
  %1230 = vmatpush1.msra.mxu0 %v41
  %1231 = vmatprep.subr.mxu0 %v44
  %1232 = vmatpush1.msra.mxu0 %v43
  %1233 = vmatprep.subr.mxu0 %v46
  %1234 = vmatpush1.msra.mxu0 %v45
  %1235 = vmatprep.subr.mxu0 %v48
  %1236 = vmatpush1.msra.mxu0 %v47
  %1237 = vmatprep.subr.mxu0 0.0
  %1238 = vmatpush1.msra.mxu0 0.0
  %1239 = vmatprep.subr.mxu0 0.0
  %1240 = vmatpush1.msra.mxu0 0.0
  %1241 = vmatprep.subr.mxu0 0.0
  %1242 = vmatpush1.msra.mxu0 0.0
  %1243 = vmatprep.subr.mxu0 0.0
  %1244 = vmatpush1.msra.mxu0 0.0
  %1245 = vmatprep.subr.mxu0 0.0
  %1246 = vmatpush1.msra.mxu0 0.0
  %1247 = vmatprep.subr.mxu0 0.0
  %1248 = vmatpush1.msra.mxu0 0.0
  %1249 = vmatprep.subr.mxu0 0.0
  %1250 = vmatpush1.msra.mxu0 0.0
  %1251 = vmatprep.subr.mxu0 0.0
  %1252 = vmatpush1.msra.mxu0 0.0
  %1253 = vmatprep.subr.mxu0 0.0
  %1254 = vmatpush1.msra.mxu0 0.0
  %1255 = vmatprep.subr.mxu0 0.0
  %1256 = vmatpush1.msra.mxu0 0.0
  %1257 = vmatprep.subr.mxu0 0.0
  %1258 = vmatpush1.msra.mxu0 0.0
  %1259 = vmatprep.subr.mxu0 0.0
  %1260 = vmatpush1.msra.mxu0 0.0
  %1261 = vmatprep.subr.mxu0 0.0
  %1262 = vmatpush1.msra.mxu0 0.0
  %1263 = vmatprep.subr.mxu0 0.0
  %1264 = vmatpush1.msra.mxu0 0.0
  %1265 = vmatprep.subr.mxu0 0.0
  %1266 = vmatpush1.msra.mxu0 0.0
  %1267 = vmatprep.subr.mxu0 0.0
  %1268 = vmatpush1.msra.mxu0 0.0
  %1269 = vmatprep.subr.mxu0 0.0
  %1270 = vmatpush1.msra.mxu0 0.0
  %1271 = vmatprep.subr.mxu0 0.0
  %1272 = vmatpush1.msra.mxu0 0.0
  %1273 = vmatprep.subr.mxu0 0.0
  %1274 = vmatpush1.msra.mxu0 0.0
  %1275 = vmatprep.subr.mxu0 0.0
  %1276 = vmatpush1.msra.mxu0 0.0
  %1277 = vmatprep.subr.mxu0 0.0
  %1278 = vmatpush1.msra.mxu0 0.0
  %1279 = vmatprep.subr.mxu0 0.0
  %1280 = vmatpush1.msra.mxu0 0.0
  %1281 = vmatprep.subr.mxu0 0.0
  %1282 = vmatpush1.msra.mxu0 0.0
  %1283 = vmatprep.subr.mxu0 0.0
  %1284 = vmatpush1.msra.mxu0 0.0
  %1285 = vmatprep.mubr.f32.mxu0 0.0
  %1286 = vmatmul.mubr.f32.gmra.mrb[0].mxu0 %v1219
  %v1287 = vpop.f32.mrb[0].mxu0
  %v1288 = vadd.f32 0.0, %v1287
  %v1289 = vpop.f32.mrb[0].mxu0
  %v1290 = vadd.f32 0.0, %v1289
  %1291 = vdwg.mxu0
  %v1292 = vadd.f32 %v1215, %v1288
  %v1293 = vadd.f32 %v1216, %v1290
  %v1294 = vxor.u32 %v1292, 2147483648
  %v1295 = vmul.f32 %v1294, 1.442695
  %v1296 = vpow.pop %v1295
  %v1297 = vadd.f32 %v1296, 1.0
  %v1298 = vrcp.pop %v1297
  %v1299 = vmul.f32 1.0, %v1298
  %v1300 = vtanh.pop %v1292
  %v1301 = vmul.f32 %v1299, %v1174
  %1303 = vrot.lane.b32.xlu0 %v1300, 32
  %v1304 = vpop.permute.xlu0 %1303
  %v1306 = vmul.f32 %v1299, %v1304
  %1308 = vrot.lane.b32.xlu0 %v1306, 32
  %v1309 = vpop.permute.xlu0 %1308
  %v1311 = vadd.f32 %v1301, %v1309
  %v1312 = vtanh.pop %v1311
  %1314 = vrot.lane.b32.xlu0 %v1312, 32
  %v1315 = vpop.permute.xlu0 %1314
  %v1317 = vmul.f32 %v1299, %v1315
  %v1318 = vxor.u32 %v1293, 2147483648
  %v1319 = vmul.f32 %v1318, 1.442695
  %v1320 = vpow.pop %v1319
  %v1321 = vadd.f32 %v1320, 1.0
  %v1322 = vrcp.pop %v1321
  %v1323 = vmul.f32 1.0, %v1322
  %v1324 = vtanh.pop %v1293
  %v1325 = vmul.f32 %v1323, %v1198
  %1327 = vrot.lane.b32.xlu0 %v1324, 32
  %v1328 = vpop.permute.xlu0 %1327
  %v1330 = vmul.f32 %v1323, %v1328
  %1332 = vrot.lane.b32.xlu0 %v1330, 32
  %v1333 = vpop.permute.xlu0 %1332
  %v1335 = vadd.f32 %v1325, %v1333
  %v1336 = vtanh.pop %v1335
  %1338 = vrot.lane.b32.xlu0 %v1336, 32
  %v1339 = vpop.permute.xlu0 %1338
  %v1341 = vmul.f32 %v1323, %v1339
  %1343 = vrot.lane.b32.xlu0 %v1317, 64
  %v1344 = vpop.permute.xlu0 %1343
  %1346 = vst.msk [vmem:[%s366] sm:$0xff] %vm360, %v1344
  %1348 = vrot.lane.b32.xlu0 %v1341, 96
  %v1349 = vpop.permute.xlu0 %1348
  %1351 = vst.msk [vmem:[#allocation3] sm:$0xff] %vm367, %v1349
  %v1352 = vld [vmem:[%s5] sm:$0xff]
  %v1353 = vld [vmem:[%s5 + $0x8] sm:$0xff]
  %v1354 = vld [vmem:[%s5 + $0x10] sm:$0xff]
  %v1355 = vld [vmem:[%s5 + $0x18] sm:$0xff]
  %v1356 = vld [vmem:[%s5 + $0x20] sm:$0xff]
  %v1357 = vld [vmem:[%s5 + $0x28] sm:$0xff]
  %v1358 = vld [vmem:[%s5 + $0x30] sm:$0xff]
  %v1359 = vld [vmem:[%s5 + $0x38] sm:$0xff]
  %v1360 = vld [vmem:[%s5 + $0x40] sm:$0xff]
  %v1361 = vld [vmem:[%s5 + $0x48] sm:$0xff]
  %v1362 = vld [vmem:[%s5 + $0x50] sm:$0xff]
  %v1363 = vld [vmem:[%s5 + $0x58] sm:$0xff]
  %v1364 = vld [vmem:[%s5 + $0x60] sm:$0xff]
  %v1365 = vld [vmem:[%s5 + $0x68] sm:$0xff]
  %v1366 = vld [vmem:[%s5 + $0x70] sm:$0xff]
  %v1367 = vld [vmem:[%s5 + $0x78] sm:$0xff]
  %v1368 = vld [vmem:[%s6] sm:$0xff]
  %v1369 = vld [vmem:[%s6 + $0x8] sm:$0xff]
  %v1370 = vld [vmem:[%s6 + $0x10] sm:$0xff]
  %v1371 = vld [vmem:[%s6 + $0x18] sm:$0xff]
  %v1372 = vld [vmem:[%s6 + $0x20] sm:$0xff]
  %v1373 = vld [vmem:[%s6 + $0x28] sm:$0xff]
  %v1374 = vld [vmem:[%s6 + $0x30] sm:$0xff]
  %v1375 = vld [vmem:[%s6 + $0x38] sm:$0xff]
  %v1376 = vld [vmem:[%s6 + $0x40] sm:$0xff]
  %v1377 = vld [vmem:[%s6 + $0x48] sm:$0xff]
  %v1378 = vld [vmem:[%s6 + $0x50] sm:$0xff]
  %v1379 = vld [vmem:[%s6 + $0x58] sm:$0xff]
  %v1380 = vld [vmem:[%s6 + $0x60] sm:$0xff]
  %v1381 = vld [vmem:[%s6 + $0x68] sm:$0xff]
  %v1382 = vld [vmem:[%s6 + $0x70] sm:$0xff]
  %v1383 = vld [vmem:[%s6 + $0x78] sm:$0xff]
  %v1384 = vld [vmem:[%s7] sm:$0x3]
  %v1385 = vld [vmem:[#allocation3] sm:$0xff]
  %v1386 = vld [vmem:[#allocation3 + $0x8] sm:$0xff]
  %v1387 = vld [vmem:[#allocation3 + $0x10] sm:$0xff]
  %v1388 = vld [vmem:[#allocation3 + $0x18] sm:$0xff]
  %v1389 = vld [vmem:[#allocation3 + $0x20] sm:$0xff]
  %v1390 = vld [vmem:[#allocation3 + $0x28] sm:$0xff]
  %v1391 = vld [vmem:[#allocation3 + $0x30] sm:$0xff]
  %v1392 = vld [vmem:[#allocation3 + $0x38] sm:$0xff]
  %v1394 = vlaneseq
  %v1395 = vshrl.u32 %v1394, 7
  %v1396 = vsub.s32 0, %v1395
  %v1397 = vrot.slane %v1384, %v1396
  %v1398 = vlaneseq
  %v1399 = vshrl.u32 %v1398, 7
  %v1400 = vsub.s32 1, %v1399
  %v1401 = vrot.slane %v1384, %v1400
  %v1405 = vsel %vm231, %v1385, 0
  %v1408 = vsel %vm231, %v1386, 0
  %v1411 = vsel %vm231, %v1387, 0
  %v1414 = vsel %vm231, %v1388, 0
  %v1417 = vsel %vm231, %v1389, 0
  %v1420 = vsel %vm231, %v1390, 0
  %v1423 = vsel %vm231, %v1391, 0
  %v1426 = vsel %vm231, %v1392, 0
  %1428 = vmatprep.subr.mxu0 %v1353
  %1429 = vmatpush1.msra.mxu0 %v1352
  %1430 = vmatprep.subr.mxu0 %v1355
  %1431 = vmatpush1.msra.mxu0 %v1354
  %1432 = vmatprep.subr.mxu0 %v1357
  %1433 = vmatpush1.msra.mxu0 %v1356
  %1434 = vmatprep.subr.mxu0 %v1359
  %1435 = vmatpush1.msra.mxu0 %v1358
  %1436 = vmatprep.subr.mxu0 %v1361
  %1437 = vmatpush1.msra.mxu0 %v1360
  %1438 = vmatprep.subr.mxu0 %v1363
  %1439 = vmatpush1.msra.mxu0 %v1362
  %1440 = vmatprep.subr.mxu0 %v1365
  %1441 = vmatpush1.msra.mxu0 %v1364
  %1442 = vmatprep.subr.mxu0 %v1367
  %1443 = vmatpush1.msra.mxu0 %v1366
  %1444 = vmatprep.subr.mxu0 0.0
  %1445 = vmatpush1.msra.mxu0 0.0
  %1446 = vmatprep.subr.mxu0 0.0
  %1447 = vmatpush1.msra.mxu0 0.0
  %1448 = vmatprep.subr.mxu0 0.0
  %1449 = vmatpush1.msra.mxu0 0.0
  %1450 = vmatprep.subr.mxu0 0.0
  %1451 = vmatpush1.msra.mxu0 0.0
  %1452 = vmatprep.subr.mxu0 0.0
  %1453 = vmatpush1.msra.mxu0 0.0
  %1454 = vmatprep.subr.mxu0 0.0
  %1455 = vmatpush1.msra.mxu0 0.0
  %1456 = vmatprep.subr.mxu0 0.0
  %1457 = vmatpush1.msra.mxu0 0.0
  %1458 = vmatprep.subr.mxu0 0.0
  %1459 = vmatpush1.msra.mxu0 0.0
  %1460 = vmatprep.subr.mxu0 0.0
  %1461 = vmatpush1.msra.mxu0 0.0
  %1462 = vmatprep.subr.mxu0 0.0
  %1463 = vmatpush1.msra.mxu0 0.0
  %1464 = vmatprep.subr.mxu0 0.0
  %1465 = vmatpush1.msra.mxu0 0.0
  %1466 = vmatprep.subr.mxu0 0.0
  %1467 = vmatpush1.msra.mxu0 0.0
  %1468 = vmatprep.subr.mxu0 0.0
  %1469 = vmatpush1.msra.mxu0 0.0
  %1470 = vmatprep.subr.mxu0 0.0
  %1471 = vmatpush1.msra.mxu0 0.0
  %1472 = vmatprep.subr.mxu0 0.0
  %1473 = vmatpush1.msra.mxu0 0.0
  %1474 = vmatprep.subr.mxu0 0.0
  %1475 = vmatpush1.msra.mxu0 0.0
  %1476 = vmatprep.subr.mxu0 0.0
  %1477 = vmatpush1.msra.mxu0 0.0
  %1478 = vmatprep.subr.mxu0 0.0
  %1479 = vmatpush1.msra.mxu0 0.0
  %1480 = vmatprep.subr.mxu0 0.0
  %1481 = vmatpush1.msra.mxu0 0.0
  %1482 = vmatprep.subr.mxu0 0.0
  %1483 = vmatpush1.msra.mxu0 0.0
  %1484 = vmatprep.subr.mxu0 0.0
  %1485 = vmatpush1.msra.mxu0 0.0
  %1486 = vmatprep.subr.mxu0 0.0
  %1487 = vmatpush1.msra.mxu0 0.0
  %1488 = vmatprep.subr.mxu0 0.0
  %1489 = vmatpush1.msra.mxu0 0.0
  %1490 = vmatprep.subr.mxu0 0.0
  %1491 = vmatpush1.msra.mxu0 0.0
  %1492 = vmatprep.mubr.f32.mxu0 0.0
  %1493 = vmatmul.mubr.f32.gmra.mrb[0].mxu0 %v1405
  %v1494 = vpop.f32.mrb[0].mxu0
  %v1495 = vadd.f32 %v1397, %v1494
  %v1496 = vpop.f32.mrb[0].mxu0
  %v1497 = vadd.f32 %v1401, %v1496
  %1498 = vmatprep.mubr.f32.mxu0 0.0
  %1499 = vmatmul.mubr.f32.gmra.mrb[0].mxu0 %v1408
  %v1500 = vpop.f32.mrb[0].mxu0
  %v1501 = vadd.f32 %v1397, %v1500
  %v1502 = vpop.f32.mrb[0].mxu0
  %v1503 = vadd.f32 %v1401, %v1502
  %1504 = vmatprep.mubr.f32.mxu0 0.0
  %1505 = vmatmul.mubr.f32.gmra.mrb[0].mxu0 %v1411
  %v1506 = vpop.f32.mrb[0].mxu0
  %v1507 = vadd.f32 %v1397, %v1506
  %v1508 = vpop.f32.mrb[0].mxu0
  %v1509 = vadd.f32 %v1401, %v1508
  %1510 = vmatprep.mubr.f32.mxu0 0.0
  %1511 = vmatmul.mubr.f32.gmra.mrb[0].mxu0 %v1414
  %v1512 = vpop.f32.mrb[0].mxu0
  %v1513 = vadd.f32 %v1397, %v1512
  %v1514 = vpop.f32.mrb[0].mxu0
  %v1515 = vadd.f32 %v1401, %v1514
  %1516 = vmatprep.mubr.f32.mxu0 0.0
  %1517 = vmatmul.mubr.f32.gmra.mrb[0].mxu0 %v1417
  %v1518 = vpop.f32.mrb[0].mxu0
  %v1519 = vadd.f32 %v1397, %v1518
  %v1520 = vpop.f32.mrb[0].mxu0
  %v1521 = vadd.f32 %v1401, %v1520
  %1522 = vmatprep.mubr.f32.mxu0 0.0
  %1523 = vmatmul.mubr.f32.gmra.mrb[0].mxu0 %v1420
  %v1524 = vpop.f32.mrb[0].mxu0
  %v1525 = vadd.f32 %v1397, %v1524
  %v1526 = vpop.f32.mrb[0].mxu0
  %v1527 = vadd.f32 %v1401, %v1526
  %1528 = vmatprep.mubr.f32.mxu0 0.0
  %1529 = vmatmul.mubr.f32.gmra.mrb[0].mxu0 %v1423
  %v1530 = vpop.f32.mrb[0].mxu0
  %v1531 = vadd.f32 %v1397, %v1530
  %v1532 = vpop.f32.mrb[0].mxu0
  %v1533 = vadd.f32 %v1401, %v1532
  %1534 = vmatprep.mubr.f32.mxu0 0.0
  %1535 = vmatmul.mubr.f32.gmra.mrb[0].mxu0 %v1426
  %v1536 = vpop.f32.mrb[0].mxu0
  %v1537 = vadd.f32 %v1397, %v1536
  %v1538 = vpop.f32.mrb[0].mxu0
  %v1539 = vadd.f32 %v1401, %v1538
  %1540 = vdwg.mxu0
  %1541 = vst [vmem:[#allocation2] sm:$0xff] %v1495
  %1542 = vst [vmem:[#allocation2 + $0x8] sm:$0xff] %v1497
  %1543 = vst [vmem:[#allocation2 + $0x10] sm:$0xff] %v1501
  %1544 = vst [vmem:[#allocation2 + $0x18] sm:$0xff] %v1503
  %1545 = vst [vmem:[#allocation2 + $0x20] sm:$0xff] %v1507
  %1546 = vst [vmem:[#allocation2 + $0x28] sm:$0xff] %v1509
  %1547 = vst [vmem:[#allocation2 + $0x30] sm:$0xff] %v1513
  %1548 = vst [vmem:[#allocation2 + $0x38] sm:$0xff] %v1515
  %1549 = vst [vmem:[#allocation2 + $0x40] sm:$0xff] %v1519
  %1550 = vst [vmem:[#allocation2 + $0x48] sm:$0xff] %v1521
  %1551 = vst [vmem:[#allocation2 + $0x50] sm:$0xff] %v1525
  %1552 = vst [vmem:[#allocation2 + $0x58] sm:$0xff] %v1527
  %1553 = vst [vmem:[#allocation2 + $0x60] sm:$0xff] %v1531
  %1554 = vst [vmem:[#allocation2 + $0x68] sm:$0xff] %v1533
  %1555 = vst [vmem:[#allocation2 + $0x70] sm:$0xff] %v1537
  %1556 = vst [vmem:[#allocation2 + $0x78] sm:$0xff] %v1539
  %v1557 = vld [vmem:[%s225] sm:$0xff]
  %v1558 = vld [vmem:[%s229 + $0x8] sm:$0xff]
  %1559 = vmatprep.subr.mxu0 %v1369
  %1560 = vmatpush1.msra.mxu0 %v1368
  %1561 = vmatprep.subr.mxu0 %v1371
  %1562 = vmatpush1.msra.mxu0 %v1370
  %1563 = vmatprep.subr.mxu0 %v1373
  %1564 = vmatpush1.msra.mxu0 %v1372
  %1565 = vmatprep.subr.mxu0 %v1375
  %1566 = vmatpush1.msra.mxu0 %v1374
  %1567 = vmatprep.subr.mxu0 %v1377
  %1568 = vmatpush1.msra.mxu0 %v1376
  %1569 = vmatprep.subr.mxu0 %v1379
  %1570 = vmatpush1.msra.mxu0 %v1378
  %1571 = vmatprep.subr.mxu0 %v1381
  %1572 = vmatpush1.msra.mxu0 %v1380
  %1573 = vmatprep.subr.mxu0 %v1383
  %1574 = vmatpush1.msra.mxu0 %v1382
  %1575 = vmatprep.subr.mxu0 0.0
  %1576 = vmatpush1.msra.mxu0 0.0
  %1577 = vmatprep.subr.mxu0 0.0
  %1578 = vmatpush1.msra.mxu0 0.0
  %1579 = vmatprep.subr.mxu0 0.0
  %1580 = vmatpush1.msra.mxu0 0.0
  %1581 = vmatprep.subr.mxu0 0.0
  %1582 = vmatpush1.msra.mxu0 0.0
  %1583 = vmatprep.subr.mxu0 0.0
  %1584 = vmatpush1.msra.mxu0 0.0
  %1585 = vmatprep.subr.mxu0 0.0
  %1586 = vmatpush1.msra.mxu0 0.0
  %1587 = vmatprep.subr.mxu0 0.0
  %1588 = vmatpush1.msra.mxu0 0.0
  %1589 = vmatprep.subr.mxu0 0.0
  %1590 = vmatpush1.msra.mxu0 0.0
  %1591 = vmatprep.subr.mxu0 0.0
  %1592 = vmatpush1.msra.mxu0 0.0
  %1593 = vmatprep.subr.mxu0 0.0
  %1594 = vmatpush1.msra.mxu0 0.0
  %1595 = vmatprep.subr.mxu0 0.0
  %1596 = vmatpush1.msra.mxu0 0.0
  %1597 = vmatprep.subr.mxu0 0.0
  %1598 = vmatpush1.msra.mxu0 0.0
  %1599 = vmatprep.subr.mxu0 0.0
  %1600 = vmatpush1.msra.mxu0 0.0
  %1601 = vmatprep.subr.mxu0 0.0
  %1602 = vmatpush1.msra.mxu0 0.0
  %1603 = vmatprep.subr.mxu0 0.0
  %1604 = vmatpush1.msra.mxu0 0.0
  %1605 = vmatprep.subr.mxu0 0.0
  %1606 = vmatpush1.msra.mxu0 0.0
  %1607 = vmatprep.subr.mxu0 0.0
  %1608 = vmatpush1.msra.mxu0 0.0
  %1609 = vmatprep.subr.mxu0 0.0
  %1610 = vmatpush1.msra.mxu0 0.0
  %1611 = vmatprep.subr.mxu0 0.0
  %1612 = vmatpush1.msra.mxu0 0.0
  %1613 = vmatprep.subr.mxu0 0.0
  %1614 = vmatpush1.msra.mxu0 0.0
  %1615 = vmatprep.subr.mxu0 0.0
  %1616 = vmatpush1.msra.mxu0 0.0
  %1617 = vmatprep.subr.mxu0 0.0
  %1618 = vmatpush1.msra.mxu0 0.0
  %1619 = vmatprep.subr.mxu0 0.0
  %1620 = vmatpush1.msra.mxu0 0.0
  %1621 = vmatprep.subr.mxu0 0.0
  %1622 = vmatpush1.msra.mxu0 0.0
  %1623 = vmatprep.mubr.f32.mxu0 0.0
  %1624 = vmatmul.mubr.f32.gmra.mrb[0].mxu0 %v233
  %v1625 = vpop.f32.mrb[0].mxu0
  %v1626 = vadd.f32 0.0, %v1625
  %v1627 = vpop.f32.mrb[0].mxu0
  %v1628 = vadd.f32 0.0, %v1627
  %1629 = vdwg.mxu0
  %v1630 = vadd.f32 %v1557, %v1626
  %v1631 = vadd.f32 %v1558, %v1628
  %v1632 = vxor.u32 %v1630, 2147483648
  %v1633 = vmul.f32 %v1632, 1.442695
  %v1634 = vpow.pop %v1633
  %v1635 = vadd.f32 %v1634, 1.0
  %v1636 = vrcp.pop %v1635
  %v1637 = vmul.f32 1.0, %v1636
  %v1638 = vtanh.pop %v1630
  %v1639 = vmul.f32 %v1637, 0.0
  %1641 = vrot.lane.b32.xlu0 %v1638, 32
  %v1642 = vpop.permute.xlu0 %1641
  %v1644 = vmul.f32 %v1637, %v1642
  %1646 = vrot.lane.b32.xlu0 %v1644, 32
  %v1647 = vpop.permute.xlu0 %1646
  %v1649 = vadd.f32 %v1639, %v1647
  %v1650 = vtanh.pop %v1649
  %1652 = vrot.lane.b32.xlu0 %v1650, 32
  %v1653 = vpop.permute.xlu0 %1652
  %v1655 = vmul.f32 %v1637, %v1653
  %v1656 = vxor.u32 %v1631, 2147483648
  %v1657 = vmul.f32 %v1656, 1.442695
  %v1658 = vpow.pop %v1657
  %v1659 = vadd.f32 %v1658, 1.0
  %v1660 = vrcp.pop %v1659
  %v1661 = vmul.f32 1.0, %v1660
  %v1662 = vtanh.pop %v1631
  %v1663 = vmul.f32 %v1661, 0.0
  %1665 = vrot.lane.b32.xlu0 %v1662, 32
  %v1666 = vpop.permute.xlu0 %1665
  %v1668 = vmul.f32 %v1661, %v1666
  %1670 = vrot.lane.b32.xlu0 %v1668, 32
  %v1671 = vpop.permute.xlu0 %1670
  %v1673 = vadd.f32 %v1663, %v1671
  %v1674 = vtanh.pop %v1673
  %1676 = vrot.lane.b32.xlu0 %v1674, 32
  %v1677 = vpop.permute.xlu0 %1676
  %v1679 = vmul.f32 %v1661, %v1677
  %1681 = vrot.lane.b32.xlu0 %v1655, 64
  %v1682 = vpop.permute.xlu0 %1681
  %1684 = vst.msk [vmem:[#allocation4] sm:$0xff] %vm360, %v1682
  %1686 = vrot.lane.b32.xlu0 %v1679, 96
  %v1687 = vpop.permute.xlu0 %1686
  %s1689 = scalar_lea.vmem [#allocation4], 56
  %1690 = vst.msk [vmem:[%s1689] sm:$0xff] %vm367, %v1687
  %v1691 = vld [vmem:[%s1] sm:$0xff]
  %v1692 = vsel %vm360, %v1682, %v1687
  %v1693 = vmul.f32 %v1691, %v1692
  %v1694 = vadd.f32 %v1693, 0.0
  %v1695 = vld [vmem:[%s371] sm:$0xff]
  %v1696 = vld [vmem:[%s375 + $0x8] sm:$0xff]
  %v1698 = vsel %vm231, %v1692, 0
  %1700 = vmatprep.subr.mxu0 %v1369
  %1701 = vmatpush1.msra.mxu0 %v1368
  %1702 = vmatprep.subr.mxu0 %v1371
  %1703 = vmatpush1.msra.mxu0 %v1370
  %1704 = vmatprep.subr.mxu0 %v1373
  %1705 = vmatpush1.msra.mxu0 %v1372
  %1706 = vmatprep.subr.mxu0 %v1375
  %1707 = vmatpush1.msra.mxu0 %v1374
  %1708 = vmatprep.subr.mxu0 %v1377
  %1709 = vmatpush1.msra.mxu0 %v1376
  %1710 = vmatprep.subr.mxu0 %v1379
  %1711 = vmatpush1.msra.mxu0 %v1378
  %1712 = vmatprep.subr.mxu0 %v1381
  %1713 = vmatpush1.msra.mxu0 %v1380
  %1714 = vmatprep.subr.mxu0 %v1383
  %1715 = vmatpush1.msra.mxu0 %v1382
  %1716 = vmatprep.subr.mxu0 0.0
  %1717 = vmatpush1.msra.mxu0 0.0
  %1718 = vmatprep.subr.mxu0 0.0
  %1719 = vmatpush1.msra.mxu0 0.0
  %1720 = vmatprep.subr.mxu0 0.0
  %1721 = vmatpush1.msra.mxu0 0.0
  %1722 = vmatprep.subr.mxu0 0.0
  %1723 = vmatpush1.msra.mxu0 0.0
  %1724 = vmatprep.subr.mxu0 0.0
  %1725 = vmatpush1.msra.mxu0 0.0
  %1726 = vmatprep.subr.mxu0 0.0
  %1727 = vmatpush1.msra.mxu0 0.0
  %1728 = vmatprep.subr.mxu0 0.0
  %1729 = vmatpush1.msra.mxu0 0.0
  %1730 = vmatprep.subr.mxu0 0.0
  %1731 = vmatpush1.msra.mxu0 0.0
  %1732 = vmatprep.subr.mxu0 0.0
  %1733 = vmatpush1.msra.mxu0 0.0
  %1734 = vmatprep.subr.mxu0 0.0
  %1735 = vmatpush1.msra.mxu0 0.0
  %1736 = vmatprep.subr.mxu0 0.0
  %1737 = vmatpush1.msra.mxu0 0.0
  %1738 = vmatprep.subr.mxu0 0.0
  %1739 = vmatpush1.msra.mxu0 0.0
  %1740 = vmatprep.subr.mxu0 0.0
  %1741 = vmatpush1.msra.mxu0 0.0
  %1742 = vmatprep.subr.mxu0 0.0
  %1743 = vmatpush1.msra.mxu0 0.0
  %1744 = vmatprep.subr.mxu0 0.0
  %1745 = vmatpush1.msra.mxu0 0.0
  %1746 = vmatprep.subr.mxu0 0.0
  %1747 = vmatpush1.msra.mxu0 0.0
  %1748 = vmatprep.subr.mxu0 0.0
  %1749 = vmatpush1.msra.mxu0 0.0
  %1750 = vmatprep.subr.mxu0 0.0
  %1751 = vmatpush1.msra.mxu0 0.0
  %1752 = vmatprep.subr.mxu0 0.0
  %1753 = vmatpush1.msra.mxu0 0.0
  %1754 = vmatprep.subr.mxu0 0.0
  %1755 = vmatpush1.msra.mxu0 0.0
  %1756 = vmatprep.subr.mxu0 0.0
  %1757 = vmatpush1.msra.mxu0 0.0
  %1758 = vmatprep.subr.mxu0 0.0
  %1759 = vmatpush1.msra.mxu0 0.0
  %1760 = vmatprep.subr.mxu0 0.0
  %1761 = vmatpush1.msra.mxu0 0.0
  %1762 = vmatprep.subr.mxu0 0.0
  %1763 = vmatpush1.msra.mxu0 0.0
  %1764 = vmatprep.mubr.f32.mxu0 0.0
  %1765 = vmatmul.mubr.f32.gmra.mrb[0].mxu0 %v1698
  %v1766 = vpop.f32.mrb[0].mxu0
  %v1767 = vadd.f32 0.0, %v1766
  %v1768 = vpop.f32.mrb[0].mxu0
  %v1769 = vadd.f32 0.0, %v1768
  %1770 = vdwg.mxu0
  %v1771 = vadd.f32 %v1695, %v1767
  %v1772 = vadd.f32 %v1696, %v1769
  %v1773 = vxor.u32 %v1771, 2147483648
  %v1774 = vmul.f32 %v1773, 1.442695
  %v1775 = vpow.pop %v1774
  %v1776 = vadd.f32 %v1775, 1.0
  %v1777 = vrcp.pop %v1776
  %v1778 = vmul.f32 1.0, %v1777
  %v1779 = vtanh.pop %v1771
  %v1780 = vmul.f32 %v1778, %v1649
  %1782 = vrot.lane.b32.xlu0 %v1779, 32
  %v1783 = vpop.permute.xlu0 %1782
  %v1785 = vmul.f32 %v1778, %v1783
  %1787 = vrot.lane.b32.xlu0 %v1785, 32
  %v1788 = vpop.permute.xlu0 %1787
  %v1790 = vadd.f32 %v1780, %v1788
  %v1791 = vtanh.pop %v1790
  %1793 = vrot.lane.b32.xlu0 %v1791, 32
  %v1794 = vpop.permute.xlu0 %1793
  %v1796 = vmul.f32 %v1778, %v1794
  %v1797 = vxor.u32 %v1772, 2147483648
  %v1798 = vmul.f32 %v1797, 1.442695
  %v1799 = vpow.pop %v1798
  %v1800 = vadd.f32 %v1799, 1.0
  %v1801 = vrcp.pop %v1800
  %v1802 = vmul.f32 1.0, %v1801
  %v1803 = vtanh.pop %v1772
  %v1804 = vmul.f32 %v1802, %v1673
  %1806 = vrot.lane.b32.xlu0 %v1803, 32
  %v1807 = vpop.permute.xlu0 %1806
  %v1809 = vmul.f32 %v1802, %v1807
  %1811 = vrot.lane.b32.xlu0 %v1809, 32
  %v1812 = vpop.permute.xlu0 %1811
  %v1814 = vadd.f32 %v1804, %v1812
  %v1815 = vtanh.pop %v1814
  %1817 = vrot.lane.b32.xlu0 %v1815, 32
  %v1818 = vpop.permute.xlu0 %1817
  %v1820 = vmul.f32 %v1802, %v1818
  %1822 = vrot.lane.b32.xlu0 %v1796, 64
  %v1823 = vpop.permute.xlu0 %1822
  %s1825 = scalar_lea.vmem [#allocation4], 8
  %1826 = vst.msk [vmem:[%s1825] sm:$0xff] %vm360, %v1823
  %1828 = vrot.lane.b32.xlu0 %v1820, 96
  %v1829 = vpop.permute.xlu0 %1828
  %s1831 = scalar_lea.vmem [#allocation4], 48
  %1832 = vst.msk [vmem:[%s1831] sm:$0xff] %vm367, %v1829
  %s1833 = scalar_lea.vmem %s1, 8
  %v1834 = vld [vmem:[%s1833] sm:$0xff]
  %v1835 = vsel %vm360, %v1823, %v1829
  %v1836 = vmul.f32 %v1834, %v1835
  %v1837 = vadd.f32 %v1694, %v1836
  %v1838 = vld [vmem:[%s516] sm:$0xff]
  %v1839 = vld [vmem:[%s520 + $0x8] sm:$0xff]
  %v1841 = vsel %vm231, %v1835, 0
  %1843 = vmatprep.subr.mxu0 %v1369
  %1844 = vmatpush1.msra.mxu0 %v1368
  %1845 = vmatprep.subr.mxu0 %v1371
  %1846 = vmatpush1.msra.mxu0 %v1370
  %1847 = vmatprep.subr.mxu0 %v1373
  %1848 = vmatpush1.msra.mxu0 %v1372
  %1849 = vmatprep.subr.mxu0 %v1375
  %1850 = vmatpush1.msra.mxu0 %v1374
  %1851 = vmatprep.subr.mxu0 %v1377
  %1852 = vmatpush1.msra.mxu0 %v1376
  %1853 = vmatprep.subr.mxu0 %v1379
  %1854 = vmatpush1.msra.mxu0 %v1378
  %1855 = vmatprep.subr.mxu0 %v1381
  %1856 = vmatpush1.msra.mxu0 %v1380
  %1857 = vmatprep.subr.mxu0 %v1383
  %1858 = vmatpush1.msra.mxu0 %v1382
  %1859 = vmatprep.subr.mxu0 0.0
  %1860 = vmatpush1.msra.mxu0 0.0
  %1861 = vmatprep.subr.mxu0 0.0
  %1862 = vmatpush1.msra.mxu0 0.0
  %1863 = vmatprep.subr.mxu0 0.0
  %1864 = vmatpush1.msra.mxu0 0.0
  %1865 = vmatprep.subr.mxu0 0.0
  %1866 = vmatpush1.msra.mxu0 0.0
  %1867 = vmatprep.subr.mxu0 0.0
  %1868 = vmatpush1.msra.mxu0 0.0
  %1869 = vmatprep.subr.mxu0 0.0
  %1870 = vmatpush1.msra.mxu0 0.0
  %1871 = vmatprep.subr.mxu0 0.0
  %1872 = vmatpush1.msra.mxu0 0.0
  %1873 = vmatprep.subr.mxu0 0.0
  %1874 = vmatpush1.msra.mxu0 0.0
  %1875 = vmatprep.subr.mxu0 0.0
  %1876 = vmatpush1.msra.mxu0 0.0
  %1877 = vmatprep.subr.mxu0 0.0
  %1878 = vmatpush1.msra.mxu0 0.0
  %1879 = vmatprep.subr.mxu0 0.0
  %1880 = vmatpush1.msra.mxu0 0.0
  %1881 = vmatprep.subr.mxu0 0.0
  %1882 = vmatpush1.msra.mxu0 0.0
  %1883 = vmatprep.subr.mxu0 0.0
  %1884 = vmatpush1.msra.mxu0 0.0
  %1885 = vmatprep.subr.mxu0 0.0
  %1886 = vmatpush1.msra.mxu0 0.0
  %1887 = vmatprep.subr.mxu0 0.0
  %1888 = vmatpush1.msra.mxu0 0.0
  %1889 = vmatprep.subr.mxu0 0.0
  %1890 = vmatpush1.msra.mxu0 0.0
  %1891 = vmatprep.subr.mxu0 0.0
  %1892 = vmatpush1.msra.mxu0 0.0
  %1893 = vmatprep.subr.mxu0 0.0
  %1894 = vmatpush1.msra.mxu0 0.0
  %1895 = vmatprep.subr.mxu0 0.0
  %1896 = vmatpush1.msra.mxu0 0.0
  %1897 = vmatprep.subr.mxu0 0.0
  %1898 = vmatpush1.msra.mxu0 0.0
  %1899 = vmatprep.subr.mxu0 0.0
  %1900 = vmatpush1.msra.mxu0 0.0
  %1901 = vmatprep.subr.mxu0 0.0
  %1902 = vmatpush1.msra.mxu0 0.0
  %1903 = vmatprep.subr.mxu0 0.0
  %1904 = vmatpush1.msra.mxu0 0.0
  %1905 = vmatprep.subr.mxu0 0.0
  %1906 = vmatpush1.msra.mxu0 0.0
  %1907 = vmatprep.mubr.f32.mxu0 0.0
  %1908 = vmatmul.mubr.f32.gmra.mrb[0].mxu0 %v1841
  %v1909 = vpop.f32.mrb[0].mxu0
  %v1910 = vadd.f32 0.0, %v1909
  %v1911 = vpop.f32.mrb[0].mxu0
  %v1912 = vadd.f32 0.0, %v1911
  %1913 = vdwg.mxu0
  %v1914 = vadd.f32 %v1838, %v1910
  %v1915 = vadd.f32 %v1839, %v1912
  %v1916 = vxor.u32 %v1914, 2147483648
  %v1917 = vmul.f32 %v1916, 1.442695
  %v1918 = vpow.pop %v1917
  %v1919 = vadd.f32 %v1918, 1.0
  %v1920 = vrcp.pop %v1919
  %v1921 = vmul.f32 1.0, %v1920
  %v1922 = vtanh.pop %v1914
  %v1923 = vmul.f32 %v1921, %v1790
  %1925 = vrot.lane.b32.xlu0 %v1922, 32
  %v1926 = vpop.permute.xlu0 %1925
  %v1928 = vmul.f32 %v1921, %v1926
  %1930 = vrot.lane.b32.xlu0 %v1928, 32
  %v1931 = vpop.permute.xlu0 %1930
  %v1933 = vadd.f32 %v1923, %v1931
  %v1934 = vtanh.pop %v1933
  %1936 = vrot.lane.b32.xlu0 %v1934, 32
  %v1937 = vpop.permute.xlu0 %1936
  %v1939 = vmul.f32 %v1921, %v1937
  %v1940 = vxor.u32 %v1915, 2147483648
  %v1941 = vmul.f32 %v1940, 1.442695
  %v1942 = vpow.pop %v1941
  %v1943 = vadd.f32 %v1942, 1.0
  %v1944 = vrcp.pop %v1943
  %v1945 = vmul.f32 1.0, %v1944
  %v1946 = vtanh.pop %v1915
  %v1947 = vmul.f32 %v1945, %v1814
  %1949 = vrot.lane.b32.xlu0 %v1946, 32
  %v1950 = vpop.permute.xlu0 %1949
  %v1952 = vmul.f32 %v1945, %v1950
  %1954 = vrot.lane.b32.xlu0 %v1952, 32
  %v1955 = vpop.permute.xlu0 %1954
  %v1957 = vadd.f32 %v1947, %v1955
  %v1958 = vtanh.pop %v1957
  %1960 = vrot.lane.b32.xlu0 %v1958, 32
  %v1961 = vpop.permute.xlu0 %1960
  %v1963 = vmul.f32 %v1945, %v1961
  %1965 = vrot.lane.b32.xlu0 %v1939, 64
  %v1966 = vpop.permute.xlu0 %1965
  %s1968 = scalar_lea.vmem [#allocation4], 16
  %1969 = vst.msk [vmem:[%s1968] sm:$0xff] %vm360, %v1966
  %1971 = vrot.lane.b32.xlu0 %v1963, 96
  %v1972 = vpop.permute.xlu0 %1971
  %s1974 = scalar_lea.vmem [#allocation4], 40
  %1975 = vst.msk [vmem:[%s1974] sm:$0xff] %vm367, %v1972
  %s1976 = scalar_lea.vmem %s1, 16
  %v1977 = vld [vmem:[%s1976] sm:$0xff]
  %v1978 = vsel %vm360, %v1966, %v1972
  %v1979 = vmul.f32 %v1977, %v1978
  %v1980 = vadd.f32 %v1837, %v1979
  %v1981 = vld [vmem:[%s661] sm:$0xff]
  %v1982 = vld [vmem:[%s665 + $0x8] sm:$0xff]
  %v1984 = vsel %vm231, %v1978, 0
  %1986 = vmatprep.subr.mxu0 %v1369
  %1987 = vmatpush1.msra.mxu0 %v1368
  %1988 = vmatprep.subr.mxu0 %v1371
  %1989 = vmatpush1.msra.mxu0 %v1370
  %1990 = vmatprep.subr.mxu0 %v1373
  %1991 = vmatpush1.msra.mxu0 %v1372
  %1992 = vmatprep.subr.mxu0 %v1375
  %1993 = vmatpush1.msra.mxu0 %v1374
  %1994 = vmatprep.subr.mxu0 %v1377
  %1995 = vmatpush1.msra.mxu0 %v1376
  %1996 = vmatprep.subr.mxu0 %v1379
  %1997 = vmatpush1.msra.mxu0 %v1378
  %1998 = vmatprep.subr.mxu0 %v1381
  %1999 = vmatpush1.msra.mxu0 %v1380
  %2000 = vmatprep.subr.mxu0 %v1383
  %2001 = vmatpush1.msra.mxu0 %v1382
  %2002 = vmatprep.subr.mxu0 0.0
  %2003 = vmatpush1.msra.mxu0 0.0
  %2004 = vmatprep.subr.mxu0 0.0
  %2005 = vmatpush1.msra.mxu0 0.0
  %2006 = vmatprep.subr.mxu0 0.0
  %2007 = vmatpush1.msra.mxu0 0.0
  %2008 = vmatprep.subr.mxu0 0.0
  %2009 = vmatpush1.msra.mxu0 0.0
  %2010 = vmatprep.subr.mxu0 0.0
  %2011 = vmatpush1.msra.mxu0 0.0
  %2012 = vmatprep.subr.mxu0 0.0
  %2013 = vmatpush1.msra.mxu0 0.0
  %2014 = vmatprep.subr.mxu0 0.0
  %2015 = vmatpush1.msra.mxu0 0.0
  %2016 = vmatprep.subr.mxu0 0.0
  %2017 = vmatpush1.msra.mxu0 0.0
  %2018 = vmatprep.subr.mxu0 0.0
  %2019 = vmatpush1.msra.mxu0 0.0
  %2020 = vmatprep.subr.mxu0 0.0
  %2021 = vmatpush1.msra.mxu0 0.0
  %2022 = vmatprep.subr.mxu0 0.0
  %2023 = vmatpush1.msra.mxu0 0.0
  %2024 = vmatprep.subr.mxu0 0.0
  %2025 = vmatpush1.msra.mxu0 0.0
  %2026 = vmatprep.subr.mxu0 0.0
  %2027 = vmatpush1.msra.mxu0 0.0
  %2028 = vmatprep.subr.mxu0 0.0
  %2029 = vmatpush1.msra.mxu0 0.0
  %2030 = vmatprep.subr.mxu0 0.0
  %2031 = vmatpush1.msra.mxu0 0.0
  %2032 = vmatprep.subr.mxu0 0.0
  %2033 = vmatpush1.msra.mxu0 0.0
  %2034 = vmatprep.subr.mxu0 0.0
  %2035 = vmatpush1.msra.mxu0 0.0
  %2036 = vmatprep.subr.mxu0 0.0
  %2037 = vmatpush1.msra.mxu0 0.0
  %2038 = vmatprep.subr.mxu0 0.0
  %2039 = vmatpush1.msra.mxu0 0.0
  %2040 = vmatprep.subr.mxu0 0.0
  %2041 = vmatpush1.msra.mxu0 0.0
  %2042 = vmatprep.subr.mxu0 0.0
  %2043 = vmatpush1.msra.mxu0 0.0
  %2044 = vmatprep.subr.mxu0 0.0
  %2045 = vmatpush1.msra.mxu0 0.0
  %2046 = vmatprep.subr.mxu0 0.0
  %2047 = vmatpush1.msra.mxu0 0.0
  %2048 = vmatprep.subr.mxu0 0.0
  %2049 = vmatpush1.msra.mxu0 0.0
  %2050 = vmatprep.mubr.f32.mxu0 0.0
  %2051 = vmatmul.mubr.f32.gmra.mrb[0].mxu0 %v1984
  %v2052 = vpop.f32.mrb[0].mxu0
  %v2053 = vadd.f32 0.0, %v2052
  %v2054 = vpop.f32.mrb[0].mxu0
  %v2055 = vadd.f32 0.0, %v2054
  %2056 = vdwg.mxu0
  %v2057 = vadd.f32 %v1981, %v2053
  %v2058 = vadd.f32 %v1982, %v2055
  %v2059 = vxor.u32 %v2057, 2147483648
  %v2060 = vmul.f32 %v2059, 1.442695
  %v2061 = vpow.pop %v2060
  %v2062 = vadd.f32 %v2061, 1.0
  %v2063 = vrcp.pop %v2062
  %v2064 = vmul.f32 1.0, %v2063
  %v2065 = vtanh.pop %v2057
  %v2066 = vmul.f32 %v2064, %v1933
  %2068 = vrot.lane.b32.xlu0 %v2065, 32
  %v2069 = vpop.permute.xlu0 %2068
  %v2071 = vmul.f32 %v2064, %v2069
  %2073 = vrot.lane.b32.xlu0 %v2071, 32
  %v2074 = vpop.permute.xlu0 %2073
  %v2076 = vadd.f32 %v2066, %v2074
  %v2077 = vtanh.pop %v2076
  %2079 = vrot.lane.b32.xlu0 %v2077, 32
  %v2080 = vpop.permute.xlu0 %2079
  %v2082 = vmul.f32 %v2064, %v2080
  %v2083 = vxor.u32 %v2058, 2147483648
  %v2084 = vmul.f32 %v2083, 1.442695
  %v2085 = vpow.pop %v2084
  %v2086 = vadd.f32 %v2085, 1.0
  %v2087 = vrcp.pop %v2086
  %v2088 = vmul.f32 1.0, %v2087
  %v2089 = vtanh.pop %v2058
  %v2090 = vmul.f32 %v2088, %v1957
  %2092 = vrot.lane.b32.xlu0 %v2089, 32
  %v2093 = vpop.permute.xlu0 %2092
  %v2095 = vmul.f32 %v2088, %v2093
  %2097 = vrot.lane.b32.xlu0 %v2095, 32
  %v2098 = vpop.permute.xlu0 %2097
  %v2100 = vadd.f32 %v2090, %v2098
  %v2101 = vtanh.pop %v2100
  %2103 = vrot.lane.b32.xlu0 %v2101, 32
  %v2104 = vpop.permute.xlu0 %2103
  %v2106 = vmul.f32 %v2088, %v2104
  %2108 = vrot.lane.b32.xlu0 %v2082, 64
  %v2109 = vpop.permute.xlu0 %2108
  %s2111 = scalar_lea.vmem [#allocation4], 24
  %2112 = vst.msk [vmem:[%s2111] sm:$0xff] %vm360, %v2109
  %2114 = vrot.lane.b32.xlu0 %v2106, 96
  %v2115 = vpop.permute.xlu0 %2114
  %s2117 = scalar_lea.vmem [#allocation4], 32
  %2118 = vst.msk [vmem:[%s2117] sm:$0xff] %vm367, %v2115
  %s2119 = scalar_lea.vmem %s1, 24
  %v2120 = vld [vmem:[%s2119] sm:$0xff]
  %v2121 = vsel %vm360, %v2109, %v2115
  %v2122 = vmul.f32 %v2120, %v2121
  %v2123 = vadd.f32 %v1980, %v2122
  %v2124 = vld [vmem:[%s665] sm:$0xff]
  %v2125 = vld [vmem:[%s661 + $0x8] sm:$0xff]
  %v2127 = vsel %vm231, %v2121, 0
  %2129 = vmatprep.subr.mxu0 %v1369
  %2130 = vmatpush1.msra.mxu0 %v1368
  %2131 = vmatprep.subr.mxu0 %v1371
  %2132 = vmatpush1.msra.mxu0 %v1370
  %2133 = vmatprep.subr.mxu0 %v1373
  %2134 = vmatpush1.msra.mxu0 %v1372
  %2135 = vmatprep.subr.mxu0 %v1375
  %2136 = vmatpush1.msra.mxu0 %v1374
  %2137 = vmatprep.subr.mxu0 %v1377
  %2138 = vmatpush1.msra.mxu0 %v1376
  %2139 = vmatprep.subr.mxu0 %v1379
  %2140 = vmatpush1.msra.mxu0 %v1378
  %2141 = vmatprep.subr.mxu0 %v1381
  %2142 = vmatpush1.msra.mxu0 %v1380
  %2143 = vmatprep.subr.mxu0 %v1383
  %2144 = vmatpush1.msra.mxu0 %v1382
  %2145 = vmatprep.subr.mxu0 0.0
  %2146 = vmatpush1.msra.mxu0 0.0
  %2147 = vmatprep.subr.mxu0 0.0
  %2148 = vmatpush1.msra.mxu0 0.0
  %2149 = vmatprep.subr.mxu0 0.0
  %2150 = vmatpush1.msra.mxu0 0.0
  %2151 = vmatprep.subr.mxu0 0.0
  %2152 = vmatpush1.msra.mxu0 0.0
  %2153 = vmatprep.subr.mxu0 0.0
  %2154 = vmatpush1.msra.mxu0 0.0
  %2155 = vmatprep.subr.mxu0 0.0
  %2156 = vmatpush1.msra.mxu0 0.0
  %2157 = vmatprep.subr.mxu0 0.0
  %2158 = vmatpush1.msra.mxu0 0.0
  %2159 = vmatprep.subr.mxu0 0.0
  %2160 = vmatpush1.msra.mxu0 0.0
  %2161 = vmatprep.subr.mxu0 0.0
  %2162 = vmatpush1.msra.mxu0 0.0
  %2163 = vmatprep.subr.mxu0 0.0
  %2164 = vmatpush1.msra.mxu0 0.0
  %2165 = vmatprep.subr.mxu0 0.0
  %2166 = vmatpush1.msra.mxu0 0.0
  %2167 = vmatprep.subr.mxu0 0.0
  %2168 = vmatpush1.msra.mxu0 0.0
  %2169 = vmatprep.subr.mxu0 0.0
  %2170 = vmatpush1.msra.mxu0 0.0
  %2171 = vmatprep.subr.mxu0 0.0
  %2172 = vmatpush1.msra.mxu0 0.0
  %2173 = vmatprep.subr.mxu0 0.0
  %2174 = vmatpush1.msra.mxu0 0.0
  %2175 = vmatprep.subr.mxu0 0.0
  %2176 = vmatpush1.msra.mxu0 0.0
  %2177 = vmatprep.subr.mxu0 0.0
  %2178 = vmatpush1.msra.mxu0 0.0
  %2179 = vmatprep.subr.mxu0 0.0
  %2180 = vmatpush1.msra.mxu0 0.0
  %2181 = vmatprep.subr.mxu0 0.0
  %2182 = vmatpush1.msra.mxu0 0.0
  %2183 = vmatprep.subr.mxu0 0.0
  %2184 = vmatpush1.msra.mxu0 0.0
  %2185 = vmatprep.subr.mxu0 0.0
  %2186 = vmatpush1.msra.mxu0 0.0
  %2187 = vmatprep.subr.mxu0 0.0
  %2188 = vmatpush1.msra.mxu0 0.0
  %2189 = vmatprep.subr.mxu0 0.0
  %2190 = vmatpush1.msra.mxu0 0.0
  %2191 = vmatprep.subr.mxu0 0.0
  %2192 = vmatpush1.msra.mxu0 0.0
  %2193 = vmatprep.mubr.f32.mxu0 0.0
  %2194 = vmatmul.mubr.f32.gmra.mrb[0].mxu0 %v2127
  %v2195 = vpop.f32.mrb[0].mxu0
  %v2196 = vadd.f32 0.0, %v2195
  %v2197 = vpop.f32.mrb[0].mxu0
  %v2198 = vadd.f32 0.0, %v2197
  %2199 = vdwg.mxu0
  %v2200 = vadd.f32 %v2124, %v2196
  %v2201 = vadd.f32 %v2125, %v2198
  %v2202 = vxor.u32 %v2200, 2147483648
  %v2203 = vmul.f32 %v2202, 1.442695
  %v2204 = vpow.pop %v2203
  %v2205 = vadd.f32 %v2204, 1.0
  %v2206 = vrcp.pop %v2205
  %v2207 = vmul.f32 1.0, %v2206
  %v2208 = vtanh.pop %v2200
  %v2209 = vmul.f32 %v2207, %v2076
  %2211 = vrot.lane.b32.xlu0 %v2208, 32
  %v2212 = vpop.permute.xlu0 %2211
  %v2214 = vmul.f32 %v2207, %v2212
  %2216 = vrot.lane.b32.xlu0 %v2214, 32
  %v2217 = vpop.permute.xlu0 %2216
  %v2219 = vadd.f32 %v2209, %v2217
  %v2220 = vtanh.pop %v2219
  %2222 = vrot.lane.b32.xlu0 %v2220, 32
  %v2223 = vpop.permute.xlu0 %2222
  %v2225 = vmul.f32 %v2207, %v2223
  %v2226 = vxor.u32 %v2201, 2147483648
  %v2227 = vmul.f32 %v2226, 1.442695
  %v2228 = vpow.pop %v2227
  %v2229 = vadd.f32 %v2228, 1.0
  %v2230 = vrcp.pop %v2229
  %v2231 = vmul.f32 1.0, %v2230
  %v2232 = vtanh.pop %v2201
  %v2233 = vmul.f32 %v2231, %v2100
  %2235 = vrot.lane.b32.xlu0 %v2232, 32
  %v2236 = vpop.permute.xlu0 %2235
  %v2238 = vmul.f32 %v2231, %v2236
  %2240 = vrot.lane.b32.xlu0 %v2238, 32
  %v2241 = vpop.permute.xlu0 %2240
  %v2243 = vadd.f32 %v2233, %v2241
  %v2244 = vtanh.pop %v2243
  %2246 = vrot.lane.b32.xlu0 %v2244, 32
  %v2247 = vpop.permute.xlu0 %2246
  %v2249 = vmul.f32 %v2231, %v2247
  %2251 = vrot.lane.b32.xlu0 %v2225, 64
  %v2252 = vpop.permute.xlu0 %2251
  %2254 = vst.msk [vmem:[%s2117] sm:$0xff] %vm360, %v2252
  %2256 = vrot.lane.b32.xlu0 %v2249, 96
  %v2257 = vpop.permute.xlu0 %2256
  %2259 = vst.msk [vmem:[%s2111] sm:$0xff] %vm367, %v2257
  %s2260 = scalar_lea.vmem %s1, 32
  %v2261 = vld [vmem:[%s2260] sm:$0xff]
  %v2262 = vsel %vm360, %v2252, %v2257
  %v2263 = vmul.f32 %v2261, %v2262
  %v2264 = vadd.f32 %v2123, %v2263
  %v2265 = vld [vmem:[%s520] sm:$0xff]
  %v2266 = vld [vmem:[%s516 + $0x8] sm:$0xff]
  %v2268 = vsel %vm231, %v2262, 0
  %2270 = vmatprep.subr.mxu0 %v1369
  %2271 = vmatpush1.msra.mxu0 %v1368
  %2272 = vmatprep.subr.mxu0 %v1371
  %2273 = vmatpush1.msra.mxu0 %v1370
  %2274 = vmatprep.subr.mxu0 %v1373
  %2275 = vmatpush1.msra.mxu0 %v1372
  %2276 = vmatprep.subr.mxu0 %v1375
  %2277 = vmatpush1.msra.mxu0 %v1374
  %2278 = vmatprep.subr.mxu0 %v1377
  %2279 = vmatpush1.msra.mxu0 %v1376
  %2280 = vmatprep.subr.mxu0 %v1379
  %2281 = vmatpush1.msra.mxu0 %v1378
  %2282 = vmatprep.subr.mxu0 %v1381
  %2283 = vmatpush1.msra.mxu0 %v1380
  %2284 = vmatprep.subr.mxu0 %v1383
  %2285 = vmatpush1.msra.mxu0 %v1382
  %2286 = vmatprep.subr.mxu0 0.0
  %2287 = vmatpush1.msra.mxu0 0.0
  %2288 = vmatprep.subr.mxu0 0.0
  %2289 = vmatpush1.msra.mxu0 0.0
  %2290 = vmatprep.subr.mxu0 0.0
  %2291 = vmatpush1.msra.mxu0 0.0
  %2292 = vmatprep.subr.mxu0 0.0
  %2293 = vmatpush1.msra.mxu0 0.0
  %2294 = vmatprep.subr.mxu0 0.0
  %2295 = vmatpush1.msra.mxu0 0.0
  %2296 = vmatprep.subr.mxu0 0.0
  %2297 = vmatpush1.msra.mxu0 0.0
  %2298 = vmatprep.subr.mxu0 0.0
  %2299 = vmatpush1.msra.mxu0 0.0
  %2300 = vmatprep.subr.mxu0 0.0
  %2301 = vmatpush1.msra.mxu0 0.0
  %2302 = vmatprep.subr.mxu0 0.0
  %2303 = vmatpush1.msra.mxu0 0.0
  %2304 = vmatprep.subr.mxu0 0.0
  %2305 = vmatpush1.msra.mxu0 0.0
  %2306 = vmatprep.subr.mxu0 0.0
  %2307 = vmatpush1.msra.mxu0 0.0
  %2308 = vmatprep.subr.mxu0 0.0
  %2309 = vmatpush1.msra.mxu0 0.0
  %2310 = vmatprep.subr.mxu0 0.0
  %2311 = vmatpush1.msra.mxu0 0.0
  %2312 = vmatprep.subr.mxu0 0.0
  %2313 = vmatpush1.msra.mxu0 0.0
  %2314 = vmatprep.subr.mxu0 0.0
  %2315 = vmatpush1.msra.mxu0 0.0
  %2316 = vmatprep.subr.mxu0 0.0
  %2317 = vmatpush1.msra.mxu0 0.0
  %2318 = vmatprep.subr.mxu0 0.0
  %2319 = vmatpush1.msra.mxu0 0.0
  %2320 = vmatprep.subr.mxu0 0.0
  %2321 = vmatpush1.msra.mxu0 0.0
  %2322 = vmatprep.subr.mxu0 0.0
  %2323 = vmatpush1.msra.mxu0 0.0
  %2324 = vmatprep.subr.mxu0 0.0
  %2325 = vmatpush1.msra.mxu0 0.0
  %2326 = vmatprep.subr.mxu0 0.0
  %2327 = vmatpush1.msra.mxu0 0.0
  %2328 = vmatprep.subr.mxu0 0.0
  %2329 = vmatpush1.msra.mxu0 0.0
  %2330 = vmatprep.subr.mxu0 0.0
  %2331 = vmatpush1.msra.mxu0 0.0
  %2332 = vmatprep.subr.mxu0 0.0
  %2333 = vmatpush1.msra.mxu0 0.0
  %2334 = vmatprep.mubr.f32.mxu0 0.0
  %2335 = vmatmul.mubr.f32.gmra.mrb[0].mxu0 %v2268
  %v2336 = vpop.f32.mrb[0].mxu0
  %v2337 = vadd.f32 0.0, %v2336
  %v2338 = vpop.f32.mrb[0].mxu0
  %v2339 = vadd.f32 0.0, %v2338
  %2340 = vdwg.mxu0
  %v2341 = vadd.f32 %v2265, %v2337
  %v2342 = vadd.f32 %v2266, %v2339
  %v2343 = vxor.u32 %v2341, 2147483648
  %v2344 = vmul.f32 %v2343, 1.442695
  %v2345 = vpow.pop %v2344
  %v2346 = vadd.f32 %v2345, 1.0
  %v2347 = vrcp.pop %v2346
  %v2348 = vmul.f32 1.0, %v2347
  %v2349 = vtanh.pop %v2341
  %v2350 = vmul.f32 %v2348, %v2219
  %2352 = vrot.lane.b32.xlu0 %v2349, 32
  %v2353 = vpop.permute.xlu0 %2352
  %v2355 = vmul.f32 %v2348, %v2353
  %2357 = vrot.lane.b32.xlu0 %v2355, 32
  %v2358 = vpop.permute.xlu0 %2357
  %v2360 = vadd.f32 %v2350, %v2358
  %v2361 = vtanh.pop %v2360
  %2363 = vrot.lane.b32.xlu0 %v2361, 32
  %v2364 = vpop.permute.xlu0 %2363
  %v2366 = vmul.f32 %v2348, %v2364
  %v2367 = vxor.u32 %v2342, 2147483648
  %v2368 = vmul.f32 %v2367, 1.442695
  %v2369 = vpow.pop %v2368
  %v2370 = vadd.f32 %v2369, 1.0
  %v2371 = vrcp.pop %v2370
  %v2372 = vmul.f32 1.0, %v2371
  %v2373 = vtanh.pop %v2342
  %v2374 = vmul.f32 %v2372, %v2243
  %2376 = vrot.lane.b32.xlu0 %v2373, 32
  %v2377 = vpop.permute.xlu0 %2376
  %v2379 = vmul.f32 %v2372, %v2377
  %2381 = vrot.lane.b32.xlu0 %v2379, 32
  %v2382 = vpop.permute.xlu0 %2381
  %v2384 = vadd.f32 %v2374, %v2382
  %v2385 = vtanh.pop %v2384
  %2387 = vrot.lane.b32.xlu0 %v2385, 32
  %v2388 = vpop.permute.xlu0 %2387
  %v2390 = vmul.f32 %v2372, %v2388
  %2392 = vrot.lane.b32.xlu0 %v2366, 64
  %v2393 = vpop.permute.xlu0 %2392
  %2395 = vst.msk [vmem:[%s1974] sm:$0xff] %vm360, %v2393
  %2397 = vrot.lane.b32.xlu0 %v2390, 96
  %v2398 = vpop.permute.xlu0 %2397
  %2400 = vst.msk [vmem:[%s1968] sm:$0xff] %vm367, %v2398
  %s2401 = scalar_lea.vmem %s1, 40
  %v2402 = vld [vmem:[%s2401] sm:$0xff]
  %v2403 = vsel %vm360, %v2393, %v2398
  %v2404 = vmul.f32 %v2402, %v2403
  %v2405 = vadd.f32 %v2264, %v2404
  %v2406 = vld [vmem:[%s375] sm:$0xff]
  %v2407 = vld [vmem:[%s371 + $0x8] sm:$0xff]
  %v2409 = vsel %vm231, %v2403, 0
  %2411 = vmatprep.subr.mxu0 %v1369
  %2412 = vmatpush1.msra.mxu0 %v1368
  %2413 = vmatprep.subr.mxu0 %v1371
  %2414 = vmatpush1.msra.mxu0 %v1370
  %2415 = vmatprep.subr.mxu0 %v1373
  %2416 = vmatpush1.msra.mxu0 %v1372
  %2417 = vmatprep.subr.mxu0 %v1375
  %2418 = vmatpush1.msra.mxu0 %v1374
  %2419 = vmatprep.subr.mxu0 %v1377
  %2420 = vmatpush1.msra.mxu0 %v1376
  %2421 = vmatprep.subr.mxu0 %v1379
  %2422 = vmatpush1.msra.mxu0 %v1378
  %2423 = vmatprep.subr.mxu0 %v1381
  %2424 = vmatpush1.msra.mxu0 %v1380
  %2425 = vmatprep.subr.mxu0 %v1383
  %2426 = vmatpush1.msra.mxu0 %v1382
  %2427 = vmatprep.subr.mxu0 0.0
  %2428 = vmatpush1.msra.mxu0 0.0
  %2429 = vmatprep.subr.mxu0 0.0
  %2430 = vmatpush1.msra.mxu0 0.0
  %2431 = vmatprep.subr.mxu0 0.0
  %2432 = vmatpush1.msra.mxu0 0.0
  %2433 = vmatprep.subr.mxu0 0.0
  %2434 = vmatpush1.msra.mxu0 0.0
  %2435 = vmatprep.subr.mxu0 0.0
  %2436 = vmatpush1.msra.mxu0 0.0
  %2437 = vmatprep.subr.mxu0 0.0
  %2438 = vmatpush1.msra.mxu0 0.0
  %2439 = vmatprep.subr.mxu0 0.0
  %2440 = vmatpush1.msra.mxu0 0.0
  %2441 = vmatprep.subr.mxu0 0.0
  %2442 = vmatpush1.msra.mxu0 0.0
  %2443 = vmatprep.subr.mxu0 0.0
  %2444 = vmatpush1.msra.mxu0 0.0
  %2445 = vmatprep.subr.mxu0 0.0
  %2446 = vmatpush1.msra.mxu0 0.0
  %2447 = vmatprep.subr.mxu0 0.0
  %2448 = vmatpush1.msra.mxu0 0.0
  %2449 = vmatprep.subr.mxu0 0.0
  %2450 = vmatpush1.msra.mxu0 0.0
  %2451 = vmatprep.subr.mxu0 0.0
  %2452 = vmatpush1.msra.mxu0 0.0
  %2453 = vmatprep.subr.mxu0 0.0
  %2454 = vmatpush1.msra.mxu0 0.0
  %2455 = vmatprep.subr.mxu0 0.0
  %2456 = vmatpush1.msra.mxu0 0.0
  %2457 = vmatprep.subr.mxu0 0.0
  %2458 = vmatpush1.msra.mxu0 0.0
  %2459 = vmatprep.subr.mxu0 0.0
  %2460 = vmatpush1.msra.mxu0 0.0
  %2461 = vmatprep.subr.mxu0 0.0
  %2462 = vmatpush1.msra.mxu0 0.0
  %2463 = vmatprep.subr.mxu0 0.0
  %2464 = vmatpush1.msra.mxu0 0.0
  %2465 = vmatprep.subr.mxu0 0.0
  %2466 = vmatpush1.msra.mxu0 0.0
  %2467 = vmatprep.subr.mxu0 0.0
  %2468 = vmatpush1.msra.mxu0 0.0
  %2469 = vmatprep.subr.mxu0 0.0
  %2470 = vmatpush1.msra.mxu0 0.0
  %2471 = vmatprep.subr.mxu0 0.0
  %2472 = vmatpush1.msra.mxu0 0.0
  %2473 = vmatprep.subr.mxu0 0.0
  %2474 = vmatpush1.msra.mxu0 0.0
  %2475 = vmatprep.mubr.f32.mxu0 0.0
  %2476 = vmatmul.mubr.f32.gmra.mrb[0].mxu0 %v2409
  %v2477 = vpop.f32.mrb[0].mxu0
  %v2478 = vadd.f32 0.0, %v2477
  %v2479 = vpop.f32.mrb[0].mxu0
  %v2480 = vadd.f32 0.0, %v2479
  %2481 = vdwg.mxu0
  %v2482 = vadd.f32 %v2406, %v2478
  %v2483 = vadd.f32 %v2407, %v2480
  %v2484 = vxor.u32 %v2482, 2147483648
  %v2485 = vmul.f32 %v2484, 1.442695
  %v2486 = vpow.pop %v2485
  %v2487 = vadd.f32 %v2486, 1.0
  %v2488 = vrcp.pop %v2487
  %v2489 = vmul.f32 1.0, %v2488
  %v2490 = vtanh.pop %v2482
  %v2491 = vmul.f32 %v2489, %v2360
  %2493 = vrot.lane.b32.xlu0 %v2490, 32
  %v2494 = vpop.permute.xlu0 %2493
  %v2496 = vmul.f32 %v2489, %v2494
  %2498 = vrot.lane.b32.xlu0 %v2496, 32
  %v2499 = vpop.permute.xlu0 %2498
  %v2501 = vadd.f32 %v2491, %v2499
  %v2502 = vtanh.pop %v2501
  %2504 = vrot.lane.b32.xlu0 %v2502, 32
  %v2505 = vpop.permute.xlu0 %2504
  %v2507 = vmul.f32 %v2489, %v2505
  %v2508 = vxor.u32 %v2483, 2147483648
  %v2509 = vmul.f32 %v2508, 1.442695
  %v2510 = vpow.pop %v2509
  %v2511 = vadd.f32 %v2510, 1.0
  %v2512 = vrcp.pop %v2511
  %v2513 = vmul.f32 1.0, %v2512
  %v2514 = vtanh.pop %v2483
  %v2515 = vmul.f32 %v2513, %v2384
  %2517 = vrot.lane.b32.xlu0 %v2514, 32
  %v2518 = vpop.permute.xlu0 %2517
  %v2520 = vmul.f32 %v2513, %v2518
  %2522 = vrot.lane.b32.xlu0 %v2520, 32
  %v2523 = vpop.permute.xlu0 %2522
  %v2525 = vadd.f32 %v2515, %v2523
  %v2526 = vtanh.pop %v2525
  %2528 = vrot.lane.b32.xlu0 %v2526, 32
  %v2529 = vpop.permute.xlu0 %2528
  %v2531 = vmul.f32 %v2513, %v2529
  %2533 = vrot.lane.b32.xlu0 %v2507, 64
  %v2534 = vpop.permute.xlu0 %2533
  %2536 = vst.msk [vmem:[%s1831] sm:$0xff] %vm360, %v2534
  %2538 = vrot.lane.b32.xlu0 %v2531, 96
  %v2539 = vpop.permute.xlu0 %2538
  %2541 = vst.msk [vmem:[%s1825] sm:$0xff] %vm367, %v2539
  %s2542 = scalar_lea.vmem %s1, 48
  %v2543 = vld [vmem:[%s2542] sm:$0xff]
  %v2544 = vsel %vm360, %v2534, %v2539
  %v2545 = vmul.f32 %v2543, %v2544
  %v2546 = vadd.f32 %v2405, %v2545
  %v2547 = vld [vmem:[%s229] sm:$0xff]
  %v2548 = vld [vmem:[%s225 + $0x8] sm:$0xff]
  %v2550 = vsel %vm231, %v2544, 0
  %2552 = vmatprep.subr.mxu0 %v1369
  %2553 = vmatpush1.msra.mxu0 %v1368
  %2554 = vmatprep.subr.mxu0 %v1371
  %2555 = vmatpush1.msra.mxu0 %v1370
  %2556 = vmatprep.subr.mxu0 %v1373
  %2557 = vmatpush1.msra.mxu0 %v1372
  %2558 = vmatprep.subr.mxu0 %v1375
  %2559 = vmatpush1.msra.mxu0 %v1374
  %2560 = vmatprep.subr.mxu0 %v1377
  %2561 = vmatpush1.msra.mxu0 %v1376
  %2562 = vmatprep.subr.mxu0 %v1379
  %2563 = vmatpush1.msra.mxu0 %v1378
  %2564 = vmatprep.subr.mxu0 %v1381
  %2565 = vmatpush1.msra.mxu0 %v1380
  %2566 = vmatprep.subr.mxu0 %v1383
  %2567 = vmatpush1.msra.mxu0 %v1382
  %2568 = vmatprep.subr.mxu0 0.0
  %2569 = vmatpush1.msra.mxu0 0.0
  %2570 = vmatprep.subr.mxu0 0.0
  %2571 = vmatpush1.msra.mxu0 0.0
  %2572 = vmatprep.subr.mxu0 0.0
  %2573 = vmatpush1.msra.mxu0 0.0
  %2574 = vmatprep.subr.mxu0 0.0
  %2575 = vmatpush1.msra.mxu0 0.0
  %2576 = vmatprep.subr.mxu0 0.0
  %2577 = vmatpush1.msra.mxu0 0.0
  %2578 = vmatprep.subr.mxu0 0.0
  %2579 = vmatpush1.msra.mxu0 0.0
  %2580 = vmatprep.subr.mxu0 0.0
  %2581 = vmatpush1.msra.mxu0 0.0
  %2582 = vmatprep.subr.mxu0 0.0
  %2583 = vmatpush1.msra.mxu0 0.0
  %2584 = vmatprep.subr.mxu0 0.0
  %2585 = vmatpush1.msra.mxu0 0.0
  %2586 = vmatprep.subr.mxu0 0.0
  %2587 = vmatpush1.msra.mxu0 0.0
  %2588 = vmatprep.subr.mxu0 0.0
  %2589 = vmatpush1.msra.mxu0 0.0
  %2590 = vmatprep.subr.mxu0 0.0
  %2591 = vmatpush1.msra.mxu0 0.0
  %2592 = vmatprep.subr.mxu0 0.0
  %2593 = vmatpush1.msra.mxu0 0.0
  %2594 = vmatprep.subr.mxu0 0.0
  %2595 = vmatpush1.msra.mxu0 0.0
  %2596 = vmatprep.subr.mxu0 0.0
  %2597 = vmatpush1.msra.mxu0 0.0
  %2598 = vmatprep.subr.mxu0 0.0
  %2599 = vmatpush1.msra.mxu0 0.0
  %2600 = vmatprep.subr.mxu0 0.0
  %2601 = vmatpush1.msra.mxu0 0.0
  %2602 = vmatprep.subr.mxu0 0.0
  %2603 = vmatpush1.msra.mxu0 0.0
  %2604 = vmatprep.subr.mxu0 0.0
  %2605 = vmatpush1.msra.mxu0 0.0
  %2606 = vmatprep.subr.mxu0 0.0
  %2607 = vmatpush1.msra.mxu0 0.0
  %2608 = vmatprep.subr.mxu0 0.0
  %2609 = vmatpush1.msra.mxu0 0.0
  %2610 = vmatprep.subr.mxu0 0.0
  %2611 = vmatpush1.msra.mxu0 0.0
  %2612 = vmatprep.subr.mxu0 0.0
  %2613 = vmatpush1.msra.mxu0 0.0
  %2614 = vmatprep.subr.mxu0 0.0
  %2615 = vmatpush1.msra.mxu0 0.0
  %2616 = vmatprep.mubr.f32.mxu0 0.0
  %2617 = vmatmul.mubr.f32.gmra.mrb[0].mxu0 %v2550
  %v2618 = vpop.f32.mrb[0].mxu0
  %v2619 = vadd.f32 0.0, %v2618
  %v2620 = vpop.f32.mrb[0].mxu0
  %v2621 = vadd.f32 0.0, %v2620
  %2622 = vdwg.mxu0
  %v2623 = vadd.f32 %v2547, %v2619
  %v2624 = vadd.f32 %v2548, %v2621
  %v2625 = vxor.u32 %v2623, 2147483648
  %v2626 = vmul.f32 %v2625, 1.442695
  %v2627 = vpow.pop %v2626
  %v2628 = vadd.f32 %v2627, 1.0
  %v2629 = vrcp.pop %v2628
  %v2630 = vmul.f32 1.0, %v2629
  %v2631 = vtanh.pop %v2623
  %v2632 = vmul.f32 %v2630, %v2501
  %2634 = vrot.lane.b32.xlu0 %v2631, 32
  %v2635 = vpop.permute.xlu0 %2634
  %v2637 = vmul.f32 %v2630, %v2635
  %2639 = vrot.lane.b32.xlu0 %v2637, 32
  %v2640 = vpop.permute.xlu0 %2639
  %v2642 = vadd.f32 %v2632, %v2640
  %v2643 = vtanh.pop %v2642
  %2645 = vrot.lane.b32.xlu0 %v2643, 32
  %v2646 = vpop.permute.xlu0 %2645
  %v2648 = vmul.f32 %v2630, %v2646
  %v2649 = vxor.u32 %v2624, 2147483648
  %v2650 = vmul.f32 %v2649, 1.442695
  %v2651 = vpow.pop %v2650
  %v2652 = vadd.f32 %v2651, 1.0
  %v2653 = vrcp.pop %v2652
  %v2654 = vmul.f32 1.0, %v2653
  %v2655 = vtanh.pop %v2624
  %v2656 = vmul.f32 %v2654, %v2525
  %2658 = vrot.lane.b32.xlu0 %v2655, 32
  %v2659 = vpop.permute.xlu0 %2658
  %v2661 = vmul.f32 %v2654, %v2659
  %2663 = vrot.lane.b32.xlu0 %v2661, 32
  %v2664 = vpop.permute.xlu0 %2663
  %v2666 = vadd.f32 %v2656, %v2664
  %v2667 = vtanh.pop %v2666
  %2669 = vrot.lane.b32.xlu0 %v2667, 32
  %v2670 = vpop.permute.xlu0 %2669
  %v2672 = vmul.f32 %v2654, %v2670
  %2674 = vrot.lane.b32.xlu0 %v2648, 64
  %v2675 = vpop.permute.xlu0 %2674
  %2677 = vst.msk [vmem:[%s1689] sm:$0xff] %vm360, %v2675
  %2679 = vrot.lane.b32.xlu0 %v2672, 96
  %v2680 = vpop.permute.xlu0 %2679
  %2682 = vst.msk [vmem:[#allocation4] sm:$0xff] %vm367, %v2680
  %s2683 = scalar_lea.vmem %s1, 56
  %v2684 = vld [vmem:[%s2683] sm:$0xff]
  %v2685 = vsel %vm360, %v2675, %v2680
  %v2686 = vmul.f32 %v2684, %v2685
  %v2687 = vadd.f32 %v2546, %v2686
  %2688 = vst.msk [vmem:[%s8] sm:$0xff] %vm231, %v2687
  // Predicated region
  $region34: #{bilstm_forward.1} parent=0 // pred_check
    _
  $region35: #{bilstm_forward.1} parent=0 // pred_check_branch
    %2690 = sbr.rel (0) target = $region37
  $region36: #{bilstm_forward.1} parent=0 // pred_region
    _
  $region37: #{bilstm_forward.1} parent=0 // pred_fallthru
    _
  // Predicated region
  $region38: #{bilstm_forward.1} parent=0 // pred_check
    _
  $region39: #{bilstm_forward.1} parent=0 // pred_check_branch
    %2692 = sbr.rel (0) target = $region41
  $region40: #{bilstm_forward.1} parent=0 // pred_region
    _
  $region41: #{bilstm_forward.1} parent=0 // pred_fallthru
    _

</llo_original>
